<compile_context>
chip_gen: v6e
topology: v6e:2x2x1
jax: 0.10.0
libtpu: 0.0.40
codegen_flags: <defaults>
</compile_context>

<pallas_src>
import functools

import numpy as np
import jax
import jax.numpy as jnp
from jax.experimental import pallas as pl
from jax.experimental.pallas import tpu as pltpu


# ----------------------------------------------------------------------------
# Constants
# ----------------------------------------------------------------------------
_REFL = (1, 0, 1, 2, 1)   # ReflectionPad2d(1): padded index 0..4 -> source index
_PAD_HID = 640            # conv hidden width 576 -> 640 (5*128); try 768 on v6e/v7x
_PAD_IN = 128             # first-layer input features C_in*9 -> 128
_FC2_LANES = 128          # fc2 output padded to a full lane width (unmasked stores)
_TB_TARGET = 512          # batch tile for large batches (sweep 512/1024/2048)


def _round_up(x, m):
    return -(-x // m) * m


# ----------------------------------------------------------------------------
# Init-time folding: reflection-pad + im2col of a 3x3 image -> dense matrix
# ----------------------------------------------------------------------------
def _reflect_select():
    """S[q, kh, kw, p] = 1 iff output position p with kernel tap (kh, kw) reads
    source position q of the reflection-padded 3x3 input."""
    S = np.zeros((9, 3, 3, 9), np.float32)
    for i in range(3):
        for j in range(3):
            p = i * 3 + j
            for kh in range(3):
                for kw in range(3):
                    q = _REFL[i + kh] * 3 + _REFL[j + kw]
                    S[q, kh, kw, p] = 1.0
    return S


def _conv_to_dense(w_oihw):
    """(O, C, 3, 3) conv weight -> (C*9, O*9) dense matrix acting on NCHW-flattened
    3x3 activations (feature index = c*9 + h*3 + w)."""
    S = jnp.asarray(_reflect_select())
    C, O = w_oihw.shape[1], w_oihw.shape[0]
    M = jnp.einsum("qhwp,ochw->cqop", S, w_oihw,
                   precision=jax.lax.Precision.HIGHEST)        # (C, 9, O, 9)
    return M.reshape(C * 9, O * 9)


def _pad2(m, rows, cols):
    r, c = m.shape
    return jnp.pad(m, ((0, rows - r), (0, cols - c)))


def prepare_params(conv_params, fc1, fc2):
    """One-time weight preprocessing; the runtime kernel sees only lane-dense bf16
    matrices + f32 biases."""
    mats, biases = [], []
    c_in0 = conv_params[0][0].shape[1]
    assert c_in0 * 9 <= _PAD_IN, "first-layer features exceed the 128-lane pad"

    for li, (w, b) in enumerate(conv_params):
        dense = _conv_to_dense(w)                              # (C*9, 576)
        rows = _PAD_IN if li == 0 else _PAD_HID
        mats.append(_pad2(dense, rows, _PAD_HID).astype(jnp.bfloat16))
        bias = jnp.repeat(b, 9).reshape(1, -1)                 # (1, 576)
        biases.append(_pad2(bias, 1, _PAD_HID).astype(jnp.float32))

    w1, b1 = fc1                                               # (576, 128), (128,)
    mats.append(_pad2(w1, _PAD_HID, w1.shape[1]).astype(jnp.bfloat16))
    biases.append(b1.reshape(1, -1).astype(jnp.float32))

    w2, b2 = fc2                                               # (128, n_out), (n_out,)
    n_out = w2.shape[1]
    assert n_out <= _FC2_LANES, "num_classes must be <= 128 for the lane-padded fc2"
    mats.append(_pad2(w2, w2.shape[0], _FC2_LANES).astype(jnp.bfloat16))
    biases.append(_pad2(b2.reshape(1, -1), 1, _FC2_LANES).astype(jnp.float32))
    return tuple(mats), tuple(biases), n_out


# ----------------------------------------------------------------------------
# Fused Pallas kernel: 6 lane-dense matmuls (4 "convs", fc1, fc2), all in VMEM
# ----------------------------------------------------------------------------
def _fused_kernel(x_ref, *refs):
    o_ref = refs[-1]
    wrefs = refs[:-1]
    n_layers = len(wrefs) // 2
    h = x_ref[...]                                     # (TB, 128) bf16
    for li in range(n_layers):                         # statically unrolled: 6 matmuls
        m = wrefs[2 * li][...]                         # bf16 weights, VMEM-resident
        b = wrefs[2 * li + 1][...]                     # f32 bias (1, N)
        y = jnp.dot(h, m, preferred_element_type=jnp.float32) + b
        if li < n_layers - 1:
            h = jnp.tanh(y).astype(jnp.bfloat16)       # EUP tanh; bf16 intermediates
        else:
            h = y                                      # no tanh after fc2
    o_ref[...] = h.astype(o_ref.dtype)


def _const_spec(shape):
    """Whole-array, constant-index (revisited) spec; single-buffered to save VMEM."""
    try:
        return pl.BlockSpec(shape, lambda i: (0, 0), pipeline_mode=pl.Buffered(1))
    except TypeError:                                   # older BlockSpec signature
        return pl.BlockSpec(shape, lambda i: (0, 0))


@functools.partial(jax.jit, static_argnames=("n_out",))
def _forward_impl(x_nchw, mats, biases, n_out):
    B, C = x_nchw.shape[0], x_nchw.shape[1]
    K0 = C * 9
    K0p = mats[0].shape[0]                             # 128 (lane-padded input)
    x2d = x_nchw.reshape(B, K0).astype(jnp.bfloat16)   # natural NCHW flatten, bf16
    x2d = jnp.pad(x2d, ((0, 0), (0, K0p - K0)))

    # Batch tiling: big tiles for big batches; otherwise split into >= 2 grid steps
    # so v7x's two TensorCores both get work (dimension marked "parallel").
    if B >= 2 * _TB_TARGET:
        TB = _TB_TARGET
        B_pad = _round_up(B, TB)
    else:
        TB = max(8, _round_up(-(-B // 2), 8))          # ~ceil(B/2), multiple of 8
        B_pad = max(2 * TB, _round_up(B, TB))
    if B_pad != B:
        x2d = jnp.pad(x2d, ((0, B_pad - B), (0, 0)))

    in_specs = [pl.BlockSpec((TB, K0p), lambda i: (i, 0))]
    operands = [x2d]
    for M, bias in zip(mats, biases):
        in_specs.append(_const_spec(M.shape))
        in_specs.append(_const_spec(bias.shape))
        operands += [M, bias]

    n_lanes = mats[-1].shape[1]                        # 128 (lane-dense fc2 output)

    # Advisory cost estimate so XLA schedules surrounding ops sensibly.
    flops = 2 * B_pad * sum(M.shape[0] * M.shape[1] for M in mats)
    transcendentals = B_pad * sum(M.shape[1] for M in mats[:-1])
    bytes_accessed = (x2d.size * 2
                      + sum(M.size * 2 for M in mats)
                      + sum(b.size * 4 for b in biases)
                      + B_pad * n_lanes * 4)
    cost = pl.CostEstimate(flops=flops, transcendentals=transcendentals,
                           bytes_accessed=bytes_accessed)

    out = pl.pallas_call(
        _fused_kernel,
        out_shape=jax.ShapeDtypeStruct((B_pad, n_lanes), jnp.float32),
        grid=(B_pad // TB,),
        in_specs=in_specs,
        out_specs=pl.BlockSpec((TB, n_lanes), lambda i: (i, 0)),
        compiler_params=pltpu.CompilerParams(
            dimension_semantics=("parallel",)),        # megacore on v7x
        cost_estimate=cost,
    )(*operands)
    return out[:B, :n_out]


def ea_seq_forward(x_nchw, prepared):
    mats, biases, n_out = prepared
    # TODO(synk): nn.Dropout2d layers are inference-mode no-ops here (forward only).
    return _forward_impl(x_nchw, mats, biases, n_out)


# ----------------------------------------------------------------------------
# Deterministic parameter init (xavier_uniform weights, PyTorch-default biases)
# ----------------------------------------------------------------------------
def _xavier_uniform(key, shape, fan_in, fan_out):
    bound = (6.0 / (fan_in + fan_out)) ** 0.5
    return jax.random.uniform(key, shape, jnp.float32, -bound, bound)


def init_params(key, in_channels, num_classes=None, num_convs=4):
    out_features = 1 if num_classes is None else num_classes
    convs = []
    c_in = in_channels
    for _ in range(num_convs):
        key, kw, kb = jax.random.split(key, 3)
        fan_in, fan_out = c_in * 9, 64 * 9
        w = _xavier_uniform(kw, (64, c_in, 3, 3), fan_in, fan_out)
        bb = 1.0 / (fan_in ** 0.5)
        b = jax.random.uniform(kb, (64,), jnp.float32, -bb, bb)
        convs.append((w, b))
        c_in = 64
    key, k1w, k1b, k2w, k2b = jax.random.split(key, 5)
    w1 = _xavier_uniform(k1w, (128, 576), 576, 128).T                    # (576, 128)
    b1 = jax.random.uniform(k1b, (128,), jnp.float32, -1 / 576 ** 0.5, 1 / 576 ** 0.5)
    w2 = _xavier_uniform(k2w, (out_features, 128), 128, out_features).T  # (128, out)
    b2 = jax.random.uniform(k2b, (out_features,), jnp.float32,
                            -1 / 128 ** 0.5, 1 / 128 ** 0.5)
    return convs, (w1, b1), (w2, b2)


# ----------------------------------------------------------------------------
# Pure-JAX reference (original module structure; bf16 MXU inputs, f32 accumulate)
# ----------------------------------------------------------------------------
def ref_forward(x_nchw, conv_params, fc1, fc2):
    x = x_nchw.astype(jnp.float32)
    for (w, b) in conv_params:
        xp = jnp.pad(x, ((0, 0), (0, 0), (1, 1), (1, 1)), mode="reflect")
        y = jax.lax.conv_general_dilated(
            xp.astype(jnp.bfloat16), w.astype(jnp.bfloat16),
            window_strides=(1, 1), padding="VALID",
            dimension_numbers=("NCHW", "OIHW", "NCHW"),
            preferred_element_type=jnp.float32)
        x = jnp.tanh(y + b[None, :, None, None])
    feat = x.reshape(x.shape[0], -1)                    # nn.Flatten(start_dim=1)
    h = jnp.tanh(jnp.dot(feat.astype(jnp.bfloat16), fc1[0].astype(jnp.bfloat16),
                         preferred_element_type=jnp.float32) + fc1[1])
    return jnp.dot(h.astype(jnp.bfloat16), fc2[0].astype(jnp.bfloat16),
                   preferred_element_type=jnp.float32) + fc2[1]


if __name__ == "__main__":
    key = jax.random.PRNGKey(0)
    kx, kp = jax.random.split(key)

    # fc1 expects 64*3*3 features, so the module implies 3x3 spatial inputs.
    B, C_in, H, W = 2, 4, 3, 3
    x = jax.random.normal(kx, (B, C_in, H, W), jnp.float32)

    conv_params, fc1, fc2 = init_params(kp, C_in, num_classes=None, num_convs=4)
    prepared = prepare_params(conv_params, fc1, fc2)

    out = jax.block_until_ready(ea_seq_forward(x, prepared))
    ref = jax.block_until_ready(ref_forward(x, conv_params, fc1, fc2))

    assert out.shape == (B, 1), out.shape
    assert jnp.allclose(out, ref, atol=2e-2, rtol=2e-2), (out, ref)
    print("KERNEL_OK")
</pallas_src>

<mosaic_0001>
module attributes {stable_mosaic.version = 11 : i64} {
  func.func @_fused_kernel(%arg0: i32, %arg1: memref<8x128xbf16, #tpu.memory_space<vmem>>, %arg2: memref<128x640xbf16, #tpu.memory_space<vmem>>, %arg3: memref<1x640xf32, #tpu.memory_space<vmem>>, %arg4: memref<640x640xbf16, #tpu.memory_space<vmem>>, %arg5: memref<1x640xf32, #tpu.memory_space<vmem>>, %arg6: memref<640x640xbf16, #tpu.memory_space<vmem>>, %arg7: memref<1x640xf32, #tpu.memory_space<vmem>>, %arg8: memref<640x640xbf16, #tpu.memory_space<vmem>>, %arg9: memref<1x640xf32, #tpu.memory_space<vmem>>, %arg10: memref<640x128xbf16, #tpu.memory_space<vmem>>, %arg11: memref<1x128xf32, #tpu.memory_space<vmem>>, %arg12: memref<128x128xbf16, #tpu.memory_space<vmem>>, %arg13: memref<1x128xf32, #tpu.memory_space<vmem>>, %arg14: memref<8x128xf32, #tpu.memory_space<vmem>>) attributes {dimension_semantics = [#tpu.dimension_semantics<parallel>], iteration_bounds = array<i64: 2>, scalar_prefetch = 0 : i64, scratch_operands = 0 : i64, tpu.core_type = #tpu.core_type<tc>, window_params = [{transform_indices = @transform_0, window_bounds = array<i64: 8, 128>}, {pipeline_mode = #tpu.pipeline_mode<synchronous>, transform_indices = @transform_1, window_bounds = array<i64: 128, 640>}, {pipeline_mode = #tpu.pipeline_mode<synchronous>, transform_indices = @transform_2, window_bounds = array<i64: 1, 640>}, {pipeline_mode = #tpu.pipeline_mode<synchronous>, transform_indices = @transform_3, window_bounds = array<i64: 640, 640>}, {pipeline_mode = #tpu.pipeline_mode<synchronous>, transform_indices = @transform_4, window_bounds = array<i64: 1, 640>}, {pipeline_mode = #tpu.pipeline_mode<synchronous>, transform_indices = @transform_5, window_bounds = array<i64: 640, 640>}, {pipeline_mode = #tpu.pipeline_mode<synchronous>, transform_indices = @transform_6, window_bounds = array<i64: 1, 640>}, {pipeline_mode = #tpu.pipeline_mode<synchronous>, transform_indices = @transform_7, window_bounds = array<i64: 640, 640>}, {pipeline_mode = #tpu.pipeline_mode<synchronous>, transform_indices = @transform_8, window_bounds = array<i64: 1, 640>}, {pipeline_mode = #tpu.pipeline_mode<synchronous>, transform_indices = @transform_9, window_bounds = array<i64: 640, 128>}, {pipeline_mode = #tpu.pipeline_mode<synchronous>, transform_indices = @transform_10, window_bounds = array<i64: 1, 128>}, {pipeline_mode = #tpu.pipeline_mode<synchronous>, transform_indices = @transform_11, window_bounds = array<i64: 128, 128>}, {pipeline_mode = #tpu.pipeline_mode<synchronous>, transform_indices = @transform_12, window_bounds = array<i64: 1, 128>}, {transform_indices = @transform_13, window_bounds = array<i64: 8, 128>}]} {
    %c0 = arith.constant 0 : index
    %c0_0 = arith.constant 0 : index
    %0 = vector.load %arg1[%c0, %c0_0] : memref<8x128xbf16, #tpu.memory_space<vmem>>, vector<8x128xbf16>
    %c0_1 = arith.constant 0 : index
    %c0_2 = arith.constant 0 : index
    %1 = vector.load %arg2[%c0_1, %c0_2] : memref<128x640xbf16, #tpu.memory_space<vmem>>, vector<128x640xbf16>
    %c0_3 = arith.constant 0 : index
    %c0_4 = arith.constant 0 : index
    %2 = vector.load %arg3[%c0_3, %c0_4] : memref<1x640xf32, #tpu.memory_space<vmem>>, vector<1x640xf32>
    %cst = arith.constant dense<0.000000e+00> : vector<8x640xf32>
    %3 = tpu.matmul %0, %1, %cst {dimension_numbers = #tpu.dot_dimension_numbers<[1], [0], [0], [1], [0, 0, 1, 1], [], []>} : vector<8x128xbf16>, vector<128x640xbf16>, vector<8x640xf32> -> vector<8x640xf32>
    %4 = vector.broadcast %2 : vector<1x640xf32> to vector<8x640xf32>
    %5 = arith.addf %3, %4 : vector<8x640xf32>
    %6 = math.tanh %5 : vector<8x640xf32>
    %7 = arith.truncf %6 : vector<8x640xf32> to vector<8x640xbf16>
    %c0_5 = arith.constant 0 : index
    %c0_6 = arith.constant 0 : index
    %8 = vector.load %arg4[%c0_5, %c0_6] : memref<640x640xbf16, #tpu.memory_space<vmem>>, vector<640x640xbf16>
    %c0_7 = arith.constant 0 : index
    %c0_8 = arith.constant 0 : index
    %9 = vector.load %arg5[%c0_7, %c0_8] : memref<1x640xf32, #tpu.memory_space<vmem>>, vector<1x640xf32>
    %cst_9 = arith.constant dense<0.000000e+00> : vector<8x640xf32>
    %10 = tpu.matmul %7, %8, %cst_9 {dimension_numbers = #tpu.dot_dimension_numbers<[1], [0], [0], [1], [0, 0, 1, 1], [], []>} : vector<8x640xbf16>, vector<640x640xbf16>, vector<8x640xf32> -> vector<8x640xf32>
    %11 = vector.broadcast %9 : vector<1x640xf32> to vector<8x640xf32>
    %12 = arith.addf %10, %11 : vector<8x640xf32>
    %13 = math.tanh %12 : vector<8x640xf32>
    %14 = arith.truncf %13 : vector<8x640xf32> to vector<8x640xbf16>
    %c0_10 = arith.constant 0 : index
    %c0_11 = arith.constant 0 : index
    %15 = vector.load %arg6[%c0_10, %c0_11] : memref<640x640xbf16, #tpu.memory_space<vmem>>, vector<640x640xbf16>
    %c0_12 = arith.constant 0 : index
    %c0_13 = arith.constant 0 : index
    %16 = vector.load %arg7[%c0_12, %c0_13] : memref<1x640xf32, #tpu.memory_space<vmem>>, vector<1x640xf32>
    %cst_14 = arith.constant dense<0.000000e+00> : vector<8x640xf32>
    %17 = tpu.matmul %14, %15, %cst_14 {dimension_numbers = #tpu.dot_dimension_numbers<[1], [0], [0], [1], [0, 0, 1, 1], [], []>} : vector<8x640xbf16>, vector<640x640xbf16>, vector<8x640xf32> -> vector<8x640xf32>
    %18 = vector.broadcast %16 : vector<1x640xf32> to vector<8x640xf32>
    %19 = arith.addf %17, %18 : vector<8x640xf32>
    %20 = math.tanh %19 : vector<8x640xf32>
    %21 = arith.truncf %20 : vector<8x640xf32> to vector<8x640xbf16>
    %c0_15 = arith.constant 0 : index
    %c0_16 = arith.constant 0 : index
    %22 = vector.load %arg8[%c0_15, %c0_16] : memref<640x640xbf16, #tpu.memory_space<vmem>>, vector<640x640xbf16>
    %c0_17 = arith.constant 0 : index
    %c0_18 = arith.constant 0 : index
    %23 = vector.load %arg9[%c0_17, %c0_18] : memref<1x640xf32, #tpu.memory_space<vmem>>, vector<1x640xf32>
    %cst_19 = arith.constant dense<0.000000e+00> : vector<8x640xf32>
    %24 = tpu.matmul %21, %22, %cst_19 {dimension_numbers = #tpu.dot_dimension_numbers<[1], [0], [0], [1], [0, 0, 1, 1], [], []>} : vector<8x640xbf16>, vector<640x640xbf16>, vector<8x640xf32> -> vector<8x640xf32>
    %25 = vector.broadcast %23 : vector<1x640xf32> to vector<8x640xf32>
    %26 = arith.addf %24, %25 : vector<8x640xf32>
    %27 = math.tanh %26 : vector<8x640xf32>
    %28 = arith.truncf %27 : vector<8x640xf32> to vector<8x640xbf16>
    %c0_20 = arith.constant 0 : index
    %c0_21 = arith.constant 0 : index
    %29 = vector.load %arg10[%c0_20, %c0_21] : memref<640x128xbf16, #tpu.memory_space<vmem>>, vector<640x128xbf16>
    %c0_22 = arith.constant 0 : index
    %c0_23 = arith.constant 0 : index
    %30 = vector.load %arg11[%c0_22, %c0_23] : memref<1x128xf32, #tpu.memory_space<vmem>>, vector<1x128xf32>
    %cst_24 = arith.constant dense<0.000000e+00> : vector<8x128xf32>
    %31 = tpu.matmul %28, %29, %cst_24 {dimension_numbers = #tpu.dot_dimension_numbers<[1], [0], [0], [1], [0, 0, 1, 1], [], []>} : vector<8x640xbf16>, vector<640x128xbf16>, vector<8x128xf32> -> vector<8x128xf32>
    %32 = vector.broadcast %30 : vector<1x128xf32> to vector<8x128xf32>
    %33 = arith.addf %31, %32 : vector<8x128xf32>
    %34 = math.tanh %33 : vector<8x128xf32>
    %35 = arith.truncf %34 : vector<8x128xf32> to vector<8x128xbf16>
    %c0_25 = arith.constant 0 : index
    %c0_26 = arith.constant 0 : index
    %36 = vector.load %arg12[%c0_25, %c0_26] : memref<128x128xbf16, #tpu.memory_space<vmem>>, vector<128x128xbf16>
    %c0_27 = arith.constant 0 : index
    %c0_28 = arith.constant 0 : index
    %37 = vector.load %arg13[%c0_27, %c0_28] : memref<1x128xf32, #tpu.memory_space<vmem>>, vector<1x128xf32>
    %cst_29 = arith.constant dense<0.000000e+00> : vector<8x128xf32>
    %38 = tpu.matmul %35, %36, %cst_29 {dimension_numbers = #tpu.dot_dimension_numbers<[1], [0], [0], [1], [0, 0, 1, 1], [], []>} : vector<8x128xbf16>, vector<128x128xbf16>, vector<8x128xf32> -> vector<8x128xf32>
    %39 = vector.broadcast %37 : vector<1x128xf32> to vector<8x128xf32>
    %40 = arith.addf %38, %39 : vector<8x128xf32>
    %c0_30 = arith.constant 0 : index
    %c0_31 = arith.constant 0 : index
    %41 = vector.load %arg14[%c0_30, %c0_31] : memref<8x128xf32, #tpu.memory_space<vmem>>, vector<8x128xf32>
    tpu.vector_store %arg14[%c0_30, %c0_31], %40 {strides = array<i32>} : memref<8x128xf32, #tpu.memory_space<vmem>>, vector<8x128xf32>,
    return
  }
  func.func @transform_0(%arg0: i32) -> (i32, i32) {
    %c0_i32 = arith.constant 0 : i32
    %c0_i32_0 = arith.constant 0 : i32
    return %arg0, %c0_i32 : i32, i32
  }
  func.func @transform_1(%arg0: i32) -> (i32, i32) {
    %c0_i32 = arith.constant 0 : i32
    %c0_i32_0 = arith.constant 0 : i32
    %c0_i32_1 = arith.constant 0 : i32
    return %c0_i32, %c0_i32_0 : i32, i32
  }
  func.func @transform_2(%arg0: i32) -> (i32, i32) {
    %c0_i32 = arith.constant 0 : i32
    %c0_i32_0 = arith.constant 0 : i32
    %c0_i32_1 = arith.constant 0 : i32
    return %c0_i32, %c0_i32_0 : i32, i32
  }
  func.func @transform_3(%arg0: i32) -> (i32, i32) {
    %c0_i32 = arith.constant 0 : i32
    %c0_i32_0 = arith.constant 0 : i32
    %c0_i32_1 = arith.constant 0 : i32
    return %c0_i32, %c0_i32_0 : i32, i32
  }
  func.func @transform_4(%arg0: i32) -> (i32, i32) {
    %c0_i32 = arith.constant 0 : i32
    %c0_i32_0 = arith.constant 0 : i32
    %c0_i32_1 = arith.constant 0 : i32
    return %c0_i32, %c0_i32_0 : i32, i32
  }
  func.func @transform_5(%arg0: i32) -> (i32, i32) {
    %c0_i32 = arith.constant 0 : i32
    %c0_i32_0 = arith.constant 0 : i32
    %c0_i32_1 = arith.constant 0 : i32
    return %c0_i32, %c0_i32_0 : i32, i32
  }
  func.func @transform_6(%arg0: i32) -> (i32, i32) {
    %c0_i32 = arith.constant 0 : i32
    %c0_i32_0 = arith.constant 0 : i32
    %c0_i32_1 = arith.constant 0 : i32
    return %c0_i32, %c0_i32_0 : i32, i32
  }
  func.func @transform_7(%arg0: i32) -> (i32, i32) {
    %c0_i32 = arith.constant 0 : i32
    %c0_i32_0 = arith.constant 0 : i32
    %c0_i32_1 = arith.constant 0 : i32
    return %c0_i32, %c0_i32_0 : i32, i32
  }
  func.func @transform_8(%arg0: i32) -> (i32, i32) {
    %c0_i32 = arith.constant 0 : i32
    %c0_i32_0 = arith.constant 0 : i32
    %c0_i32_1 = arith.constant 0 : i32
    return %c0_i32, %c0_i32_0 : i32, i32
  }
  func.func @transform_9(%arg0: i32) -> (i32, i32) {
    %c0_i32 = arith.constant 0 : i32
    %c0_i32_0 = arith.constant 0 : i32
    %c0_i32_1 = arith.constant 0 : i32
    return %c0_i32, %c0_i32_0 : i32, i32
  }
  func.func @transform_10(%arg0: i32) -> (i32, i32) {
    %c0_i32 = arith.constant 0 : i32
    %c0_i32_0 = arith.constant 0 : i32
    %c0_i32_1 = arith.constant 0 : i32
    return %c0_i32, %c0_i32_0 : i32, i32
  }
  func.func @transform_11(%arg0: i32) -> (i32, i32) {
    %c0_i32 = arith.constant 0 : i32
    %c0_i32_0 = arith.constant 0 : i32
    %c0_i32_1 = arith.constant 0 : i32
    return %c0_i32, %c0_i32_0 : i32, i32
  }
  func.func @transform_12(%arg0: i32) -> (i32, i32) {
    %c0_i32 = arith.constant 0 : i32
    %c0_i32_0 = arith.constant 0 : i32
    %c0_i32_1 = arith.constant 0 : i32
    return %c0_i32, %c0_i32_0 : i32, i32
  }
  func.func @transform_13(%arg0: i32) -> (i32, i32) {
    %c0_i32 = arith.constant 0 : i32
    %c0_i32_0 = arith.constant 0 : i32
    return %arg0, %c0_i32 : i32, i32
  }
}

</mosaic_0001>

<llo_original>
// kernel: _forward_impl.1
$region0: #{_forward_impl.1}
  #allocation0 [shape = 'u32[]', space=smem, size = 0x4, offset = 0x4, fixed_abs, tag = 'smem constant byte address 0x4 - core index']
  #allocation1 [shape = 'u32[144,128]{1,0:T(1,128)}', space=vmem, size = 0x12000, scoped, tag = 'internal scratch']
  %s0 = inlined_call_operand.vmem [shape: bf16[16,128], index: 0, kind: input, shape index: {}]
  %s1 = inlined_call_operand.hbm [shape: bf16[128,640], index: 1, kind: input, shape index: {}]
  %s2 = inlined_call_operand.vmem [shape: f32[1,640], index: 2, kind: input, shape index: {}]
  %s3 = inlined_call_operand.hbm [shape: bf16[640,640], index: 3, kind: input, shape index: {}]
  %s4 = inlined_call_operand.vmem [shape: f32[1,640], index: 4, kind: input, shape index: {}]
  %s5 = inlined_call_operand.hbm [shape: bf16[640,640], index: 5, kind: input, shape index: {}]
  %s6 = inlined_call_operand.vmem [shape: f32[1,640], index: 6, kind: input, shape index: {}]
  %s7 = inlined_call_operand.hbm [shape: bf16[640,640], index: 7, kind: input, shape index: {}]
  %s8 = inlined_call_operand.vmem [shape: f32[1,640], index: 8, kind: input, shape index: {}]
  %s9 = inlined_call_operand.hbm [shape: bf16[640,128], index: 9, kind: input, shape index: {}]
  %s10 = inlined_call_operand.vmem [shape: f32[1,128], index: 10, kind: input, shape index: {}]
  %s11 = inlined_call_operand.vmem [shape: bf16[128,128], index: 11, kind: input, shape index: {}]
  %s12 = inlined_call_operand.vmem [shape: f32[1,128], index: 12, kind: input, shape index: {}]
  %s13 = inlined_call_operand.vmem [shape: f32[16,128], index: 13, kind: output, shape index: {}]
  %s14 = sld [smem:[#allocation0]]
  $region105: #{_forward_impl.1} parent=0
    _
  %s16 = ssub.s32 1, %s14
  %s17 = scalar_select 0, %s16, %s14
  $region1: #{_forward_impl.1} parent=0
    #allocation2 [shape = 'u8[163840]{0}', space=vmem, size = 0x28000, scoped, tag = 'input window, operand 1, single buffered']
    #allocation3 [shape = 's32[2]{0}', space=sflag, size = 0x8, scoped, tag = 'scoped memory for _forward_impl.1']
    #allocation4 [shape = 'u8[819200]{0}', space=vmem, size = 0xc8000, scoped, tag = 'input window, operand 3, single buffered']
    #allocation5 [shape = 's32[1]{0}', space=sflag, size = 0x4, scoped, tag = 'scoped memory for _forward_impl.1']
    #allocation6 [shape = 'u8[819200]{0}', space=vmem, size = 0xc8000, scoped, tag = 'input window, operand 5, single buffered']
    #allocation7 [shape = 'u8[819200]{0}', space=vmem, size = 0xc8000, scoped, tag = 'input window, operand 7, single buffered']
    #allocation8 [shape = 's32[1]{0}', space=sflag, size = 0x4, scoped, tag = 'scoped memory for _forward_impl.1']
    #allocation9 [shape = 'u8[163840]{0}', space=vmem, size = 0x28000, scoped, tag = 'input window, operand 9, single buffered']
    %18 = vsyncpa [#allocation3], 0
    %19 = vsyncpa [#allocation5], 0
    %20 = vsyncpa [#allocation8], 0
    loop: start=0, step=1, limit=4
    $region2: #{_forward_impl.1} parent=1 // loop_pre_header
      _
    $region3: #{_forward_impl.1} parent=1 // loop_header
      %s22 = sphi 0, %s26
      %p23 = scmp.ge.s32.totalorder %s22, 4
      %s32 = sphi 0, %s34
      %s35 = sphi 0, %s32
      %s36 = sphi 0, %s35
      %s52 = sphi 0, %s36
      %s56 = sphi 0, %s56
      %s58 = sphi 0, %s56
      %s59 = sphi 0, %s58
      %s73 = sphi 0, %s59
      %s77 = sphi 0, %s77
      %s79 = sphi 0, %s77
      %s80 = sphi 0, %s79
      %s94 = sphi 0, %s80
      %s98 = sphi 0, %s98
      %s100 = sphi 0, %s98
      %s101 = sphi 0, %s100
      %s115 = sphi 0, %s101
      %s119 = sphi 0, %s119
      %s121 = sphi 0, %s119
      %s122 = sphi 0, %s121
      %s136 = sphi 0, %s122
      %s140 = sphi 0, %s140
      %s142 = sphi 0, %s140
      %s143 = sphi 0, %s142
      %s157 = sphi 0, %s143
      %s161 = sphi 0, %s161
      %s163 = sphi 0, %s161
      %s164 = sphi 0, %s163
      %s178 = sphi 0, %s164
      %s182 = sphi 0, %s182
      %s184 = sphi 0, %s182
      %s185 = sphi 0, %s184
      %s199 = sphi 0, %s185
      %s203 = sphi 0, %s203
      %s205 = sphi 0, %s203
      %s206 = sphi 0, %s205
      %s220 = sphi 0, %s206
      %s224 = sphi 0, %s224
      %s226 = sphi 0, %s224
      %s227 = sphi 0, %s226
      %s241 = sphi 0, %s227
      %s245 = sphi 0, %s245
      %s247 = sphi 0, %s245
      %s248 = sphi 0, %s247
      %s262 = sphi 0, %s248
      %s266 = sphi 0, %s266
      %s268 = sphi 0, %s266
      %s269 = sphi 0, %s268
      %s283 = sphi 0, %s269
      %s287 = sphi 0, %s287
      %s289 = sphi 0, %s287
      %s290 = sphi 0, %s289
      %s304 = sphi 0, %s290
      %s310 = sphi 0, %s312
      %s313 = sphi 0, %s310
      %s314 = sphi 0, %s313
      %s330 = sphi 0, %s314
    $region4: #{_forward_impl.1} parent=1 // loop_header_branch
      %25 = sbr.rel (%p23) target = $region8
    $region5: #{_forward_impl.1} parent=1 // loop_body
      %s27 = ssub.s32 %s22, 1
      %s28 = ssub.s32 %s22, 2
      %s29 = sadd.s32 %s22, 1
      %s30 = ssub.s32 %s22, %s29
      %p31 = scmp.eq.s32.totalorder %s30, 0
      %s33 = sadd.s32 %s32, 1
      %s34 = scalar_select %p31, %s32, %s33
      %p37 = pneg %p31
      %p38 = scmp.eq.s32.totalorder %s22, 1
      %p39 = por %p37, %p38
      %p40 = scmp.ne.s32.totalorder %s32, %s35
      %p41 = scmp.eq.s32.totalorder %s22, 0
      %p42 = por %p40, %p41
      %p43 = scmp.ne.s32.totalorder %s32, %s35
      %p44 = scmp.eq.s32.totalorder %s27, 1
      %p45 = por %p43, %p44
      %p46 = scmp.ne.s32.totalorder %s35, %s36
      %p47 = scmp.eq.s32.totalorder %s27, 0
      %p48 = por %p46, %p47
      %p49 = scmp.ne.s32.totalorder %s35, %s36
      %p50 = scmp.eq.s32.totalorder %s28, 1
      %p51 = por %p49, %p50
      %p53 = scmp.ne.s32.totalorder %s36, %s52
      %p54 = scmp.eq.s32.totalorder %s28, 0
      %p55 = por %p53, %p54
      %s57 = sadd.s32 %s56, 1
      %p60 = scmp.eq.s32.totalorder %s22, 1
      %p61 = scmp.ne.s32.totalorder %s56, %s58
      %p62 = scmp.eq.s32.totalorder %s22, 0
      %p63 = por %p61, %p62
      %p64 = scmp.ne.s32.totalorder %s56, %s58
      %p65 = scmp.eq.s32.totalorder %s27, 1
      %p66 = por %p64, %p65
      %p67 = scmp.ne.s32.totalorder %s58, %s59
      %p68 = scmp.eq.s32.totalorder %s27, 0
      %p69 = por %p67, %p68
      %p70 = scmp.ne.s32.totalorder %s58, %s59
      %p71 = scmp.eq.s32.totalorder %s28, 1
      %p72 = por %p70, %p71
      %p74 = scmp.ne.s32.totalorder %s59, %s73
      %p75 = scmp.eq.s32.totalorder %s28, 0
      %p76 = por %p74, %p75
      %s78 = sadd.s32 %s77, 1
      %p81 = scmp.eq.s32.totalorder %s22, 1
      %p82 = scmp.ne.s32.totalorder %s77, %s79
      %p83 = scmp.eq.s32.totalorder %s22, 0
      %p84 = por %p82, %p83
      %p85 = scmp.ne.s32.totalorder %s77, %s79
      %p86 = scmp.eq.s32.totalorder %s27, 1
      %p87 = por %p85, %p86
      %p88 = scmp.ne.s32.totalorder %s79, %s80
      %p89 = scmp.eq.s32.totalorder %s27, 0
      %p90 = por %p88, %p89
      %p91 = scmp.ne.s32.totalorder %s79, %s80
      %p92 = scmp.eq.s32.totalorder %s28, 1
      %p93 = por %p91, %p92
      %p95 = scmp.ne.s32.totalorder %s80, %s94
      %p96 = scmp.eq.s32.totalorder %s28, 0
      %p97 = por %p95, %p96
      %s99 = sadd.s32 %s98, 1
      %p102 = scmp.eq.s32.totalorder %s22, 1
      %p103 = scmp.ne.s32.totalorder %s98, %s100
      %p104 = scmp.eq.s32.totalorder %s22, 0
      %p105 = por %p103, %p104
      %p106 = scmp.ne.s32.totalorder %s98, %s100
      %p107 = scmp.eq.s32.totalorder %s27, 1
      %p108 = por %p106, %p107
      %p109 = scmp.ne.s32.totalorder %s100, %s101
      %p110 = scmp.eq.s32.totalorder %s27, 0
      %p111 = por %p109, %p110
      %p112 = scmp.ne.s32.totalorder %s100, %s101
      %p113 = scmp.eq.s32.totalorder %s28, 1
      %p114 = por %p112, %p113
      %p116 = scmp.ne.s32.totalorder %s101, %s115
      %p117 = scmp.eq.s32.totalorder %s28, 0
      %p118 = por %p116, %p117
      %s120 = sadd.s32 %s119, 1
      %p123 = scmp.eq.s32.totalorder %s22, 1
      %p124 = scmp.ne.s32.totalorder %s119, %s121
      %p125 = scmp.eq.s32.totalorder %s22, 0
      %p126 = por %p124, %p125
      %p127 = scmp.ne.s32.totalorder %s119, %s121
      %p128 = scmp.eq.s32.totalorder %s27, 1
      %p129 = por %p127, %p128
      %p130 = scmp.ne.s32.totalorder %s121, %s122
      %p131 = scmp.eq.s32.totalorder %s27, 0
      %p132 = por %p130, %p131
      %p133 = scmp.ne.s32.totalorder %s121, %s122
      %p134 = scmp.eq.s32.totalorder %s28, 1
      %p135 = por %p133, %p134
      %p137 = scmp.ne.s32.totalorder %s122, %s136
      %p138 = scmp.eq.s32.totalorder %s28, 0
      %p139 = por %p137, %p138
      %s141 = sadd.s32 %s140, 1
      %p144 = scmp.eq.s32.totalorder %s22, 1
      %p145 = scmp.ne.s32.totalorder %s140, %s142
      %p146 = scmp.eq.s32.totalorder %s22, 0
      %p147 = por %p145, %p146
      %p148 = scmp.ne.s32.totalorder %s140, %s142
      %p149 = scmp.eq.s32.totalorder %s27, 1
      %p150 = por %p148, %p149
      %p151 = scmp.ne.s32.totalorder %s142, %s143
      %p152 = scmp.eq.s32.totalorder %s27, 0
      %p153 = por %p151, %p152
      %p154 = scmp.ne.s32.totalorder %s142, %s143
      %p155 = scmp.eq.s32.totalorder %s28, 1
      %p156 = por %p154, %p155
      %p158 = scmp.ne.s32.totalorder %s143, %s157
      %p159 = scmp.eq.s32.totalorder %s28, 0
      %p160 = por %p158, %p159
      %s162 = sadd.s32 %s161, 1
      %p165 = scmp.eq.s32.totalorder %s22, 1
      %p166 = scmp.ne.s32.totalorder %s161, %s163
      %p167 = scmp.eq.s32.totalorder %s22, 0
      %p168 = por %p166, %p167
      %p169 = scmp.ne.s32.totalorder %s161, %s163
      %p170 = scmp.eq.s32.totalorder %s27, 1
      %p171 = por %p169, %p170
      %p172 = scmp.ne.s32.totalorder %s163, %s164
      %p173 = scmp.eq.s32.totalorder %s27, 0
      %p174 = por %p172, %p173
      %p175 = scmp.ne.s32.totalorder %s163, %s164
      %p176 = scmp.eq.s32.totalorder %s28, 1
      %p177 = por %p175, %p176
      %p179 = scmp.ne.s32.totalorder %s164, %s178
      %p180 = scmp.eq.s32.totalorder %s28, 0
      %p181 = por %p179, %p180
      %s183 = sadd.s32 %s182, 1
      %p186 = scmp.eq.s32.totalorder %s22, 1
      %p187 = scmp.ne.s32.totalorder %s182, %s184
      %p188 = scmp.eq.s32.totalorder %s22, 0
      %p189 = por %p187, %p188
      %p190 = scmp.ne.s32.totalorder %s182, %s184
      %p191 = scmp.eq.s32.totalorder %s27, 1
      %p192 = por %p190, %p191
      %p193 = scmp.ne.s32.totalorder %s184, %s185
      %p194 = scmp.eq.s32.totalorder %s27, 0
      %p195 = por %p193, %p194
      %p196 = scmp.ne.s32.totalorder %s184, %s185
      %p197 = scmp.eq.s32.totalorder %s28, 1
      %p198 = por %p196, %p197
      %p200 = scmp.ne.s32.totalorder %s185, %s199
      %p201 = scmp.eq.s32.totalorder %s28, 0
      %p202 = por %p200, %p201
      %s204 = sadd.s32 %s203, 1
      %p207 = scmp.eq.s32.totalorder %s22, 1
      %p208 = scmp.ne.s32.totalorder %s203, %s205
      %p209 = scmp.eq.s32.totalorder %s22, 0
      %p210 = por %p208, %p209
      %p211 = scmp.ne.s32.totalorder %s203, %s205
      %p212 = scmp.eq.s32.totalorder %s27, 1
      %p213 = por %p211, %p212
      %p214 = scmp.ne.s32.totalorder %s205, %s206
      %p215 = scmp.eq.s32.totalorder %s27, 0
      %p216 = por %p214, %p215
      %p217 = scmp.ne.s32.totalorder %s205, %s206
      %p218 = scmp.eq.s32.totalorder %s28, 1
      %p219 = por %p217, %p218
      %p221 = scmp.ne.s32.totalorder %s206, %s220
      %p222 = scmp.eq.s32.totalorder %s28, 0
      %p223 = por %p221, %p222
      %s225 = sadd.s32 %s224, 1
      %p228 = scmp.eq.s32.totalorder %s22, 1
      %p229 = scmp.ne.s32.totalorder %s224, %s226
      %p230 = scmp.eq.s32.totalorder %s22, 0
      %p231 = por %p229, %p230
      %p232 = scmp.ne.s32.totalorder %s224, %s226
      %p233 = scmp.eq.s32.totalorder %s27, 1
      %p234 = por %p232, %p233
      %p235 = scmp.ne.s32.totalorder %s226, %s227
      %p236 = scmp.eq.s32.totalorder %s27, 0
      %p237 = por %p235, %p236
      %p238 = scmp.ne.s32.totalorder %s226, %s227
      %p239 = scmp.eq.s32.totalorder %s28, 1
      %p240 = por %p238, %p239
      %p242 = scmp.ne.s32.totalorder %s227, %s241
      %p243 = scmp.eq.s32.totalorder %s28, 0
      %p244 = por %p242, %p243
      %s246 = sadd.s32 %s245, 1
      %p249 = scmp.eq.s32.totalorder %s22, 1
      %p250 = scmp.ne.s32.totalorder %s245, %s247
      %p251 = scmp.eq.s32.totalorder %s22, 0
      %p252 = por %p250, %p251
      %p253 = scmp.ne.s32.totalorder %s245, %s247
      %p254 = scmp.eq.s32.totalorder %s27, 1
      %p255 = por %p253, %p254
      %p256 = scmp.ne.s32.totalorder %s247, %s248
      %p257 = scmp.eq.s32.totalorder %s27, 0
      %p258 = por %p256, %p257
      %p259 = scmp.ne.s32.totalorder %s247, %s248
      %p260 = scmp.eq.s32.totalorder %s28, 1
      %p261 = por %p259, %p260
      %p263 = scmp.ne.s32.totalorder %s248, %s262
      %p264 = scmp.eq.s32.totalorder %s28, 0
      %p265 = por %p263, %p264
      %s267 = sadd.s32 %s266, 1
      %p270 = scmp.eq.s32.totalorder %s22, 1
      %p271 = scmp.ne.s32.totalorder %s266, %s268
      %p272 = scmp.eq.s32.totalorder %s22, 0
      %p273 = por %p271, %p272
      %p274 = scmp.ne.s32.totalorder %s266, %s268
      %p275 = scmp.eq.s32.totalorder %s27, 1
      %p276 = por %p274, %p275
      %p277 = scmp.ne.s32.totalorder %s268, %s269
      %p278 = scmp.eq.s32.totalorder %s27, 0
      %p279 = por %p277, %p278
      %p280 = scmp.ne.s32.totalorder %s268, %s269
      %p281 = scmp.eq.s32.totalorder %s28, 1
      %p282 = por %p280, %p281
      %p284 = scmp.ne.s32.totalorder %s269, %s283
      %p285 = scmp.eq.s32.totalorder %s28, 0
      %p286 = por %p284, %p285
      %s288 = sadd.s32 %s287, 1
      %p291 = scmp.eq.s32.totalorder %s22, 1
      %p292 = scmp.ne.s32.totalorder %s287, %s289
      %p293 = scmp.eq.s32.totalorder %s22, 0
      %p294 = por %p292, %p293
      %p295 = scmp.ne.s32.totalorder %s287, %s289
      %p296 = scmp.eq.s32.totalorder %s27, 1
      %p297 = por %p295, %p296
      %p298 = scmp.ne.s32.totalorder %s289, %s290
      %p299 = scmp.eq.s32.totalorder %s27, 0
      %p300 = por %p298, %p299
      %p301 = scmp.ne.s32.totalorder %s289, %s290
      %p302 = scmp.eq.s32.totalorder %s28, 1
      %p303 = por %p301, %p302
      %p305 = scmp.ne.s32.totalorder %s290, %s304
      %p306 = scmp.eq.s32.totalorder %s28, 0
      %p307 = por %p305, %p306
      %s308 = ssub.s32 %s22, %s29
      %p309 = scmp.eq.s32.totalorder %s308, 0
      %s311 = sadd.s32 %s310, 1
      %s312 = scalar_select %p309, %s310, %s311
      %p315 = pneg %p309
      %p316 = scmp.eq.s32.totalorder %s22, 1
      %p317 = por %p315, %p316
      %p318 = scmp.ne.s32.totalorder %s310, %s313
      %p319 = scmp.eq.s32.totalorder %s22, 0
      %p320 = por %p318, %p319
      %p321 = scmp.ne.s32.totalorder %s310, %s313
      %p322 = scmp.eq.s32.totalorder %s27, 1
      %p323 = por %p321, %p322
      %p324 = scmp.ne.s32.totalorder %s313, %s314
      %p325 = scmp.eq.s32.totalorder %s27, 0
      %p326 = por %p324, %p325
      %p327 = scmp.ne.s32.totalorder %s313, %s314
      %p328 = scmp.eq.s32.totalorder %s28, 1
      %p329 = por %p327, %p328
      %p331 = scmp.ne.s32.totalorder %s314, %s330
      %p332 = scmp.eq.s32.totalorder %s28, 0
      %p333 = por %p331, %p332
      %p334 = scmp.le.s32.totalorder 1, %s22
      %p335 = scmp.lt.s32.totalorder %s22, 3
      %p336 = pnand %p334, %p335
      %p337 = pneg %p336
      // Predicated region
      $region9: #{_forward_impl.1} parent=5 // pred_check
        _
      $region10: #{_forward_impl.1} parent=5 // pred_check_branch
        %339 = sbr.rel (%p336) target = $region12
      $region11: #{_forward_impl.1} parent=5 // pred_region
        %s340 = ssub.s32 %s22, 1
        // Predicated region
        $region13: #{_forward_impl.1} parent=11 // pred_check
          %p341 = pneg %p69
        $region14: #{_forward_impl.1} parent=11 // pred_check_branch
          %343 = sbr.rel (%p341) target = $region16
        $region15: #{_forward_impl.1} parent=11 // pred_region
          %s345 = ssub.s32 5120, 5120
          %346 = vsyncadd [#allocation3], %s345
          %s347 = sshll.u32 [#allocation2], 4
          %s348 = int_to_ptr.vmem [resolvable:$true] %s347
          %353 = dma.hbm_to_vmem [thread:$0]  %s1, 5120, %s348, [#allocation3], 320, 320, 20
        $region16: #{_forward_impl.1} parent=11 // pred_fallthru
          _
        // Predicated region
        $region17: #{_forward_impl.1} parent=11 // pred_check
          %p354 = pneg %p90
        $region18: #{_forward_impl.1} parent=11 // pred_check_branch
          %356 = sbr.rel (%p354) target = $region20
        $region19: #{_forward_impl.1} parent=11 // pred_region
          _
        $region20: #{_forward_impl.1} parent=11 // pred_fallthru
          _
        // Predicated region
        $region21: #{_forward_impl.1} parent=11 // pred_check
          %p357 = pneg %p111
        $region22: #{_forward_impl.1} parent=11 // pred_check_branch
          %359 = sbr.rel (%p357) target = $region24
        $region23: #{_forward_impl.1} parent=11 // pred_region
          %s361 = ssub.s32 25600, 25600
          %362 = vsyncadd [#allocation5], %s361
          %s363 = sshll.u32 [#allocation4], 4
          %s364 = int_to_ptr.vmem [resolvable:$true] %s363
          %369 = dma.hbm_to_vmem [thread:$0]  %s3, 25600, %s364, [#allocation5], 320, 320, 20
        $region24: #{_forward_impl.1} parent=11 // pred_fallthru
          _
        // Predicated region
        $region25: #{_forward_impl.1} parent=11 // pred_check
          %p370 = pneg %p132
        $region26: #{_forward_impl.1} parent=11 // pred_check_branch
          %372 = sbr.rel (%p370) target = $region28
        $region27: #{_forward_impl.1} parent=11 // pred_region
          _
        $region28: #{_forward_impl.1} parent=11 // pred_fallthru
          _
        // Predicated region
        $region29: #{_forward_impl.1} parent=11 // pred_check
          %p373 = pneg %p153
        $region30: #{_forward_impl.1} parent=11 // pred_check_branch
          %375 = sbr.rel (%p373) target = $region32
        $region31: #{_forward_impl.1} parent=11 // pred_region
          %s377 = ssub.s32 25600, 25600
          %378 = vsyncadd [#allocation5], %s377
          %s379 = sshll.u32 [#allocation6], 4
          %s380 = int_to_ptr.vmem [resolvable:$true] %s379
          %385 = dma.hbm_to_vmem [thread:$0]  %s5, 25600, %s380, [#allocation5], 320, 320, 20
        $region32: #{_forward_impl.1} parent=11 // pred_fallthru
          _
        // Predicated region
        $region33: #{_forward_impl.1} parent=11 // pred_check
          %p386 = pneg %p174
        $region34: #{_forward_impl.1} parent=11 // pred_check_branch
          %388 = sbr.rel (%p386) target = $region36
        $region35: #{_forward_impl.1} parent=11 // pred_region
          _
        $region36: #{_forward_impl.1} parent=11 // pred_fallthru
          _
        // Predicated region
        $region37: #{_forward_impl.1} parent=11 // pred_check
          %p389 = pneg %p195
        $region38: #{_forward_impl.1} parent=11 // pred_check_branch
          %391 = sbr.rel (%p389) target = $region40
        $region39: #{_forward_impl.1} parent=11 // pred_region
          %s393 = ssub.s32 25600, 25600
          %394 = vsyncadd [#allocation8], %s393
          %s395 = sshll.u32 [#allocation7], 4
          %s396 = int_to_ptr.vmem [resolvable:$true] %s395
          %401 = dma.hbm_to_vmem [thread:$0]  %s7, 25600, %s396, [#allocation8], 320, 320, 20
        $region40: #{_forward_impl.1} parent=11 // pred_fallthru
          _
        // Predicated region
        $region41: #{_forward_impl.1} parent=11 // pred_check
          %p402 = pneg %p216
        $region42: #{_forward_impl.1} parent=11 // pred_check_branch
          %404 = sbr.rel (%p402) target = $region44
        $region43: #{_forward_impl.1} parent=11 // pred_region
          _
        $region44: #{_forward_impl.1} parent=11 // pred_fallthru
          _
        // Predicated region
        $region45: #{_forward_impl.1} parent=11 // pred_check
          %p405 = pneg %p237
        $region46: #{_forward_impl.1} parent=11 // pred_check_branch
          %407 = sbr.rel (%p405) target = $region48
        $region47: #{_forward_impl.1} parent=11 // pred_region
          %s409 = ssub.s32 5120, 5120
          %410 = vsyncadd [#allocation8], %s409
          %s411 = sshll.u32 [#allocation9], 4
          %s412 = int_to_ptr.vmem [resolvable:$true] %s411
          %417 = dma.hbm_to_vmem [thread:$0]  %s9, 5120, %s412, [#allocation8], 64, 64, 4
        $region48: #{_forward_impl.1} parent=11 // pred_fallthru
          _
        // Predicated region
        $region49: #{_forward_impl.1} parent=11 // pred_check
          %p418 = pneg %p258
        $region50: #{_forward_impl.1} parent=11 // pred_check_branch
          %420 = sbr.rel (%p418) target = $region52
        $region51: #{_forward_impl.1} parent=11 // pred_region
          _
        $region52: #{_forward_impl.1} parent=11 // pred_fallthru
          _
        // Predicated region
        $region53: #{_forward_impl.1} parent=11 // pred_check
          %p421 = pneg %p279
        $region54: #{_forward_impl.1} parent=11 // pred_check_branch
          %423 = sbr.rel (%p421) target = $region56
        $region55: #{_forward_impl.1} parent=11 // pred_region
          _
        $region56: #{_forward_impl.1} parent=11 // pred_fallthru
          _
        // Predicated region
        $region57: #{_forward_impl.1} parent=11 // pred_check
          %p424 = pneg %p300
        $region58: #{_forward_impl.1} parent=11 // pred_check_branch
          %426 = sbr.rel (%p424) target = $region60
        $region59: #{_forward_impl.1} parent=11 // pred_region
          _
        $region60: #{_forward_impl.1} parent=11 // pred_fallthru
          _
      $region12: #{_forward_impl.1} parent=5 // pred_fallthru
        _
      %p427 = scmp.lt.s32.totalorder %s22, 2
      // Predicated region
      $region61: #{_forward_impl.1} parent=5 // pred_check
        %p428 = pneg %p427
      $region62: #{_forward_impl.1} parent=5 // pred_check_branch
        %430 = sbr.rel (%p428) target = $region64
      $region63: #{_forward_impl.1} parent=5 // pred_region
        // Predicated region
        $region65: #{_forward_impl.1} parent=63 // pred_check
          %p431 = pneg %p42
        $region66: #{_forward_impl.1} parent=63 // pred_check_branch
          %433 = sbr.rel (%p431) target = $region68
        $region67: #{_forward_impl.1} parent=63 // pred_region
          %p434 = scmp.lt.s32.totalorder %s22, 1
          %s435 = scalar_select %p434, %s22, 1
          %s436 = smul.addr %s435, 4
          %s437 = scalar_lea.vmem %s0, %s436
        $region68: #{_forward_impl.1} parent=63 // pred_fallthru
          _
      $region64: #{_forward_impl.1} parent=5 // pred_fallthru
        _
      %p438 = scmp.le.s32.totalorder 1, %s22
      %p439 = scmp.lt.s32.totalorder %s22, 3
      %p440 = pnand %p438, %p439
      %p441 = pneg %p440
      // Predicated region
      $region69: #{_forward_impl.1} parent=5 // pred_check
        _
      $region70: #{_forward_impl.1} parent=5 // pred_check_branch
        %443 = sbr.rel (%p440) target = $region72
      $region71: #{_forward_impl.1} parent=5 // pred_region
        %s444 = ssub.s32 %s22, 1
        // Predicated region
        $region73: #{_forward_impl.1} parent=71 // pred_check
          %p445 = pneg %p69
        $region74: #{_forward_impl.1} parent=71 // pred_check_branch
          %447 = sbr.rel (%p445) target = $region76
        $region75: #{_forward_impl.1} parent=71 // pred_region
          %448 = dma.done [#allocation3], 5120
        $region76: #{_forward_impl.1} parent=71 // pred_fallthru
          _
        // Predicated region
        $region77: #{_forward_impl.1} parent=71 // pred_check
          %p449 = pneg %p111
        $region78: #{_forward_impl.1} parent=71 // pred_check_branch
          %451 = sbr.rel (%p449) target = $region80
        $region79: #{_forward_impl.1} parent=71 // pred_region
          %452 = dma.done [#allocation5], 25600
        $region80: #{_forward_impl.1} parent=71 // pred_fallthru
          _
        // Predicated region
        $region81: #{_forward_impl.1} parent=71 // pred_check
          %p453 = pneg %p153
        $region82: #{_forward_impl.1} parent=71 // pred_check_branch
          %455 = sbr.rel (%p453) target = $region84
        $region83: #{_forward_impl.1} parent=71 // pred_region
          %456 = dma.done [#allocation5], 25600
        $region84: #{_forward_impl.1} parent=71 // pred_fallthru
          _
        // Predicated region
        $region85: #{_forward_impl.1} parent=71 // pred_check
          %p457 = pneg %p195
        $region86: #{_forward_impl.1} parent=71 // pred_check_branch
          %459 = sbr.rel (%p457) target = $region88
        $region87: #{_forward_impl.1} parent=71 // pred_region
          %460 = dma.done [#allocation8], 25600
        $region88: #{_forward_impl.1} parent=71 // pred_fallthru
          _
        // Predicated region
        $region89: #{_forward_impl.1} parent=71 // pred_check
          %p461 = pneg %p237
        $region90: #{_forward_impl.1} parent=71 // pred_check_branch
          %463 = sbr.rel (%p461) target = $region92
        $region91: #{_forward_impl.1} parent=71 // pred_region
          %464 = dma.done [#allocation8], 5120
        $region92: #{_forward_impl.1} parent=71 // pred_fallthru
          _
        %p465 = scmp.lt.s32.totalorder %s27, 1
        %s466 = scalar_select %p465, %s27, 1
        %s467 = smul.addr %s466, 4
        %s468 = scalar_lea.vmem %s0, %s467
        %p469 = pneg %p48
        %p470 = pneg %p45
        %p471 = pneg %p69
        %p472 = pneg %p66
        %p473 = pneg %p90
        %p474 = pneg %p87
        %p475 = pneg %p111
        %p476 = pneg %p108
        %p477 = pneg %p132
        %p478 = pneg %p129
        %p479 = pneg %p153
        %p480 = pneg %p150
        %p481 = pneg %p174
        %p482 = pneg %p171
        %p483 = pneg %p195
        %p484 = pneg %p192
        %p485 = pneg %p216
        %p486 = pneg %p213
        %p487 = pneg %p237
        %p488 = pneg %p234
        %p489 = pneg %p258
        %p490 = pneg %p255
        %p491 = pneg %p279
        %p492 = pneg %p276
        %p493 = pneg %p300
        %p494 = pneg %p297
        %p495 = pneg %p326
        %p496 = pneg %p323
        %p497 = scmp.lt.s32.totalorder %s27, 1
        %s498 = scalar_select %p497, %s27, 1
        %s499 = smul.addr %s498, 8
        %s500 = scalar_lea.vmem %s13, %s499
        %p501 = scmp.lt.s32.totalorder %s27, 1
        %s502 = scalar_select %p501, %s27, 1
        %s503 = smul.addr %s502, 4
        %s504 = scalar_lea.vmem %s0, %s503
        %p505 = scmp.lt.s32.totalorder %s27, 1
        %s506 = scalar_select %p505, %s27, 1
        %s507 = smul.addr %s506, 8
        %s508 = scalar_lea.vmem %s13, %s507
        %v510 = vld [vmem:[%s504] sm:$0xf]
        %v511 = vld [vmem:[#allocation2] sm:$0xff]
        %v512 = vld [vmem:[#allocation2 + $0x8] sm:$0xff]
        %v513 = vld [vmem:[#allocation2 + $0x10] sm:$0xf]
        %v514 = vld [vmem:[#allocation2 + $0x14] sm:$0xff]
        %v515 = vld [vmem:[#allocation2 + $0x1c] sm:$0xff]
        %v516 = vld [vmem:[#allocation2 + $0x24] sm:$0xf]
        %v517 = vld [vmem:[#allocation2 + $0x28] sm:$0xff]
        %v518 = vld [vmem:[#allocation2 + $0x30] sm:$0xff]
        %v519 = vld [vmem:[#allocation2 + $0x38] sm:$0xf]
        %v520 = vld [vmem:[#allocation2 + $0x3c] sm:$0xff]
        %v521 = vld [vmem:[#allocation2 + $0x44] sm:$0xff]
        %v522 = vld [vmem:[#allocation2 + $0x4c] sm:$0xf]
        %v523 = vld [vmem:[#allocation2 + $0x50] sm:$0xff]
        %v524 = vld [vmem:[#allocation2 + $0x58] sm:$0xff]
        %v525 = vld [vmem:[#allocation2 + $0x60] sm:$0xf]
        %v526 = vld [vmem:[#allocation2 + $0x64] sm:$0xff]
        %v527 = vld [vmem:[#allocation2 + $0x6c] sm:$0xff]
        %v528 = vld [vmem:[#allocation2 + $0x74] sm:$0xf]
        %v529 = vld [vmem:[#allocation2 + $0x78] sm:$0xff]
        %v530 = vld [vmem:[#allocation2 + $0x80] sm:$0xff]
        %v531 = vld [vmem:[#allocation2 + $0x88] sm:$0xf]
        %v532 = vld [vmem:[#allocation2 + $0x8c] sm:$0xff]
        %v533 = vld [vmem:[#allocation2 + $0x94] sm:$0xff]
        %v534 = vld [vmem:[#allocation2 + $0x9c] sm:$0xf]
        %v535 = vld [vmem:[#allocation2 + $0xa0] sm:$0xff]
        %v536 = vld [vmem:[#allocation2 + $0xa8] sm:$0xff]
        %v537 = vld [vmem:[#allocation2 + $0xb0] sm:$0xf]
        %v538 = vld [vmem:[#allocation2 + $0xb4] sm:$0xff]
        %v539 = vld [vmem:[#allocation2 + $0xbc] sm:$0xff]
        %v540 = vld [vmem:[#allocation2 + $0xc4] sm:$0xf]
        %v541 = vld [vmem:[#allocation2 + $0xc8] sm:$0xff]
        %v542 = vld [vmem:[#allocation2 + $0xd0] sm:$0xff]
        %v543 = vld [vmem:[#allocation2 + $0xd8] sm:$0xf]
        %v544 = vld [vmem:[#allocation2 + $0xdc] sm:$0xff]
        %v545 = vld [vmem:[#allocation2 + $0xe4] sm:$0xff]
        %v546 = vld [vmem:[#allocation2 + $0xec] sm:$0xf]
        %v547 = vld [vmem:[#allocation2 + $0xf0] sm:$0xff]
        %v548 = vld [vmem:[#allocation2 + $0xf8] sm:$0xff]
        %v549 = vld [vmem:[#allocation2 + $0x100] sm:$0xf]
        %v550 = vld [vmem:[#allocation2 + $0x104] sm:$0xff]
        %v551 = vld [vmem:[#allocation2 + $0x10c] sm:$0xff]
        %v552 = vld [vmem:[#allocation2 + $0x114] sm:$0xf]
        %v553 = vld [vmem:[#allocation2 + $0x118] sm:$0xff]
        %v554 = vld [vmem:[#allocation2 + $0x120] sm:$0xff]
        %v555 = vld [vmem:[#allocation2 + $0x128] sm:$0xf]
        %v556 = vld [vmem:[#allocation2 + $0x12c] sm:$0xff]
        %v557 = vld [vmem:[#allocation2 + $0x134] sm:$0xff]
        %v558 = vld [vmem:[#allocation2 + $0x13c] sm:$0xf]
        %v559 = vld [vmem:[%s2] sm:$0x1f]
        %v561 = vlaneseq
        %v562 = vshrl.u32 %v561, 7
        %v563 = vsub.s32 0, %v562
        %v564 = vrot.slane %v559, %v563
        %v565 = vlaneseq
        %v566 = vshrl.u32 %v565, 7
        %v567 = vsub.s32 1, %v566
        %v568 = vrot.slane %v559, %v567
        %v569 = vlaneseq
        %v570 = vshrl.u32 %v569, 7
        %v571 = vsub.s32 2, %v570
        %v572 = vrot.slane %v559, %v571
        %v573 = vlaneseq
        %v574 = vshrl.u32 %v573, 7
        %v575 = vsub.s32 3, %v574
        %v576 = vrot.slane %v559, %v575
        %v577 = vlaneseq
        %v578 = vshrl.u32 %v577, 7
        %v579 = vsub.s32 4, %v578
        %v580 = vrot.slane %v559, %v579
        %v634 = vunpack.c.l.b16 %v511
        %v635 = vunpack.c.h.b16 %v511
        %v636 = vunpack.c.l.b16 %v512
        %v637 = vunpack.c.h.b16 %v512
        %v638 = vunpack.c.l.b16 %v513
        %v639 = vunpack.c.l.b16 %v514
        %v640 = vunpack.c.h.b16 %v514
        %v641 = vunpack.c.l.b16 %v515
        %v642 = vunpack.c.h.b16 %v515
        %v643 = vunpack.c.l.b16 %v516
        %v644 = vunpack.c.l.b16 %v517
        %v645 = vunpack.c.h.b16 %v517
        %v646 = vunpack.c.l.b16 %v518
        %v647 = vunpack.c.h.b16 %v518
        %v648 = vunpack.c.l.b16 %v519
        %v649 = vunpack.c.l.b16 %v520
        %v650 = vunpack.c.h.b16 %v520
        %v651 = vunpack.c.l.b16 %v521
        %v652 = vunpack.c.h.b16 %v521
        %v653 = vunpack.c.l.b16 %v522
        %v654 = vunpack.c.l.b16 %v523
        %v655 = vunpack.c.h.b16 %v523
        %v656 = vunpack.c.l.b16 %v524
        %v657 = vunpack.c.h.b16 %v524
        %v658 = vunpack.c.l.b16 %v525
        %v659 = vunpack.c.l.b16 %v526
        %v660 = vunpack.c.h.b16 %v526
        %v661 = vunpack.c.l.b16 %v527
        %v662 = vunpack.c.h.b16 %v527
        %v663 = vunpack.c.l.b16 %v528
        %v664 = vunpack.c.l.b16 %v529
        %v665 = vunpack.c.h.b16 %v529
        %v666 = vunpack.c.l.b16 %v530
        %v667 = vunpack.c.h.b16 %v530
        %v668 = vunpack.c.l.b16 %v531
        %v669 = vunpack.c.l.b16 %v532
        %v670 = vunpack.c.h.b16 %v532
        %v671 = vunpack.c.l.b16 %v533
        %v672 = vunpack.c.h.b16 %v533
        %v673 = vunpack.c.l.b16 %v534
        %v674 = vunpack.c.l.b16 %v535
        %v675 = vunpack.c.h.b16 %v535
        %v676 = vunpack.c.l.b16 %v536
        %v677 = vunpack.c.h.b16 %v536
        %v678 = vunpack.c.l.b16 %v537
        %v679 = vunpack.c.l.b16 %v538
        %v680 = vunpack.c.h.b16 %v538
        %v681 = vunpack.c.l.b16 %v539
        %v682 = vunpack.c.h.b16 %v539
        %v683 = vunpack.c.l.b16 %v540
        %v684 = vunpack.c.l.b16 %v541
        %v685 = vunpack.c.h.b16 %v541
        %v686 = vunpack.c.l.b16 %v542
        %v687 = vunpack.c.h.b16 %v542
        %v688 = vunpack.c.l.b16 %v543
        %v689 = vunpack.c.l.b16 %v544
        %v690 = vunpack.c.h.b16 %v544
        %v691 = vunpack.c.l.b16 %v545
        %v692 = vunpack.c.h.b16 %v545
        %v693 = vunpack.c.l.b16 %v546
        %v694 = vunpack.c.l.b16 %v547
        %v695 = vunpack.c.h.b16 %v547
        %v696 = vunpack.c.l.b16 %v548
        %v697 = vunpack.c.h.b16 %v548
        %v698 = vunpack.c.l.b16 %v549
        %v699 = vunpack.c.l.b16 %v550
        %v700 = vunpack.c.h.b16 %v550
        %v701 = vunpack.c.l.b16 %v551
        %v702 = vunpack.c.h.b16 %v551
        %v703 = vunpack.c.l.b16 %v552
        %v704 = vunpack.c.l.b16 %v553
        %v705 = vunpack.c.h.b16 %v553
        %v706 = vunpack.c.l.b16 %v554
        %v707 = vunpack.c.h.b16 %v554
        %v708 = vunpack.c.l.b16 %v555
        %v709 = vunpack.c.l.b16 %v556
        %v710 = vunpack.c.h.b16 %v556
        %v711 = vunpack.c.l.b16 %v557
        %v712 = vunpack.c.h.b16 %v557
        %v713 = vunpack.c.l.b16 %v558
        %v714 = vpack.c.b16 %v639, %v634
        %v715 = vpack.c.b16 %v640, %v635
        %v716 = vpack.c.b16 %v641, %v636
        %v717 = vpack.c.b16 %v642, %v637
        %v718 = vpack.c.b16 %v643, %v638
        %v719 = vpack.c.b16 %v649, %v644
        %v720 = vpack.c.b16 %v650, %v645
        %v721 = vpack.c.b16 %v651, %v646
        %v722 = vpack.c.b16 %v652, %v647
        %v723 = vpack.c.b16 %v653, %v648
        %v724 = vpack.c.b16 %v659, %v654
        %v725 = vpack.c.b16 %v660, %v655
        %v726 = vpack.c.b16 %v661, %v656
        %v727 = vpack.c.b16 %v662, %v657
        %v728 = vpack.c.b16 %v663, %v658
        %v729 = vpack.c.b16 %v669, %v664
        %v730 = vpack.c.b16 %v670, %v665
        %v731 = vpack.c.b16 %v671, %v666
        %v732 = vpack.c.b16 %v672, %v667
        %v733 = vpack.c.b16 %v673, %v668
        %v734 = vpack.c.b16 %v679, %v674
        %v735 = vpack.c.b16 %v680, %v675
        %v736 = vpack.c.b16 %v681, %v676
        %v737 = vpack.c.b16 %v682, %v677
        %v738 = vpack.c.b16 %v683, %v678
        %v739 = vpack.c.b16 %v689, %v684
        %v740 = vpack.c.b16 %v690, %v685
        %v741 = vpack.c.b16 %v691, %v686
        %v742 = vpack.c.b16 %v692, %v687
        %v743 = vpack.c.b16 %v693, %v688
        %v744 = vpack.c.b16 %v699, %v694
        %v745 = vpack.c.b16 %v700, %v695
        %v746 = vpack.c.b16 %v701, %v696
        %v747 = vpack.c.b16 %v702, %v697
        %v748 = vpack.c.b16 %v703, %v698
        %v749 = vpack.c.b16 %v709, %v704
        %v750 = vpack.c.b16 %v710, %v705
        %v751 = vpack.c.b16 %v711, %v706
        %v752 = vpack.c.b16 %v712, %v707
        %v753 = vpack.c.b16 %v713, %v708
        %794 = vmatprep.subr.bf16.mxu0 %v750
        %795 = vmatpush1.bf16.msra.mxu0 %v749
        %796 = vmatprep.subr.bf16.mxu0 %v745
        %797 = vmatpush1.bf16.msra.mxu0 %v744
        %798 = vmatprep.subr.bf16.mxu0 %v740
        %799 = vmatpush1.bf16.msra.mxu0 %v739
        %800 = vmatprep.subr.bf16.mxu0 %v735
        %801 = vmatpush1.bf16.msra.mxu0 %v734
        %802 = vmatprep.subr.bf16.mxu0 %v730
        %803 = vmatpush1.bf16.msra.mxu0 %v729
        %804 = vmatprep.subr.bf16.mxu0 %v725
        %805 = vmatpush1.bf16.msra.mxu0 %v724
        %806 = vmatprep.subr.bf16.mxu0 %v720
        %807 = vmatpush1.bf16.msra.mxu0 %v719
        %808 = vmatprep.subr.bf16.mxu0 %v715
        %809 = vmatpush1.bf16.msra.mxu0 %v714
        %810 = vmatprep.subr.bf16.mxu0 0
        %811 = vmatpush2.bf16.msra.mxu0 0
        %812 = vmatprep.subr.bf16.mxu0 0
        %813 = vmatpush2.bf16.msra.mxu0 0
        %814 = vmatprep.subr.bf16.mxu0 0
        %815 = vmatpush2.bf16.msra.mxu0 0
        %816 = vmatprep.subr.bf16.mxu0 0
        %817 = vmatpush2.bf16.msra.mxu0 0
        %818 = vmatprep.subr.bf16.mxu0 0
        %819 = vmatpush2.bf16.msra.mxu0 0
        %820 = vmatprep.subr.bf16.mxu0 0
        %821 = vmatpush2.bf16.msra.mxu0 0
        %822 = vmatprep.subr.bf16.mxu0 0
        %823 = vmatpush2.bf16.msra.mxu0 0
        %824 = vmatprep.subr.bf16.mxu0 0
        %825 = vmatpush2.bf16.msra.mxu0 0
        %826 = vmatprep.mubr.bf16.mxu0 0
        %827 = vmatmul.mubr.bf16.gmra.mxu0 %v510
        %v828 = vpop.f32.mrf.mxu0
        %v829 = vadd.f32 %v564, %v828
        %v830 = vpop.f32.mrf.mxu0
        %v831 = vadd.f32 %v568, %v830
        %v832 = vpop.f32.mrf.mxu0
        %v833 = vpop.f32.mrf.mxu0
        %834 = vdwg.mxu0
        %835 = vmatprep.subr.bf16.mxu0 %v752
        %836 = vmatpush1.bf16.msra.mxu0 %v751
        %837 = vmatprep.subr.bf16.mxu0 %v747
        %838 = vmatpush1.bf16.msra.mxu0 %v746
        %839 = vmatprep.subr.bf16.mxu0 %v742
        %840 = vmatpush1.bf16.msra.mxu0 %v741
        %841 = vmatprep.subr.bf16.mxu0 %v737
        %842 = vmatpush1.bf16.msra.mxu0 %v736
        %843 = vmatprep.subr.bf16.mxu0 %v732
        %844 = vmatpush1.bf16.msra.mxu0 %v731
        %845 = vmatprep.subr.bf16.mxu0 %v727
        %846 = vmatpush1.bf16.msra.mxu0 %v726
        %847 = vmatprep.subr.bf16.mxu0 %v722
        %848 = vmatpush1.bf16.msra.mxu0 %v721
        %849 = vmatprep.subr.bf16.mxu0 %v717
        %850 = vmatpush1.bf16.msra.mxu0 %v716
        %851 = vmatprep.subr.bf16.mxu0 0
        %852 = vmatpush2.bf16.msra.mxu0 0
        %853 = vmatprep.subr.bf16.mxu0 0
        %854 = vmatpush2.bf16.msra.mxu0 0
        %855 = vmatprep.subr.bf16.mxu0 0
        %856 = vmatpush2.bf16.msra.mxu0 0
        %857 = vmatprep.subr.bf16.mxu0 0
        %858 = vmatpush2.bf16.msra.mxu0 0
        %859 = vmatprep.subr.bf16.mxu0 0
        %860 = vmatpush2.bf16.msra.mxu0 0
        %861 = vmatprep.subr.bf16.mxu0 0
        %862 = vmatpush2.bf16.msra.mxu0 0
        %863 = vmatprep.subr.bf16.mxu0 0
        %864 = vmatpush2.bf16.msra.mxu0 0
        %865 = vmatprep.subr.bf16.mxu0 0
        %866 = vmatpush2.bf16.msra.mxu0 0
        %867 = vmatprep.mubr.bf16.mxu0 0
        %868 = vmatmul.mubr.bf16.gmra.mxu0 %v510
        %v869 = vpop.f32.mrf.mxu0
        %v870 = vadd.f32 %v572, %v869
        %v871 = vpop.f32.mrf.mxu0
        %v872 = vadd.f32 %v576, %v871
        %v873 = vpop.f32.mrf.mxu0
        %v874 = vpop.f32.mrf.mxu0
        %875 = vdwg.mxu0
        %876 = vmatprep.subr.bf16.mxu0 0
        %877 = vmatpush1.bf16.msra.mxu0 %v753
        %878 = vmatprep.subr.bf16.mxu0 0
        %879 = vmatpush1.bf16.msra.mxu0 %v748
        %880 = vmatprep.subr.bf16.mxu0 0
        %881 = vmatpush1.bf16.msra.mxu0 %v743
        %882 = vmatprep.subr.bf16.mxu0 0
        %883 = vmatpush1.bf16.msra.mxu0 %v738
        %884 = vmatprep.subr.bf16.mxu0 0
        %885 = vmatpush1.bf16.msra.mxu0 %v733
        %886 = vmatprep.subr.bf16.mxu0 0
        %887 = vmatpush1.bf16.msra.mxu0 %v728
        %888 = vmatprep.subr.bf16.mxu0 0
        %889 = vmatpush1.bf16.msra.mxu0 %v723
        %890 = vmatprep.subr.bf16.mxu0 0
        %891 = vmatpush1.bf16.msra.mxu0 %v718
        %892 = vmatprep.subr.bf16.mxu0 0
        %893 = vmatpush2.bf16.msra.mxu0 0
        %894 = vmatprep.subr.bf16.mxu0 0
        %895 = vmatpush2.bf16.msra.mxu0 0
        %896 = vmatprep.subr.bf16.mxu0 0
        %897 = vmatpush2.bf16.msra.mxu0 0
        %898 = vmatprep.subr.bf16.mxu0 0
        %899 = vmatpush2.bf16.msra.mxu0 0
        %900 = vmatprep.subr.bf16.mxu0 0
        %901 = vmatpush2.bf16.msra.mxu0 0
        %902 = vmatprep.subr.bf16.mxu0 0
        %903 = vmatpush2.bf16.msra.mxu0 0
        %904 = vmatprep.subr.bf16.mxu0 0
        %905 = vmatpush2.bf16.msra.mxu0 0
        %906 = vmatprep.subr.bf16.mxu0 0
        %907 = vmatpush2.bf16.msra.mxu0 0
        %908 = vmatprep.mubr.bf16.mxu0 0
        %909 = vmatmul.mubr.bf16.gmra.mxu0 %v510
        %v910 = vpop.f32.mrf.mxu0
        %v911 = vadd.f32 %v580, %v910
        %v912 = vpop.f32.mrf.mxu0
        %v913 = vpop.f32.mrf.mxu0
        %v914 = vpop.f32.mrf.mxu0
        %915 = vdwg.mxu0
        %v916 = vtanh.pop %v829
        %v917 = vtanh.pop %v831
        %v918 = vtanh.pop %v870
        %v919 = vtanh.pop %v872
        %v920 = vtanh.pop %v911
        %v921 = vpack.c.bf16 %v916, %v916
        %v922 = vpack.c.bf16 %v917, %v917
        %v923 = vpack.c.bf16 %v918, %v918
        %v924 = vpack.c.bf16 %v919, %v919
        %v925 = vpack.c.bf16 %v920, %v920
        %v926 = vld [vmem:[#allocation4] sm:$0xff]
        %v927 = vld [vmem:[#allocation4 + $0x8] sm:$0xff]
        %v928 = vld [vmem:[#allocation4 + $0x10] sm:$0xf]
        %v929 = vld [vmem:[#allocation4 + $0x14] sm:$0xff]
        %v930 = vld [vmem:[#allocation4 + $0x1c] sm:$0xff]
        %v931 = vld [vmem:[#allocation4 + $0x24] sm:$0xf]
        %v932 = vld [vmem:[#allocation4 + $0x28] sm:$0xff]
        %v933 = vld [vmem:[#allocation4 + $0x30] sm:$0xff]
        %v934 = vld [vmem:[#allocation4 + $0x38] sm:$0xf]
        %v935 = vld [vmem:[#allocation4 + $0x3c] sm:$0xff]
        %v936 = vld [vmem:[#allocation4 + $0x44] sm:$0xff]
        %v937 = vld [vmem:[#allocation4 + $0x4c] sm:$0xf]
        %v938 = vld [vmem:[#allocation4 + $0x50] sm:$0xff]
        %v939 = vld [vmem:[#allocation4 + $0x58] sm:$0xff]
        %v940 = vld [vmem:[#allocation4 + $0x60] sm:$0xf]
        %v941 = vld [vmem:[#allocation4 + $0x64] sm:$0xff]
        %v942 = vld [vmem:[#allocation4 + $0x6c] sm:$0xff]
        %v943 = vld [vmem:[#allocation4 + $0x74] sm:$0xf]
        %v944 = vld [vmem:[#allocation4 + $0x78] sm:$0xff]
        %v945 = vld [vmem:[#allocation4 + $0x80] sm:$0xff]
        %v946 = vld [vmem:[#allocation4 + $0x88] sm:$0xf]
        %v947 = vld [vmem:[#allocation4 + $0x8c] sm:$0xff]
        %v948 = vld [vmem:[#allocation4 + $0x94] sm:$0xff]
        %v949 = vld [vmem:[#allocation4 + $0x9c] sm:$0xf]
        %v950 = vld [vmem:[#allocation4 + $0xa0] sm:$0xff]
        %v951 = vld [vmem:[#allocation4 + $0xa8] sm:$0xff]
        %v952 = vld [vmem:[#allocation4 + $0xb0] sm:$0xf]
        %v953 = vld [vmem:[#allocation4 + $0xb4] sm:$0xff]
        %v954 = vld [vmem:[#allocation4 + $0xbc] sm:$0xff]
        %v955 = vld [vmem:[#allocation4 + $0xc4] sm:$0xf]
        %v956 = vld [vmem:[#allocation4 + $0xc8] sm:$0xff]
        %v957 = vld [vmem:[#allocation4 + $0xd0] sm:$0xff]
        %v958 = vld [vmem:[#allocation4 + $0xd8] sm:$0xf]
        %v959 = vld [vmem:[#allocation4 + $0xdc] sm:$0xff]
        %v960 = vld [vmem:[#allocation4 + $0xe4] sm:$0xff]
        %v961 = vld [vmem:[#allocation4 + $0xec] sm:$0xf]
        %v962 = vld [vmem:[#allocation4 + $0xf0] sm:$0xff]
        %v963 = vld [vmem:[#allocation4 + $0xf8] sm:$0xff]
        %v964 = vld [vmem:[#allocation4 + $0x100] sm:$0xf]
        %v965 = vld [vmem:[#allocation4 + $0x104] sm:$0xff]
        %v966 = vld [vmem:[#allocation4 + $0x10c] sm:$0xff]
        %v967 = vld [vmem:[#allocation4 + $0x114] sm:$0xf]
        %v968 = vld [vmem:[#allocation4 + $0x118] sm:$0xff]
        %v969 = vld [vmem:[#allocation4 + $0x120] sm:$0xff]
        %v970 = vld [vmem:[#allocation4 + $0x128] sm:$0xf]
        %v971 = vld [vmem:[#allocation4 + $0x12c] sm:$0xff]
        %v972 = vld [vmem:[#allocation4 + $0x134] sm:$0xff]
        %v973 = vld [vmem:[#allocation4 + $0x13c] sm:$0xf]
        %v974 = vld [vmem:[#allocation4 + $0x140] sm:$0xff]
        %v975 = vld [vmem:[#allocation4 + $0x148] sm:$0xff]
        %v976 = vld [vmem:[#allocation4 + $0x150] sm:$0xf]
        %v977 = vld [vmem:[#allocation4 + $0x154] sm:$0xff]
        %v978 = vld [vmem:[#allocation4 + $0x15c] sm:$0xff]
        %v979 = vld [vmem:[#allocation4 + $0x164] sm:$0xf]
        %v980 = vld [vmem:[#allocation4 + $0x168] sm:$0xff]
        %v981 = vld [vmem:[#allocation4 + $0x170] sm:$0xff]
        %v982 = vld [vmem:[#allocation4 + $0x178] sm:$0xf]
        %v983 = vld [vmem:[#allocation4 + $0x17c] sm:$0xff]
        %v984 = vld [vmem:[#allocation4 + $0x184] sm:$0xff]
        %v985 = vld [vmem:[#allocation4 + $0x18c] sm:$0xf]
        %v986 = vld [vmem:[#allocation4 + $0x190] sm:$0xff]
        %v987 = vld [vmem:[#allocation4 + $0x198] sm:$0xff]
        %v988 = vld [vmem:[#allocation4 + $0x1a0] sm:$0xf]
        %v989 = vld [vmem:[#allocation4 + $0x1a4] sm:$0xff]
        %v990 = vld [vmem:[#allocation4 + $0x1ac] sm:$0xff]
        %v991 = vld [vmem:[#allocation4 + $0x1b4] sm:$0xf]
        %v992 = vld [vmem:[#allocation4 + $0x1b8] sm:$0xff]
        %v993 = vld [vmem:[#allocation4 + $0x1c0] sm:$0xff]
        %v994 = vld [vmem:[#allocation4 + $0x1c8] sm:$0xf]
        %v995 = vld [vmem:[#allocation4 + $0x1cc] sm:$0xff]
        %v996 = vld [vmem:[#allocation4 + $0x1d4] sm:$0xff]
        %v997 = vld [vmem:[#allocation4 + $0x1dc] sm:$0xf]
        %v998 = vld [vmem:[#allocation4 + $0x1e0] sm:$0xff]
        %v999 = vld [vmem:[#allocation4 + $0x1e8] sm:$0xff]
        %v1000 = vld [vmem:[#allocation4 + $0x1f0] sm:$0xf]
        %v1001 = vld [vmem:[#allocation4 + $0x1f4] sm:$0xff]
        %v1002 = vld [vmem:[#allocation4 + $0x1fc] sm:$0xff]
        %v1003 = vld [vmem:[#allocation4 + $0x204] sm:$0xf]
        %v1004 = vld [vmem:[#allocation4 + $0x208] sm:$0xff]
        %v1005 = vld [vmem:[#allocation4 + $0x210] sm:$0xff]
        %v1006 = vld [vmem:[#allocation4 + $0x218] sm:$0xf]
        %v1007 = vld [vmem:[#allocation4 + $0x21c] sm:$0xff]
        %v1008 = vld [vmem:[#allocation4 + $0x224] sm:$0xff]
        %v1009 = vld [vmem:[#allocation4 + $0x22c] sm:$0xf]
        %v1010 = vld [vmem:[#allocation4 + $0x230] sm:$0xff]
        %v1011 = vld [vmem:[#allocation4 + $0x238] sm:$0xff]
        %v1012 = vld [vmem:[#allocation4 + $0x240] sm:$0xf]
        %v1013 = vld [vmem:[#allocation4 + $0x244] sm:$0xff]
        %v1014 = vld [vmem:[#allocation4 + $0x24c] sm:$0xff]
        %v1015 = vld [vmem:[#allocation4 + $0x254] sm:$0xf]
        %v1016 = vld [vmem:[#allocation4 + $0x258] sm:$0xff]
        %v1017 = vld [vmem:[#allocation4 + $0x260] sm:$0xff]
        %v1018 = vld [vmem:[#allocation4 + $0x268] sm:$0xf]
        %v1019 = vld [vmem:[#allocation4 + $0x26c] sm:$0xff]
        %v1020 = vld [vmem:[#allocation4 + $0x274] sm:$0xff]
        %v1021 = vld [vmem:[#allocation4 + $0x27c] sm:$0xf]
        %v1022 = vld [vmem:[#allocation4 + $0x280] sm:$0xff]
        %v1023 = vld [vmem:[#allocation4 + $0x288] sm:$0xff]
        %v1024 = vld [vmem:[#allocation4 + $0x290] sm:$0xf]
        %v1025 = vld [vmem:[#allocation4 + $0x294] sm:$0xff]
        %v1026 = vld [vmem:[#allocation4 + $0x29c] sm:$0xff]
        %v1027 = vld [vmem:[#allocation4 + $0x2a4] sm:$0xf]
        %v1028 = vld [vmem:[#allocation4 + $0x2a8] sm:$0xff]
        %v1029 = vld [vmem:[#allocation4 + $0x2b0] sm:$0xff]
        %v1030 = vld [vmem:[#allocation4 + $0x2b8] sm:$0xf]
        %v1031 = vld [vmem:[#allocation4 + $0x2bc] sm:$0xff]
        %v1032 = vld [vmem:[#allocation4 + $0x2c4] sm:$0xff]
        %v1033 = vld [vmem:[#allocation4 + $0x2cc] sm:$0xf]
        %v1034 = vld [vmem:[#allocation4 + $0x2d0] sm:$0xff]
        %v1035 = vld [vmem:[#allocation4 + $0x2d8] sm:$0xff]
        %v1036 = vld [vmem:[#allocation4 + $0x2e0] sm:$0xf]
        %v1037 = vld [vmem:[#allocation4 + $0x2e4] sm:$0xff]
        %v1038 = vld [vmem:[#allocation4 + $0x2ec] sm:$0xff]
        %v1039 = vld [vmem:[#allocation4 + $0x2f4] sm:$0xf]
        %v1040 = vld [vmem:[#allocation4 + $0x2f8] sm:$0xff]
        %v1041 = vld [vmem:[#allocation4 + $0x300] sm:$0xff]
        %v1042 = vld [vmem:[#allocation4 + $0x308] sm:$0xf]
        %v1043 = vld [vmem:[#allocation4 + $0x30c] sm:$0xff]
        %v1044 = vld [vmem:[#allocation4 + $0x314] sm:$0xff]
        %v1045 = vld [vmem:[#allocation4 + $0x31c] sm:$0xf]
        %v1046 = vld [vmem:[#allocation4 + $0x320] sm:$0xff]
        %v1047 = vld [vmem:[#allocation4 + $0x328] sm:$0xff]
        %v1048 = vld [vmem:[#allocation4 + $0x330] sm:$0xf]
        %v1049 = vld [vmem:[#allocation4 + $0x334] sm:$0xff]
        %v1050 = vld [vmem:[#allocation4 + $0x33c] sm:$0xff]
        %v1051 = vld [vmem:[#allocation4 + $0x344] sm:$0xf]
        %v1052 = vld [vmem:[#allocation4 + $0x348] sm:$0xff]
        %v1053 = vld [vmem:[#allocation4 + $0x350] sm:$0xff]
        %v1054 = vld [vmem:[#allocation4 + $0x358] sm:$0xf]
        %v1055 = vld [vmem:[#allocation4 + $0x35c] sm:$0xff]
        %v1056 = vld [vmem:[#allocation4 + $0x364] sm:$0xff]
        %v1057 = vld [vmem:[#allocation4 + $0x36c] sm:$0xf]
        %v1058 = vld [vmem:[#allocation4 + $0x370] sm:$0xff]
        %v1059 = vld [vmem:[#allocation4 + $0x378] sm:$0xff]
        %v1060 = vld [vmem:[#allocation4 + $0x380] sm:$0xf]
        %v1061 = vld [vmem:[#allocation4 + $0x384] sm:$0xff]
        %v1062 = vld [vmem:[#allocation4 + $0x38c] sm:$0xff]
        %v1063 = vld [vmem:[#allocation4 + $0x394] sm:$0xf]
        %v1064 = vld [vmem:[#allocation4 + $0x398] sm:$0xff]
        %v1065 = vld [vmem:[#allocation4 + $0x3a0] sm:$0xff]
        %v1066 = vld [vmem:[#allocation4 + $0x3a8] sm:$0xf]
        %v1067 = vld [vmem:[#allocation4 + $0x3ac] sm:$0xff]
        %v1068 = vld [vmem:[#allocation4 + $0x3b4] sm:$0xff]
        %v1069 = vld [vmem:[#allocation4 + $0x3bc] sm:$0xf]
        %v1070 = vld [vmem:[#allocation4 + $0x3c0] sm:$0xff]
        %v1071 = vld [vmem:[#allocation4 + $0x3c8] sm:$0xff]
        %v1072 = vld [vmem:[#allocation4 + $0x3d0] sm:$0xf]
        %v1073 = vld [vmem:[#allocation4 + $0x3d4] sm:$0xff]
        %v1074 = vld [vmem:[#allocation4 + $0x3dc] sm:$0xff]
        %v1075 = vld [vmem:[#allocation4 + $0x3e4] sm:$0xf]
        %v1076 = vld [vmem:[#allocation4 + $0x3e8] sm:$0xff]
        %v1077 = vld [vmem:[#allocation4 + $0x3f0] sm:$0xff]
        %v1078 = vld [vmem:[#allocation4 + $0x3f8] sm:$0xf]
        %v1079 = vld [vmem:[#allocation4 + $0x3fc] sm:$0xff]
        %v1080 = vld [vmem:[#allocation4 + $0x404] sm:$0xff]
        %v1081 = vld [vmem:[#allocation4 + $0x40c] sm:$0xf]
        %v1082 = vld [vmem:[#allocation4 + $0x410] sm:$0xff]
        %v1083 = vld [vmem:[#allocation4 + $0x418] sm:$0xff]
        %v1084 = vld [vmem:[#allocation4 + $0x420] sm:$0xf]
        %v1085 = vld [vmem:[#allocation4 + $0x424] sm:$0xff]
        %v1086 = vld [vmem:[#allocation4 + $0x42c] sm:$0xff]
        %v1087 = vld [vmem:[#allocation4 + $0x434] sm:$0xf]
        %v1088 = vld [vmem:[#allocation4 + $0x438] sm:$0xff]
        %v1089 = vld [vmem:[#allocation4 + $0x440] sm:$0xff]
        %v1090 = vld [vmem:[#allocation4 + $0x448] sm:$0xf]
        %v1091 = vld [vmem:[#allocation4 + $0x44c] sm:$0xff]
        %v1092 = vld [vmem:[#allocation4 + $0x454] sm:$0xff]
        %v1093 = vld [vmem:[#allocation4 + $0x45c] sm:$0xf]
        %v1094 = vld [vmem:[#allocation4 + $0x460] sm:$0xff]
        %v1095 = vld [vmem:[#allocation4 + $0x468] sm:$0xff]
        %v1096 = vld [vmem:[#allocation4 + $0x470] sm:$0xf]
        %v1097 = vld [vmem:[#allocation4 + $0x474] sm:$0xff]
        %v1098 = vld [vmem:[#allocation4 + $0x47c] sm:$0xff]
        %v1099 = vld [vmem:[#allocation4 + $0x484] sm:$0xf]
        %v1100 = vld [vmem:[#allocation4 + $0x488] sm:$0xff]
        %v1101 = vld [vmem:[#allocation4 + $0x490] sm:$0xff]
        %v1102 = vld [vmem:[#allocation4 + $0x498] sm:$0xf]
        %v1103 = vld [vmem:[#allocation4 + $0x49c] sm:$0xff]
        %v1104 = vld [vmem:[#allocation4 + $0x4a4] sm:$0xff]
        %v1105 = vld [vmem:[#allocation4 + $0x4ac] sm:$0xf]
        %v1106 = vld [vmem:[#allocation4 + $0x4b0] sm:$0xff]
        %v1107 = vld [vmem:[#allocation4 + $0x4b8] sm:$0xff]
        %v1108 = vld [vmem:[#allocation4 + $0x4c0] sm:$0xf]
        %v1109 = vld [vmem:[#allocation4 + $0x4c4] sm:$0xff]
        %v1110 = vld [vmem:[#allocation4 + $0x4cc] sm:$0xff]
        %v1111 = vld [vmem:[#allocation4 + $0x4d4] sm:$0xf]
        %v1112 = vld [vmem:[#allocation4 + $0x4d8] sm:$0xff]
        %v1113 = vld [vmem:[#allocation4 + $0x4e0] sm:$0xff]
        %v1114 = vld [vmem:[#allocation4 + $0x4e8] sm:$0xf]
        %v1115 = vld [vmem:[#allocation4 + $0x4ec] sm:$0xff]
        %v1116 = vld [vmem:[#allocation4 + $0x4f4] sm:$0xff]
        %v1117 = vld [vmem:[#allocation4 + $0x4fc] sm:$0xf]
        %v1118 = vld [vmem:[#allocation4 + $0x500] sm:$0xff]
        %v1119 = vld [vmem:[#allocation4 + $0x508] sm:$0xff]
        %v1120 = vld [vmem:[#allocation4 + $0x510] sm:$0xf]
        %v1121 = vld [vmem:[#allocation4 + $0x514] sm:$0xff]
        %v1122 = vld [vmem:[#allocation4 + $0x51c] sm:$0xff]
        %v1123 = vld [vmem:[#allocation4 + $0x524] sm:$0xf]
        %v1124 = vld [vmem:[#allocation4 + $0x528] sm:$0xff]
        %v1125 = vld [vmem:[#allocation4 + $0x530] sm:$0xff]
        %v1126 = vld [vmem:[#allocation4 + $0x538] sm:$0xf]
        %v1127 = vld [vmem:[#allocation4 + $0x53c] sm:$0xff]
        %v1128 = vld [vmem:[#allocation4 + $0x544] sm:$0xff]
        %v1129 = vld [vmem:[#allocation4 + $0x54c] sm:$0xf]
        %v1130 = vld [vmem:[#allocation4 + $0x550] sm:$0xff]
        %v1131 = vld [vmem:[#allocation4 + $0x558] sm:$0xff]
        %v1132 = vld [vmem:[#allocation4 + $0x560] sm:$0xf]
        %v1133 = vld [vmem:[#allocation4 + $0x564] sm:$0xff]
        %v1134 = vld [vmem:[#allocation4 + $0x56c] sm:$0xff]
        %v1135 = vld [vmem:[#allocation4 + $0x574] sm:$0xf]
        %v1136 = vld [vmem:[#allocation4 + $0x578] sm:$0xff]
        %v1137 = vld [vmem:[#allocation4 + $0x580] sm:$0xff]
        %v1138 = vld [vmem:[#allocation4 + $0x588] sm:$0xf]
        %v1139 = vld [vmem:[#allocation4 + $0x58c] sm:$0xff]
        %v1140 = vld [vmem:[#allocation4 + $0x594] sm:$0xff]
        %v1141 = vld [vmem:[#allocation4 + $0x59c] sm:$0xf]
        %v1142 = vld [vmem:[#allocation4 + $0x5a0] sm:$0xff]
        %v1143 = vld [vmem:[#allocation4 + $0x5a8] sm:$0xff]
        %v1144 = vld [vmem:[#allocation4 + $0x5b0] sm:$0xf]
        %v1145 = vld [vmem:[#allocation4 + $0x5b4] sm:$0xff]
        %v1146 = vld [vmem:[#allocation4 + $0x5bc] sm:$0xff]
        %v1147 = vld [vmem:[#allocation4 + $0x5c4] sm:$0xf]
        %v1148 = vld [vmem:[#allocation4 + $0x5c8] sm:$0xff]
        %v1149 = vld [vmem:[#allocation4 + $0x5d0] sm:$0xff]
        %v1150 = vld [vmem:[#allocation4 + $0x5d8] sm:$0xf]
        %v1151 = vld [vmem:[#allocation4 + $0x5dc] sm:$0xff]
        %v1152 = vld [vmem:[#allocation4 + $0x5e4] sm:$0xff]
        %v1153 = vld [vmem:[#allocation4 + $0x5ec] sm:$0xf]
        %v1154 = vld [vmem:[#allocation4 + $0x5f0] sm:$0xff]
        %v1155 = vld [vmem:[#allocation4 + $0x5f8] sm:$0xff]
        %v1156 = vld [vmem:[#allocation4 + $0x600] sm:$0xf]
        %v1157 = vld [vmem:[#allocation4 + $0x604] sm:$0xff]
        %v1158 = vld [vmem:[#allocation4 + $0x60c] sm:$0xff]
        %v1159 = vld [vmem:[#allocation4 + $0x614] sm:$0xf]
        %v1160 = vld [vmem:[#allocation4 + $0x618] sm:$0xff]
        %v1161 = vld [vmem:[#allocation4 + $0x620] sm:$0xff]
        %v1162 = vld [vmem:[#allocation4 + $0x628] sm:$0xf]
        %v1163 = vld [vmem:[#allocation4 + $0x62c] sm:$0xff]
        %v1164 = vld [vmem:[#allocation4 + $0x634] sm:$0xff]
        %v1165 = vld [vmem:[#allocation4 + $0x63c] sm:$0xf]
        %v1166 = vld [vmem:[%s4] sm:$0x1f]
        %v1168 = vlaneseq
        %v1169 = vshrl.u32 %v1168, 7
        %v1170 = vsub.s32 0, %v1169
        %v1171 = vrot.slane %v1166, %v1170
        %v1172 = vlaneseq
        %v1173 = vshrl.u32 %v1172, 7
        %v1174 = vsub.s32 1, %v1173
        %v1175 = vrot.slane %v1166, %v1174
        %v1176 = vlaneseq
        %v1177 = vshrl.u32 %v1176, 7
        %v1178 = vsub.s32 2, %v1177
        %v1179 = vrot.slane %v1166, %v1178
        %v1180 = vlaneseq
        %v1181 = vshrl.u32 %v1180, 7
        %v1182 = vsub.s32 3, %v1181
        %v1183 = vrot.slane %v1166, %v1182
        %v1184 = vlaneseq
        %v1185 = vshrl.u32 %v1184, 7
        %v1186 = vsub.s32 4, %v1185
        %v1187 = vrot.slane %v1166, %v1186
        %v1433 = vunpack.c.l.b16 %v926
        %v1434 = vunpack.c.h.b16 %v926
        %v1435 = vunpack.c.l.b16 %v927
        %v1436 = vunpack.c.h.b16 %v927
        %v1437 = vunpack.c.l.b16 %v928
        %v1438 = vunpack.c.l.b16 %v929
        %v1439 = vunpack.c.h.b16 %v929
        %v1440 = vunpack.c.l.b16 %v930
        %v1441 = vunpack.c.h.b16 %v930
        %v1442 = vunpack.c.l.b16 %v931
        %v1443 = vunpack.c.l.b16 %v932
        %v1444 = vunpack.c.h.b16 %v932
        %v1445 = vunpack.c.l.b16 %v933
        %v1446 = vunpack.c.h.b16 %v933
        %v1447 = vunpack.c.l.b16 %v934
        %v1448 = vunpack.c.l.b16 %v935
        %v1449 = vunpack.c.h.b16 %v935
        %v1450 = vunpack.c.l.b16 %v936
        %v1451 = vunpack.c.h.b16 %v936
        %v1452 = vunpack.c.l.b16 %v937
        %v1453 = vunpack.c.l.b16 %v938
        %v1454 = vunpack.c.h.b16 %v938
        %v1455 = vunpack.c.l.b16 %v939
        %v1456 = vunpack.c.h.b16 %v939
        %v1457 = vunpack.c.l.b16 %v940
        %v1458 = vunpack.c.l.b16 %v941
        %v1459 = vunpack.c.h.b16 %v941
        %v1460 = vunpack.c.l.b16 %v942
        %v1461 = vunpack.c.h.b16 %v942
        %v1462 = vunpack.c.l.b16 %v943
        %v1463 = vunpack.c.l.b16 %v944
        %v1464 = vunpack.c.h.b16 %v944
        %v1465 = vunpack.c.l.b16 %v945
        %v1466 = vunpack.c.h.b16 %v945
        %v1467 = vunpack.c.l.b16 %v946
        %v1468 = vunpack.c.l.b16 %v947
        %v1469 = vunpack.c.h.b16 %v947
        %v1470 = vunpack.c.l.b16 %v948
        %v1471 = vunpack.c.h.b16 %v948
        %v1472 = vunpack.c.l.b16 %v949
        %v1473 = vunpack.c.l.b16 %v950
        %v1474 = vunpack.c.h.b16 %v950
        %v1475 = vunpack.c.l.b16 %v951
        %v1476 = vunpack.c.h.b16 %v951
        %v1477 = vunpack.c.l.b16 %v952
        %v1478 = vunpack.c.l.b16 %v953
        %v1479 = vunpack.c.h.b16 %v953
        %v1480 = vunpack.c.l.b16 %v954
        %v1481 = vunpack.c.h.b16 %v954
        %v1482 = vunpack.c.l.b16 %v955
        %v1483 = vunpack.c.l.b16 %v956
        %v1484 = vunpack.c.h.b16 %v956
        %v1485 = vunpack.c.l.b16 %v957
        %v1486 = vunpack.c.h.b16 %v957
        %v1487 = vunpack.c.l.b16 %v958
        %v1488 = vunpack.c.l.b16 %v959
        %v1489 = vunpack.c.h.b16 %v959
        %v1490 = vunpack.c.l.b16 %v960
        %v1491 = vunpack.c.h.b16 %v960
        %v1492 = vunpack.c.l.b16 %v961
        %v1493 = vunpack.c.l.b16 %v962
        %v1494 = vunpack.c.h.b16 %v962
        %v1495 = vunpack.c.l.b16 %v963
        %v1496 = vunpack.c.h.b16 %v963
        %v1497 = vunpack.c.l.b16 %v964
        %v1498 = vunpack.c.l.b16 %v965
        %v1499 = vunpack.c.h.b16 %v965
        %v1500 = vunpack.c.l.b16 %v966
        %v1501 = vunpack.c.h.b16 %v966
        %v1502 = vunpack.c.l.b16 %v967
        %v1503 = vunpack.c.l.b16 %v968
        %v1504 = vunpack.c.h.b16 %v968
        %v1505 = vunpack.c.l.b16 %v969
        %v1506 = vunpack.c.h.b16 %v969
        %v1507 = vunpack.c.l.b16 %v970
        %v1508 = vunpack.c.l.b16 %v971
        %v1509 = vunpack.c.h.b16 %v971
        %v1510 = vunpack.c.l.b16 %v972
        %v1511 = vunpack.c.h.b16 %v972
        %v1512 = vunpack.c.l.b16 %v973
        %v1513 = vunpack.c.l.b16 %v974
        %v1514 = vunpack.c.h.b16 %v974
        %v1515 = vunpack.c.l.b16 %v975
        %v1516 = vunpack.c.h.b16 %v975
        %v1517 = vunpack.c.l.b16 %v976
        %v1518 = vunpack.c.l.b16 %v977
        %v1519 = vunpack.c.h.b16 %v977
        %v1520 = vunpack.c.l.b16 %v978
        %v1521 = vunpack.c.h.b16 %v978
        %v1522 = vunpack.c.l.b16 %v979
        %v1523 = vunpack.c.l.b16 %v980
        %v1524 = vunpack.c.h.b16 %v980
        %v1525 = vunpack.c.l.b16 %v981
        %v1526 = vunpack.c.h.b16 %v981
        %v1527 = vunpack.c.l.b16 %v982
        %v1528 = vunpack.c.l.b16 %v983
        %v1529 = vunpack.c.h.b16 %v983
        %v1530 = vunpack.c.l.b16 %v984
        %v1531 = vunpack.c.h.b16 %v984
        %v1532 = vunpack.c.l.b16 %v985
        %v1533 = vunpack.c.l.b16 %v986
        %v1534 = vunpack.c.h.b16 %v986
        %v1535 = vunpack.c.l.b16 %v987
        %v1536 = vunpack.c.h.b16 %v987
        %v1537 = vunpack.c.l.b16 %v988
        %v1538 = vunpack.c.l.b16 %v989
        %v1539 = vunpack.c.h.b16 %v989
        %v1540 = vunpack.c.l.b16 %v990
        %v1541 = vunpack.c.h.b16 %v990
        %v1542 = vunpack.c.l.b16 %v991
        %v1543 = vunpack.c.l.b16 %v992
        %v1544 = vunpack.c.h.b16 %v992
        %v1545 = vunpack.c.l.b16 %v993
        %v1546 = vunpack.c.h.b16 %v993
        %v1547 = vunpack.c.l.b16 %v994
        %v1548 = vunpack.c.l.b16 %v995
        %v1549 = vunpack.c.h.b16 %v995
        %v1550 = vunpack.c.l.b16 %v996
        %v1551 = vunpack.c.h.b16 %v996
        %v1552 = vunpack.c.l.b16 %v997
        %v1553 = vunpack.c.l.b16 %v998
        %v1554 = vunpack.c.h.b16 %v998
        %v1555 = vunpack.c.l.b16 %v999
        %v1556 = vunpack.c.h.b16 %v999
        %v1557 = vunpack.c.l.b16 %v1000
        %v1558 = vunpack.c.l.b16 %v1001
        %v1559 = vunpack.c.h.b16 %v1001
        %v1560 = vunpack.c.l.b16 %v1002
        %v1561 = vunpack.c.h.b16 %v1002
        %v1562 = vunpack.c.l.b16 %v1003
        %v1563 = vunpack.c.l.b16 %v1004
        %v1564 = vunpack.c.h.b16 %v1004
        %v1565 = vunpack.c.l.b16 %v1005
        %v1566 = vunpack.c.h.b16 %v1005
        %v1567 = vunpack.c.l.b16 %v1006
        %v1568 = vunpack.c.l.b16 %v1007
        %v1569 = vunpack.c.h.b16 %v1007
        %v1570 = vunpack.c.l.b16 %v1008
        %v1571 = vunpack.c.h.b16 %v1008
        %v1572 = vunpack.c.l.b16 %v1009
        %v1573 = vunpack.c.l.b16 %v1010
        %v1574 = vunpack.c.h.b16 %v1010
        %v1575 = vunpack.c.l.b16 %v1011
        %v1576 = vunpack.c.h.b16 %v1011
        %v1577 = vunpack.c.l.b16 %v1012
        %v1578 = vunpack.c.l.b16 %v1013
        %v1579 = vunpack.c.h.b16 %v1013
        %v1580 = vunpack.c.l.b16 %v1014
        %v1581 = vunpack.c.h.b16 %v1014
        %v1582 = vunpack.c.l.b16 %v1015
        %v1583 = vunpack.c.l.b16 %v1016
        %v1584 = vunpack.c.h.b16 %v1016
        %v1585 = vunpack.c.l.b16 %v1017
        %v1586 = vunpack.c.h.b16 %v1017
        %v1587 = vunpack.c.l.b16 %v1018
        %v1588 = vunpack.c.l.b16 %v1019
        %v1589 = vunpack.c.h.b16 %v1019
        %v1590 = vunpack.c.l.b16 %v1020
        %v1591 = vunpack.c.h.b16 %v1020
        %v1592 = vunpack.c.l.b16 %v1021
        %v1593 = vunpack.c.l.b16 %v1022
        %v1594 = vunpack.c.h.b16 %v1022
        %v1595 = vunpack.c.l.b16 %v1023
        %v1596 = vunpack.c.h.b16 %v1023
        %v1597 = vunpack.c.l.b16 %v1024
        %v1598 = vunpack.c.l.b16 %v1025
        %v1599 = vunpack.c.h.b16 %v1025
        %v1600 = vunpack.c.l.b16 %v1026
        %v1601 = vunpack.c.h.b16 %v1026
        %v1602 = vunpack.c.l.b16 %v1027
        %v1603 = vunpack.c.l.b16 %v1028
        %v1604 = vunpack.c.h.b16 %v1028
        %v1605 = vunpack.c.l.b16 %v1029
        %v1606 = vunpack.c.h.b16 %v1029
        %v1607 = vunpack.c.l.b16 %v1030
        %v1608 = vunpack.c.l.b16 %v1031
        %v1609 = vunpack.c.h.b16 %v1031
        %v1610 = vunpack.c.l.b16 %v1032
        %v1611 = vunpack.c.h.b16 %v1032
        %v1612 = vunpack.c.l.b16 %v1033
        %v1613 = vunpack.c.l.b16 %v1034
        %v1614 = vunpack.c.h.b16 %v1034
        %v1615 = vunpack.c.l.b16 %v1035
        %v1616 = vunpack.c.h.b16 %v1035
        %v1617 = vunpack.c.l.b16 %v1036
        %v1618 = vunpack.c.l.b16 %v1037
        %v1619 = vunpack.c.h.b16 %v1037
        %v1620 = vunpack.c.l.b16 %v1038
        %v1621 = vunpack.c.h.b16 %v1038
        %v1622 = vunpack.c.l.b16 %v1039
        %v1623 = vunpack.c.l.b16 %v1040
        %v1624 = vunpack.c.h.b16 %v1040
        %v1625 = vunpack.c.l.b16 %v1041
        %v1626 = vunpack.c.h.b16 %v1041
        %v1627 = vunpack.c.l.b16 %v1042
        %v1628 = vunpack.c.l.b16 %v1043
        %v1629 = vunpack.c.h.b16 %v1043
        %v1630 = vunpack.c.l.b16 %v1044
        %v1631 = vunpack.c.h.b16 %v1044
        %v1632 = vunpack.c.l.b16 %v1045
        %v1633 = vunpack.c.l.b16 %v1046
        %v1634 = vunpack.c.h.b16 %v1046
        %v1635 = vunpack.c.l.b16 %v1047
        %v1636 = vunpack.c.h.b16 %v1047
        %v1637 = vunpack.c.l.b16 %v1048
        %v1638 = vunpack.c.l.b16 %v1049
        %v1639 = vunpack.c.h.b16 %v1049
        %v1640 = vunpack.c.l.b16 %v1050
        %v1641 = vunpack.c.h.b16 %v1050
        %v1642 = vunpack.c.l.b16 %v1051
        %v1643 = vunpack.c.l.b16 %v1052
        %v1644 = vunpack.c.h.b16 %v1052
        %v1645 = vunpack.c.l.b16 %v1053
        %v1646 = vunpack.c.h.b16 %v1053
        %v1647 = vunpack.c.l.b16 %v1054
        %v1648 = vunpack.c.l.b16 %v1055
        %v1649 = vunpack.c.h.b16 %v1055
        %v1650 = vunpack.c.l.b16 %v1056
        %v1651 = vunpack.c.h.b16 %v1056
        %v1652 = vunpack.c.l.b16 %v1057
        %v1653 = vunpack.c.l.b16 %v1058
        %v1654 = vunpack.c.h.b16 %v1058
        %v1655 = vunpack.c.l.b16 %v1059
        %v1656 = vunpack.c.h.b16 %v1059
        %v1657 = vunpack.c.l.b16 %v1060
        %v1658 = vunpack.c.l.b16 %v1061
        %v1659 = vunpack.c.h.b16 %v1061
        %v1660 = vunpack.c.l.b16 %v1062
        %v1661 = vunpack.c.h.b16 %v1062
        %v1662 = vunpack.c.l.b16 %v1063
        %v1663 = vunpack.c.l.b16 %v1064
        %v1664 = vunpack.c.h.b16 %v1064
        %v1665 = vunpack.c.l.b16 %v1065
        %v1666 = vunpack.c.h.b16 %v1065
        %v1667 = vunpack.c.l.b16 %v1066
        %v1668 = vunpack.c.l.b16 %v1067
        %v1669 = vunpack.c.h.b16 %v1067
        %v1670 = vunpack.c.l.b16 %v1068
        %v1671 = vunpack.c.h.b16 %v1068
        %v1672 = vunpack.c.l.b16 %v1069
        %v1673 = vunpack.c.l.b16 %v1070
        %v1674 = vunpack.c.h.b16 %v1070
        %v1675 = vunpack.c.l.b16 %v1071
        %v1676 = vunpack.c.h.b16 %v1071
        %v1677 = vunpack.c.l.b16 %v1072
        %v1678 = vunpack.c.l.b16 %v1073
        %v1679 = vunpack.c.h.b16 %v1073
        %v1680 = vunpack.c.l.b16 %v1074
        %v1681 = vunpack.c.h.b16 %v1074
        %v1682 = vunpack.c.l.b16 %v1075
        %v1683 = vunpack.c.l.b16 %v1076
        %v1684 = vunpack.c.h.b16 %v1076
        %v1685 = vunpack.c.l.b16 %v1077
        %v1686 = vunpack.c.h.b16 %v1077
        %v1687 = vunpack.c.l.b16 %v1078
        %v1688 = vunpack.c.l.b16 %v1079
        %v1689 = vunpack.c.h.b16 %v1079
        %v1690 = vunpack.c.l.b16 %v1080
        %v1691 = vunpack.c.h.b16 %v1080
        %v1692 = vunpack.c.l.b16 %v1081
        %v1693 = vunpack.c.l.b16 %v1082
        %v1694 = vunpack.c.h.b16 %v1082
        %v1695 = vunpack.c.l.b16 %v1083
        %v1696 = vunpack.c.h.b16 %v1083
        %v1697 = vunpack.c.l.b16 %v1084
        %v1698 = vunpack.c.l.b16 %v1085
        %v1699 = vunpack.c.h.b16 %v1085
        %v1700 = vunpack.c.l.b16 %v1086
        %v1701 = vunpack.c.h.b16 %v1086
        %v1702 = vunpack.c.l.b16 %v1087
        %v1703 = vunpack.c.l.b16 %v1088
        %v1704 = vunpack.c.h.b16 %v1088
        %v1705 = vunpack.c.l.b16 %v1089
        %v1706 = vunpack.c.h.b16 %v1089
        %v1707 = vunpack.c.l.b16 %v1090
        %v1708 = vunpack.c.l.b16 %v1091
        %v1709 = vunpack.c.h.b16 %v1091
        %v1710 = vunpack.c.l.b16 %v1092
        %v1711 = vunpack.c.h.b16 %v1092
        %v1712 = vunpack.c.l.b16 %v1093
        %v1713 = vunpack.c.l.b16 %v1094
        %v1714 = vunpack.c.h.b16 %v1094
        %v1715 = vunpack.c.l.b16 %v1095
        %v1716 = vunpack.c.h.b16 %v1095
        %v1717 = vunpack.c.l.b16 %v1096
        %v1718 = vunpack.c.l.b16 %v1097
        %v1719 = vunpack.c.h.b16 %v1097
        %v1720 = vunpack.c.l.b16 %v1098
        %v1721 = vunpack.c.h.b16 %v1098
        %v1722 = vunpack.c.l.b16 %v1099
        %v1723 = vunpack.c.l.b16 %v1100
        %v1724 = vunpack.c.h.b16 %v1100
        %v1725 = vunpack.c.l.b16 %v1101
        %v1726 = vunpack.c.h.b16 %v1101
        %v1727 = vunpack.c.l.b16 %v1102
        %v1728 = vunpack.c.l.b16 %v1103
        %v1729 = vunpack.c.h.b16 %v1103
        %v1730 = vunpack.c.l.b16 %v1104
        %v1731 = vunpack.c.h.b16 %v1104
        %v1732 = vunpack.c.l.b16 %v1105
        %v1733 = vunpack.c.l.b16 %v1106
        %v1734 = vunpack.c.h.b16 %v1106
        %v1735 = vunpack.c.l.b16 %v1107
        %v1736 = vunpack.c.h.b16 %v1107
        %v1737 = vunpack.c.l.b16 %v1108
        %v1738 = vunpack.c.l.b16 %v1109
        %v1739 = vunpack.c.h.b16 %v1109
        %v1740 = vunpack.c.l.b16 %v1110
        %v1741 = vunpack.c.h.b16 %v1110
        %v1742 = vunpack.c.l.b16 %v1111
        %v1743 = vunpack.c.l.b16 %v1112
        %v1744 = vunpack.c.h.b16 %v1112
        %v1745 = vunpack.c.l.b16 %v1113
        %v1746 = vunpack.c.h.b16 %v1113
        %v1747 = vunpack.c.l.b16 %v1114
        %v1748 = vunpack.c.l.b16 %v1115
        %v1749 = vunpack.c.h.b16 %v1115
        %v1750 = vunpack.c.l.b16 %v1116
        %v1751 = vunpack.c.h.b16 %v1116
        %v1752 = vunpack.c.l.b16 %v1117
        %v1753 = vunpack.c.l.b16 %v1118
        %v1754 = vunpack.c.h.b16 %v1118
        %v1755 = vunpack.c.l.b16 %v1119
        %v1756 = vunpack.c.h.b16 %v1119
        %v1757 = vunpack.c.l.b16 %v1120
        %v1758 = vunpack.c.l.b16 %v1121
        %v1759 = vunpack.c.h.b16 %v1121
        %v1760 = vunpack.c.l.b16 %v1122
        %v1761 = vunpack.c.h.b16 %v1122
        %v1762 = vunpack.c.l.b16 %v1123
        %v1763 = vunpack.c.l.b16 %v1124
        %v1764 = vunpack.c.h.b16 %v1124
        %v1765 = vunpack.c.l.b16 %v1125
        %v1766 = vunpack.c.h.b16 %v1125
        %v1767 = vunpack.c.l.b16 %v1126
        %v1768 = vunpack.c.l.b16 %v1127
        %v1769 = vunpack.c.h.b16 %v1127
        %v1770 = vunpack.c.l.b16 %v1128
        %v1771 = vunpack.c.h.b16 %v1128
        %v1772 = vunpack.c.l.b16 %v1129
        %v1773 = vunpack.c.l.b16 %v1130
        %v1774 = vunpack.c.h.b16 %v1130
        %v1775 = vunpack.c.l.b16 %v1131
        %v1776 = vunpack.c.h.b16 %v1131
        %v1777 = vunpack.c.l.b16 %v1132
        %v1778 = vunpack.c.l.b16 %v1133
        %v1779 = vunpack.c.h.b16 %v1133
        %v1780 = vunpack.c.l.b16 %v1134
        %v1781 = vunpack.c.h.b16 %v1134
        %v1782 = vunpack.c.l.b16 %v1135
        %v1783 = vunpack.c.l.b16 %v1136
        %v1784 = vunpack.c.h.b16 %v1136
        %v1785 = vunpack.c.l.b16 %v1137
        %v1786 = vunpack.c.h.b16 %v1137
        %v1787 = vunpack.c.l.b16 %v1138
        %v1788 = vunpack.c.l.b16 %v1139
        %v1789 = vunpack.c.h.b16 %v1139
        %v1790 = vunpack.c.l.b16 %v1140
        %v1791 = vunpack.c.h.b16 %v1140
        %v1792 = vunpack.c.l.b16 %v1141
        %v1793 = vunpack.c.l.b16 %v1142
        %v1794 = vunpack.c.h.b16 %v1142
        %v1795 = vunpack.c.l.b16 %v1143
        %v1796 = vunpack.c.h.b16 %v1143
        %v1797 = vunpack.c.l.b16 %v1144
        %v1798 = vunpack.c.l.b16 %v1145
        %v1799 = vunpack.c.h.b16 %v1145
        %v1800 = vunpack.c.l.b16 %v1146
        %v1801 = vunpack.c.h.b16 %v1146
        %v1802 = vunpack.c.l.b16 %v1147
        %v1803 = vunpack.c.l.b16 %v1148
        %v1804 = vunpack.c.h.b16 %v1148
        %v1805 = vunpack.c.l.b16 %v1149
        %v1806 = vunpack.c.h.b16 %v1149
        %v1807 = vunpack.c.l.b16 %v1150
        %v1808 = vunpack.c.l.b16 %v1151
        %v1809 = vunpack.c.h.b16 %v1151
        %v1810 = vunpack.c.l.b16 %v1152
        %v1811 = vunpack.c.h.b16 %v1152
        %v1812 = vunpack.c.l.b16 %v1153
        %v1813 = vunpack.c.l.b16 %v1154
        %v1814 = vunpack.c.h.b16 %v1154
        %v1815 = vunpack.c.l.b16 %v1155
        %v1816 = vunpack.c.h.b16 %v1155
        %v1817 = vunpack.c.l.b16 %v1156
        %v1818 = vunpack.c.l.b16 %v1157
        %v1819 = vunpack.c.h.b16 %v1157
        %v1820 = vunpack.c.l.b16 %v1158
        %v1821 = vunpack.c.h.b16 %v1158
        %v1822 = vunpack.c.l.b16 %v1159
        %v1823 = vunpack.c.l.b16 %v1160
        %v1824 = vunpack.c.h.b16 %v1160
        %v1825 = vunpack.c.l.b16 %v1161
        %v1826 = vunpack.c.h.b16 %v1161
        %v1827 = vunpack.c.l.b16 %v1162
        %v1828 = vunpack.c.l.b16 %v1163
        %v1829 = vunpack.c.h.b16 %v1163
        %v1830 = vunpack.c.l.b16 %v1164
        %v1831 = vunpack.c.h.b16 %v1164
        %v1832 = vunpack.c.l.b16 %v1165
        %v1833 = vpack.c.b16 %v1438, %v1433
        %v1834 = vpack.c.b16 %v1439, %v1434
        %v1835 = vpack.c.b16 %v1440, %v1435
        %v1836 = vpack.c.b16 %v1441, %v1436
        %v1837 = vpack.c.b16 %v1442, %v1437
        %v1838 = vpack.c.b16 %v1448, %v1443
        %v1839 = vpack.c.b16 %v1449, %v1444
        %v1840 = vpack.c.b16 %v1450, %v1445
        %v1841 = vpack.c.b16 %v1451, %v1446
        %v1842 = vpack.c.b16 %v1452, %v1447
        %v1843 = vpack.c.b16 %v1458, %v1453
        %v1844 = vpack.c.b16 %v1459, %v1454
        %v1845 = vpack.c.b16 %v1460, %v1455
        %v1846 = vpack.c.b16 %v1461, %v1456
        %v1847 = vpack.c.b16 %v1462, %v1457
        %v1848 = vpack.c.b16 %v1468, %v1463
        %v1849 = vpack.c.b16 %v1469, %v1464
        %v1850 = vpack.c.b16 %v1470, %v1465
        %v1851 = vpack.c.b16 %v1471, %v1466
        %v1852 = vpack.c.b16 %v1472, %v1467
        %v1853 = vpack.c.b16 %v1478, %v1473
        %v1854 = vpack.c.b16 %v1479, %v1474
        %v1855 = vpack.c.b16 %v1480, %v1475
        %v1856 = vpack.c.b16 %v1481, %v1476
        %v1857 = vpack.c.b16 %v1482, %v1477
        %v1858 = vpack.c.b16 %v1488, %v1483
        %v1859 = vpack.c.b16 %v1489, %v1484
        %v1860 = vpack.c.b16 %v1490, %v1485
        %v1861 = vpack.c.b16 %v1491, %v1486
        %v1862 = vpack.c.b16 %v1492, %v1487
        %v1863 = vpack.c.b16 %v1498, %v1493
        %v1864 = vpack.c.b16 %v1499, %v1494
        %v1865 = vpack.c.b16 %v1500, %v1495
        %v1866 = vpack.c.b16 %v1501, %v1496
        %v1867 = vpack.c.b16 %v1502, %v1497
        %v1868 = vpack.c.b16 %v1508, %v1503
        %v1869 = vpack.c.b16 %v1509, %v1504
        %v1870 = vpack.c.b16 %v1510, %v1505
        %v1871 = vpack.c.b16 %v1511, %v1506
        %v1872 = vpack.c.b16 %v1512, %v1507
        %v1873 = vpack.c.b16 %v1518, %v1513
        %v1874 = vpack.c.b16 %v1519, %v1514
        %v1875 = vpack.c.b16 %v1520, %v1515
        %v1876 = vpack.c.b16 %v1521, %v1516
        %v1877 = vpack.c.b16 %v1522, %v1517
        %v1878 = vpack.c.b16 %v1528, %v1523
        %v1879 = vpack.c.b16 %v1529, %v1524
        %v1880 = vpack.c.b16 %v1530, %v1525
        %v1881 = vpack.c.b16 %v1531, %v1526
        %v1882 = vpack.c.b16 %v1532, %v1527
        %v1883 = vpack.c.b16 %v1538, %v1533
        %v1884 = vpack.c.b16 %v1539, %v1534
        %v1885 = vpack.c.b16 %v1540, %v1535
        %v1886 = vpack.c.b16 %v1541, %v1536
        %v1887 = vpack.c.b16 %v1542, %v1537
        %v1888 = vpack.c.b16 %v1548, %v1543
        %v1889 = vpack.c.b16 %v1549, %v1544
        %v1890 = vpack.c.b16 %v1550, %v1545
        %v1891 = vpack.c.b16 %v1551, %v1546
        %v1892 = vpack.c.b16 %v1552, %v1547
        %v1893 = vpack.c.b16 %v1558, %v1553
        %v1894 = vpack.c.b16 %v1559, %v1554
        %v1895 = vpack.c.b16 %v1560, %v1555
        %v1896 = vpack.c.b16 %v1561, %v1556
        %v1897 = vpack.c.b16 %v1562, %v1557
        %v1898 = vpack.c.b16 %v1568, %v1563
        %v1899 = vpack.c.b16 %v1569, %v1564
        %v1900 = vpack.c.b16 %v1570, %v1565
        %v1901 = vpack.c.b16 %v1571, %v1566
        %v1902 = vpack.c.b16 %v1572, %v1567
        %v1903 = vpack.c.b16 %v1578, %v1573
        %v1904 = vpack.c.b16 %v1579, %v1574
        %v1905 = vpack.c.b16 %v1580, %v1575
        %v1906 = vpack.c.b16 %v1581, %v1576
        %v1907 = vpack.c.b16 %v1582, %v1577
        %v1908 = vpack.c.b16 %v1588, %v1583
        %v1909 = vpack.c.b16 %v1589, %v1584
        %v1910 = vpack.c.b16 %v1590, %v1585
        %v1911 = vpack.c.b16 %v1591, %v1586
        %v1912 = vpack.c.b16 %v1592, %v1587
        %v1913 = vpack.c.b16 %v1598, %v1593
        %v1914 = vpack.c.b16 %v1599, %v1594
        %v1915 = vpack.c.b16 %v1600, %v1595
        %v1916 = vpack.c.b16 %v1601, %v1596
        %v1917 = vpack.c.b16 %v1602, %v1597
        %v1918 = vpack.c.b16 %v1608, %v1603
        %v1919 = vpack.c.b16 %v1609, %v1604
        %v1920 = vpack.c.b16 %v1610, %v1605
        %v1921 = vpack.c.b16 %v1611, %v1606
        %v1922 = vpack.c.b16 %v1612, %v1607
        %v1923 = vpack.c.b16 %v1618, %v1613
        %v1924 = vpack.c.b16 %v1619, %v1614
        %v1925 = vpack.c.b16 %v1620, %v1615
        %v1926 = vpack.c.b16 %v1621, %v1616
        %v1927 = vpack.c.b16 %v1622, %v1617
        %v1928 = vpack.c.b16 %v1628, %v1623
        %v1929 = vpack.c.b16 %v1629, %v1624
        %v1930 = vpack.c.b16 %v1630, %v1625
        %v1931 = vpack.c.b16 %v1631, %v1626
        %v1932 = vpack.c.b16 %v1632, %v1627
        %v1933 = vpack.c.b16 %v1638, %v1633
        %v1934 = vpack.c.b16 %v1639, %v1634
        %v1935 = vpack.c.b16 %v1640, %v1635
        %v1936 = vpack.c.b16 %v1641, %v1636
        %v1937 = vpack.c.b16 %v1642, %v1637
        %v1938 = vpack.c.b16 %v1648, %v1643
        %v1939 = vpack.c.b16 %v1649, %v1644
        %v1940 = vpack.c.b16 %v1650, %v1645
        %v1941 = vpack.c.b16 %v1651, %v1646
        %v1942 = vpack.c.b16 %v1652, %v1647
        %v1943 = vpack.c.b16 %v1658, %v1653
        %v1944 = vpack.c.b16 %v1659, %v1654
        %v1945 = vpack.c.b16 %v1660, %v1655
        %v1946 = vpack.c.b16 %v1661, %v1656
        %v1947 = vpack.c.b16 %v1662, %v1657
        %v1948 = vpack.c.b16 %v1668, %v1663
        %v1949 = vpack.c.b16 %v1669, %v1664
        %v1950 = vpack.c.b16 %v1670, %v1665
        %v1951 = vpack.c.b16 %v1671, %v1666
        %v1952 = vpack.c.b16 %v1672, %v1667
        %v1953 = vpack.c.b16 %v1678, %v1673
        %v1954 = vpack.c.b16 %v1679, %v1674
        %v1955 = vpack.c.b16 %v1680, %v1675
        %v1956 = vpack.c.b16 %v1681, %v1676
        %v1957 = vpack.c.b16 %v1682, %v1677
        %v1958 = vpack.c.b16 %v1688, %v1683
        %v1959 = vpack.c.b16 %v1689, %v1684
        %v1960 = vpack.c.b16 %v1690, %v1685
        %v1961 = vpack.c.b16 %v1691, %v1686
        %v1962 = vpack.c.b16 %v1692, %v1687
        %v1963 = vpack.c.b16 %v1698, %v1693
        %v1964 = vpack.c.b16 %v1699, %v1694
        %v1965 = vpack.c.b16 %v1700, %v1695
        %v1966 = vpack.c.b16 %v1701, %v1696
        %v1967 = vpack.c.b16 %v1702, %v1697
        %v1968 = vpack.c.b16 %v1708, %v1703
        %v1969 = vpack.c.b16 %v1709, %v1704
        %v1970 = vpack.c.b16 %v1710, %v1705
        %v1971 = vpack.c.b16 %v1711, %v1706
        %v1972 = vpack.c.b16 %v1712, %v1707
        %v1973 = vpack.c.b16 %v1718, %v1713
        %v1974 = vpack.c.b16 %v1719, %v1714
        %v1975 = vpack.c.b16 %v1720, %v1715
        %v1976 = vpack.c.b16 %v1721, %v1716
        %v1977 = vpack.c.b16 %v1722, %v1717
        %v1978 = vpack.c.b16 %v1728, %v1723
        %v1979 = vpack.c.b16 %v1729, %v1724
        %v1980 = vpack.c.b16 %v1730, %v1725
        %v1981 = vpack.c.b16 %v1731, %v1726
        %v1982 = vpack.c.b16 %v1732, %v1727
        %v1983 = vpack.c.b16 %v1738, %v1733
        %v1984 = vpack.c.b16 %v1739, %v1734
        %v1985 = vpack.c.b16 %v1740, %v1735
        %v1986 = vpack.c.b16 %v1741, %v1736
        %v1987 = vpack.c.b16 %v1742, %v1737
        %v1988 = vpack.c.b16 %v1748, %v1743
        %v1989 = vpack.c.b16 %v1749, %v1744
        %v1990 = vpack.c.b16 %v1750, %v1745
        %v1991 = vpack.c.b16 %v1751, %v1746
        %v1992 = vpack.c.b16 %v1752, %v1747
        %v1993 = vpack.c.b16 %v1758, %v1753
        %v1994 = vpack.c.b16 %v1759, %v1754
        %v1995 = vpack.c.b16 %v1760, %v1755
        %v1996 = vpack.c.b16 %v1761, %v1756
        %v1997 = vpack.c.b16 %v1762, %v1757
        %v1998 = vpack.c.b16 %v1768, %v1763
        %v1999 = vpack.c.b16 %v1769, %v1764
        %v2000 = vpack.c.b16 %v1770, %v1765
        %v2001 = vpack.c.b16 %v1771, %v1766
        %v2002 = vpack.c.b16 %v1772, %v1767
        %v2003 = vpack.c.b16 %v1778, %v1773
        %v2004 = vpack.c.b16 %v1779, %v1774
        %v2005 = vpack.c.b16 %v1780, %v1775
        %v2006 = vpack.c.b16 %v1781, %v1776
        %v2007 = vpack.c.b16 %v1782, %v1777
        %v2008 = vpack.c.b16 %v1788, %v1783
        %v2009 = vpack.c.b16 %v1789, %v1784
        %v2010 = vpack.c.b16 %v1790, %v1785
        %v2011 = vpack.c.b16 %v1791, %v1786
        %v2012 = vpack.c.b16 %v1792, %v1787
        %v2013 = vpack.c.b16 %v1798, %v1793
        %v2014 = vpack.c.b16 %v1799, %v1794
        %v2015 = vpack.c.b16 %v1800, %v1795
        %v2016 = vpack.c.b16 %v1801, %v1796
        %v2017 = vpack.c.b16 %v1802, %v1797
        %v2018 = vpack.c.b16 %v1808, %v1803
        %v2019 = vpack.c.b16 %v1809, %v1804
        %v2020 = vpack.c.b16 %v1810, %v1805
        %v2021 = vpack.c.b16 %v1811, %v1806
        %v2022 = vpack.c.b16 %v1812, %v1807
        %v2023 = vpack.c.b16 %v1818, %v1813
        %v2024 = vpack.c.b16 %v1819, %v1814
        %v2025 = vpack.c.b16 %v1820, %v1815
        %v2026 = vpack.c.b16 %v1821, %v1816
        %v2027 = vpack.c.b16 %v1822, %v1817
        %v2028 = vpack.c.b16 %v1828, %v1823
        %v2029 = vpack.c.b16 %v1829, %v1824
        %v2030 = vpack.c.b16 %v1830, %v1825
        %v2031 = vpack.c.b16 %v1831, %v1826
        %v2032 = vpack.c.b16 %v1832, %v1827
        %2233 = vmatprep.subr.bf16.mxu0 %v1869
        %2234 = vmatpush1.bf16.msra.mxu0 %v1868
        %2235 = vmatprep.subr.bf16.mxu0 %v1864
        %2236 = vmatpush1.bf16.msra.mxu0 %v1863
        %2237 = vmatprep.subr.bf16.mxu0 %v1859
        %2238 = vmatpush1.bf16.msra.mxu0 %v1858
        %2239 = vmatprep.subr.bf16.mxu0 %v1854
        %2240 = vmatpush1.bf16.msra.mxu0 %v1853
        %2241 = vmatprep.subr.bf16.mxu0 %v1849
        %2242 = vmatpush1.bf16.msra.mxu0 %v1848
        %2243 = vmatprep.subr.bf16.mxu0 %v1844
        %2244 = vmatpush1.bf16.msra.mxu0 %v1843
        %2245 = vmatprep.subr.bf16.mxu0 %v1839
        %2246 = vmatpush1.bf16.msra.mxu0 %v1838
        %2247 = vmatprep.subr.bf16.mxu0 %v1834
        %2248 = vmatpush1.bf16.msra.mxu0 %v1833
        %2249 = vmatprep.subr.bf16.mxu0 %v1909
        %2250 = vmatpush2.bf16.msra.mxu0 %v1908
        %2251 = vmatprep.subr.bf16.mxu0 %v1904
        %2252 = vmatpush2.bf16.msra.mxu0 %v1903
        %2253 = vmatprep.subr.bf16.mxu0 %v1899
        %2254 = vmatpush2.bf16.msra.mxu0 %v1898
        %2255 = vmatprep.subr.bf16.mxu0 %v1894
        %2256 = vmatpush2.bf16.msra.mxu0 %v1893
        %2257 = vmatprep.subr.bf16.mxu0 %v1889
        %2258 = vmatpush2.bf16.msra.mxu0 %v1888
        %2259 = vmatprep.subr.bf16.mxu0 %v1884
        %2260 = vmatpush2.bf16.msra.mxu0 %v1883
        %2261 = vmatprep.subr.bf16.mxu0 %v1879
        %2262 = vmatpush2.bf16.msra.mxu0 %v1878
        %2263 = vmatprep.subr.bf16.mxu0 %v1874
        %2264 = vmatpush2.bf16.msra.mxu0 %v1873
        %2265 = vmatprep.mubr.bf16.mxu0 %v922
        %2266 = vmatmul.mubr.bf16.gmra.mxu0 %v921
        %v2267 = vpop.f32.mrf.mxu0
        %v2268 = vadd.f32 %v1171, %v2267
        %v2269 = vpop.f32.mrf.mxu0
        %v2270 = vadd.f32 %v1175, %v2269
        %v2271 = vpop.f32.mrf.mxu0
        %v2272 = vpop.f32.mrf.mxu0
        %2273 = vdwg.mxu0
        %2274 = vmatprep.subr.bf16.mxu0 %v1949
        %2275 = vmatpush1.bf16.msra.mxu0 %v1948
        %2276 = vmatprep.subr.bf16.mxu0 %v1944
        %2277 = vmatpush1.bf16.msra.mxu0 %v1943
        %2278 = vmatprep.subr.bf16.mxu0 %v1939
        %2279 = vmatpush1.bf16.msra.mxu0 %v1938
        %2280 = vmatprep.subr.bf16.mxu0 %v1934
        %2281 = vmatpush1.bf16.msra.mxu0 %v1933
        %2282 = vmatprep.subr.bf16.mxu0 %v1929
        %2283 = vmatpush1.bf16.msra.mxu0 %v1928
        %2284 = vmatprep.subr.bf16.mxu0 %v1924
        %2285 = vmatpush1.bf16.msra.mxu0 %v1923
        %2286 = vmatprep.subr.bf16.mxu0 %v1919
        %2287 = vmatpush1.bf16.msra.mxu0 %v1918
        %2288 = vmatprep.subr.bf16.mxu0 %v1914
        %2289 = vmatpush1.bf16.msra.mxu0 %v1913
        %2290 = vmatprep.subr.bf16.mxu0 %v1989
        %2291 = vmatpush2.bf16.msra.mxu0 %v1988
        %2292 = vmatprep.subr.bf16.mxu0 %v1984
        %2293 = vmatpush2.bf16.msra.mxu0 %v1983
        %2294 = vmatprep.subr.bf16.mxu0 %v1979
        %2295 = vmatpush2.bf16.msra.mxu0 %v1978
        %2296 = vmatprep.subr.bf16.mxu0 %v1974
        %2297 = vmatpush2.bf16.msra.mxu0 %v1973
        %2298 = vmatprep.subr.bf16.mxu0 %v1969
        %2299 = vmatpush2.bf16.msra.mxu0 %v1968
        %2300 = vmatprep.subr.bf16.mxu0 %v1964
        %2301 = vmatpush2.bf16.msra.mxu0 %v1963
        %2302 = vmatprep.subr.bf16.mxu0 %v1959
        %2303 = vmatpush2.bf16.msra.mxu0 %v1958
        %2304 = vmatprep.subr.bf16.mxu0 %v1954
        %2305 = vmatpush2.bf16.msra.mxu0 %v1953
        %2306 = vmatprep.mubr.bf16.mxu0 %v924
        %2307 = vmatmul.mubr.bf16.gmra.mxu0 %v923
        %v2308 = vpop.f32.mrf.mxu0
        %v2309 = vadd.f32 %v2268, %v2308
        %v2310 = vpop.f32.mrf.mxu0
        %v2311 = vadd.f32 %v2270, %v2310
        %v2312 = vpop.f32.mrf.mxu0
        %v2313 = vpop.f32.mrf.mxu0
        %2314 = vdwg.mxu0
        %2315 = vmatprep.subr.bf16.mxu0 %v2029
        %2316 = vmatpush1.bf16.msra.mxu0 %v2028
        %2317 = vmatprep.subr.bf16.mxu0 %v2024
        %2318 = vmatpush1.bf16.msra.mxu0 %v2023
        %2319 = vmatprep.subr.bf16.mxu0 %v2019
        %2320 = vmatpush1.bf16.msra.mxu0 %v2018
        %2321 = vmatprep.subr.bf16.mxu0 %v2014
        %2322 = vmatpush1.bf16.msra.mxu0 %v2013
        %2323 = vmatprep.subr.bf16.mxu0 %v2009
        %2324 = vmatpush1.bf16.msra.mxu0 %v2008
        %2325 = vmatprep.subr.bf16.mxu0 %v2004
        %2326 = vmatpush1.bf16.msra.mxu0 %v2003
        %2327 = vmatprep.subr.bf16.mxu0 %v1999
        %2328 = vmatpush1.bf16.msra.mxu0 %v1998
        %2329 = vmatprep.subr.bf16.mxu0 %v1994
        %2330 = vmatpush1.bf16.msra.mxu0 %v1993
        %2331 = vmatprep.subr.bf16.mxu0 0
        %2332 = vmatpush2.bf16.msra.mxu0 0
        %2333 = vmatprep.subr.bf16.mxu0 0
        %2334 = vmatpush2.bf16.msra.mxu0 0
        %2335 = vmatprep.subr.bf16.mxu0 0
        %2336 = vmatpush2.bf16.msra.mxu0 0
        %2337 = vmatprep.subr.bf16.mxu0 0
        %2338 = vmatpush2.bf16.msra.mxu0 0
        %2339 = vmatprep.subr.bf16.mxu0 0
        %2340 = vmatpush2.bf16.msra.mxu0 0
        %2341 = vmatprep.subr.bf16.mxu0 0
        %2342 = vmatpush2.bf16.msra.mxu0 0
        %2343 = vmatprep.subr.bf16.mxu0 0
        %2344 = vmatpush2.bf16.msra.mxu0 0
        %2345 = vmatprep.subr.bf16.mxu0 0
        %2346 = vmatpush2.bf16.msra.mxu0 0
        %2347 = vmatprep.mubr.bf16.mxu0 0
        %2348 = vmatmul.mubr.bf16.gmra.mxu0 %v925
        %v2349 = vpop.f32.mrf.mxu0
        %v2350 = vadd.f32 %v2309, %v2349
        %v2351 = vpop.f32.mrf.mxu0
        %v2352 = vadd.f32 %v2311, %v2351
        %v2353 = vpop.f32.mrf.mxu0
        %v2354 = vpop.f32.mrf.mxu0
        %2355 = vdwg.mxu0
        %2356 = vmatprep.subr.bf16.mxu0 %v1871
        %2357 = vmatpush1.bf16.msra.mxu0 %v1870
        %2358 = vmatprep.subr.bf16.mxu0 %v1866
        %2359 = vmatpush1.bf16.msra.mxu0 %v1865
        %2360 = vmatprep.subr.bf16.mxu0 %v1861
        %2361 = vmatpush1.bf16.msra.mxu0 %v1860
        %2362 = vmatprep.subr.bf16.mxu0 %v1856
        %2363 = vmatpush1.bf16.msra.mxu0 %v1855
        %2364 = vmatprep.subr.bf16.mxu0 %v1851
        %2365 = vmatpush1.bf16.msra.mxu0 %v1850
        %2366 = vmatprep.subr.bf16.mxu0 %v1846
        %2367 = vmatpush1.bf16.msra.mxu0 %v1845
        %2368 = vmatprep.subr.bf16.mxu0 %v1841
        %2369 = vmatpush1.bf16.msra.mxu0 %v1840
        %2370 = vmatprep.subr.bf16.mxu0 %v1836
        %2371 = vmatpush1.bf16.msra.mxu0 %v1835
        %2372 = vmatprep.subr.bf16.mxu0 %v1911
        %2373 = vmatpush2.bf16.msra.mxu0 %v1910
        %2374 = vmatprep.subr.bf16.mxu0 %v1906
        %2375 = vmatpush2.bf16.msra.mxu0 %v1905
        %2376 = vmatprep.subr.bf16.mxu0 %v1901
        %2377 = vmatpush2.bf16.msra.mxu0 %v1900
        %2378 = vmatprep.subr.bf16.mxu0 %v1896
        %2379 = vmatpush2.bf16.msra.mxu0 %v1895
        %2380 = vmatprep.subr.bf16.mxu0 %v1891
        %2381 = vmatpush2.bf16.msra.mxu0 %v1890
        %2382 = vmatprep.subr.bf16.mxu0 %v1886
        %2383 = vmatpush2.bf16.msra.mxu0 %v1885
        %2384 = vmatprep.subr.bf16.mxu0 %v1881
        %2385 = vmatpush2.bf16.msra.mxu0 %v1880
        %2386 = vmatprep.subr.bf16.mxu0 %v1876
        %2387 = vmatpush2.bf16.msra.mxu0 %v1875
        %2388 = vmatprep.mubr.bf16.mxu0 %v922
        %2389 = vmatmul.mubr.bf16.gmra.mxu0 %v921
        %v2390 = vpop.f32.mrf.mxu0
        %v2391 = vadd.f32 %v1179, %v2390
        %v2392 = vpop.f32.mrf.mxu0
        %v2393 = vadd.f32 %v1183, %v2392
        %v2394 = vpop.f32.mrf.mxu0
        %v2395 = vpop.f32.mrf.mxu0
        %2396 = vdwg.mxu0
        %2397 = vmatprep.subr.bf16.mxu0 %v1951
        %2398 = vmatpush1.bf16.msra.mxu0 %v1950
        %2399 = vmatprep.subr.bf16.mxu0 %v1946
        %2400 = vmatpush1.bf16.msra.mxu0 %v1945
        %2401 = vmatprep.subr.bf16.mxu0 %v1941
        %2402 = vmatpush1.bf16.msra.mxu0 %v1940
        %2403 = vmatprep.subr.bf16.mxu0 %v1936
        %2404 = vmatpush1.bf16.msra.mxu0 %v1935
        %2405 = vmatprep.subr.bf16.mxu0 %v1931
        %2406 = vmatpush1.bf16.msra.mxu0 %v1930
        %2407 = vmatprep.subr.bf16.mxu0 %v1926
        %2408 = vmatpush1.bf16.msra.mxu0 %v1925
        %2409 = vmatprep.subr.bf16.mxu0 %v1921
        %2410 = vmatpush1.bf16.msra.mxu0 %v1920
        %2411 = vmatprep.subr.bf16.mxu0 %v1916
        %2412 = vmatpush1.bf16.msra.mxu0 %v1915
        %2413 = vmatprep.subr.bf16.mxu0 %v1991
        %2414 = vmatpush2.bf16.msra.mxu0 %v1990
        %2415 = vmatprep.subr.bf16.mxu0 %v1986
        %2416 = vmatpush2.bf16.msra.mxu0 %v1985
        %2417 = vmatprep.subr.bf16.mxu0 %v1981
        %2418 = vmatpush2.bf16.msra.mxu0 %v1980
        %2419 = vmatprep.subr.bf16.mxu0 %v1976
        %2420 = vmatpush2.bf16.msra.mxu0 %v1975
        %2421 = vmatprep.subr.bf16.mxu0 %v1971
        %2422 = vmatpush2.bf16.msra.mxu0 %v1970
        %2423 = vmatprep.subr.bf16.mxu0 %v1966
        %2424 = vmatpush2.bf16.msra.mxu0 %v1965
        %2425 = vmatprep.subr.bf16.mxu0 %v1961
        %2426 = vmatpush2.bf16.msra.mxu0 %v1960
        %2427 = vmatprep.subr.bf16.mxu0 %v1956
        %2428 = vmatpush2.bf16.msra.mxu0 %v1955
        %2429 = vmatprep.mubr.bf16.mxu0 %v924
        %2430 = vmatmul.mubr.bf16.gmra.mxu0 %v923
        %v2431 = vpop.f32.mrf.mxu0
        %v2432 = vadd.f32 %v2391, %v2431
        %v2433 = vpop.f32.mrf.mxu0
        %v2434 = vadd.f32 %v2393, %v2433
        %v2435 = vpop.f32.mrf.mxu0
        %v2436 = vpop.f32.mrf.mxu0
        %2437 = vdwg.mxu0
        %2438 = vmatprep.subr.bf16.mxu0 %v2031
        %2439 = vmatpush1.bf16.msra.mxu0 %v2030
        %2440 = vmatprep.subr.bf16.mxu0 %v2026
        %2441 = vmatpush1.bf16.msra.mxu0 %v2025
        %2442 = vmatprep.subr.bf16.mxu0 %v2021
        %2443 = vmatpush1.bf16.msra.mxu0 %v2020
        %2444 = vmatprep.subr.bf16.mxu0 %v2016
        %2445 = vmatpush1.bf16.msra.mxu0 %v2015
        %2446 = vmatprep.subr.bf16.mxu0 %v2011
        %2447 = vmatpush1.bf16.msra.mxu0 %v2010
        %2448 = vmatprep.subr.bf16.mxu0 %v2006
        %2449 = vmatpush1.bf16.msra.mxu0 %v2005
        %2450 = vmatprep.subr.bf16.mxu0 %v2001
        %2451 = vmatpush1.bf16.msra.mxu0 %v2000
        %2452 = vmatprep.subr.bf16.mxu0 %v1996
        %2453 = vmatpush1.bf16.msra.mxu0 %v1995
        %2454 = vmatprep.subr.bf16.mxu0 0
        %2455 = vmatpush2.bf16.msra.mxu0 0
        %2456 = vmatprep.subr.bf16.mxu0 0
        %2457 = vmatpush2.bf16.msra.mxu0 0
        %2458 = vmatprep.subr.bf16.mxu0 0
        %2459 = vmatpush2.bf16.msra.mxu0 0
        %2460 = vmatprep.subr.bf16.mxu0 0
        %2461 = vmatpush2.bf16.msra.mxu0 0
        %2462 = vmatprep.subr.bf16.mxu0 0
        %2463 = vmatpush2.bf16.msra.mxu0 0
        %2464 = vmatprep.subr.bf16.mxu0 0
        %2465 = vmatpush2.bf16.msra.mxu0 0
        %2466 = vmatprep.subr.bf16.mxu0 0
        %2467 = vmatpush2.bf16.msra.mxu0 0
        %2468 = vmatprep.subr.bf16.mxu0 0
        %2469 = vmatpush2.bf16.msra.mxu0 0
        %2470 = vmatprep.mubr.bf16.mxu0 0
        %2471 = vmatmul.mubr.bf16.gmra.mxu0 %v925
        %v2472 = vpop.f32.mrf.mxu0
        %v2473 = vadd.f32 %v2432, %v2472
        %v2474 = vpop.f32.mrf.mxu0
        %v2475 = vadd.f32 %v2434, %v2474
        %v2476 = vpop.f32.mrf.mxu0
        %v2477 = vpop.f32.mrf.mxu0
        %2478 = vdwg.mxu0
        %2479 = vmatprep.subr.bf16.mxu0 0
        %2480 = vmatpush1.bf16.msra.mxu0 %v1872
        %2481 = vmatprep.subr.bf16.mxu0 0
        %2482 = vmatpush1.bf16.msra.mxu0 %v1867
        %2483 = vmatprep.subr.bf16.mxu0 0
        %2484 = vmatpush1.bf16.msra.mxu0 %v1862
        %2485 = vmatprep.subr.bf16.mxu0 0
        %2486 = vmatpush1.bf16.msra.mxu0 %v1857
        %2487 = vmatprep.subr.bf16.mxu0 0
        %2488 = vmatpush1.bf16.msra.mxu0 %v1852
        %2489 = vmatprep.subr.bf16.mxu0 0
        %2490 = vmatpush1.bf16.msra.mxu0 %v1847
        %2491 = vmatprep.subr.bf16.mxu0 0
        %2492 = vmatpush1.bf16.msra.mxu0 %v1842
        %2493 = vmatprep.subr.bf16.mxu0 0
        %2494 = vmatpush1.bf16.msra.mxu0 %v1837
        %2495 = vmatprep.subr.bf16.mxu0 0
        %2496 = vmatpush2.bf16.msra.mxu0 %v1912
        %2497 = vmatprep.subr.bf16.mxu0 0
        %2498 = vmatpush2.bf16.msra.mxu0 %v1907
        %2499 = vmatprep.subr.bf16.mxu0 0
        %2500 = vmatpush2.bf16.msra.mxu0 %v1902
        %2501 = vmatprep.subr.bf16.mxu0 0
        %2502 = vmatpush2.bf16.msra.mxu0 %v1897
        %2503 = vmatprep.subr.bf16.mxu0 0
        %2504 = vmatpush2.bf16.msra.mxu0 %v1892
        %2505 = vmatprep.subr.bf16.mxu0 0
        %2506 = vmatpush2.bf16.msra.mxu0 %v1887
        %2507 = vmatprep.subr.bf16.mxu0 0
        %2508 = vmatpush2.bf16.msra.mxu0 %v1882
        %2509 = vmatprep.subr.bf16.mxu0 0
        %2510 = vmatpush2.bf16.msra.mxu0 %v1877
        %2511 = vmatprep.mubr.bf16.mxu0 %v922
        %2512 = vmatmul.mubr.bf16.gmra.mxu0 %v921
        %v2513 = vpop.f32.mrf.mxu0
        %v2514 = vadd.f32 %v1187, %v2513
        %v2515 = vpop.f32.mrf.mxu0
        %v2516 = vpop.f32.mrf.mxu0
        %v2517 = vpop.f32.mrf.mxu0
        %2518 = vdwg.mxu0
        %2519 = vmatprep.subr.bf16.mxu0 0
        %2520 = vmatpush1.bf16.msra.mxu0 %v1952
        %2521 = vmatprep.subr.bf16.mxu0 0
        %2522 = vmatpush1.bf16.msra.mxu0 %v1947
        %2523 = vmatprep.subr.bf16.mxu0 0
        %2524 = vmatpush1.bf16.msra.mxu0 %v1942
        %2525 = vmatprep.subr.bf16.mxu0 0
        %2526 = vmatpush1.bf16.msra.mxu0 %v1937
        %2527 = vmatprep.subr.bf16.mxu0 0
        %2528 = vmatpush1.bf16.msra.mxu0 %v1932
        %2529 = vmatprep.subr.bf16.mxu0 0
        %2530 = vmatpush1.bf16.msra.mxu0 %v1927
        %2531 = vmatprep.subr.bf16.mxu0 0
        %2532 = vmatpush1.bf16.msra.mxu0 %v1922
        %2533 = vmatprep.subr.bf16.mxu0 0
        %2534 = vmatpush1.bf16.msra.mxu0 %v1917
        %2535 = vmatprep.subr.bf16.mxu0 0
        %2536 = vmatpush2.bf16.msra.mxu0 %v1992
        %2537 = vmatprep.subr.bf16.mxu0 0
        %2538 = vmatpush2.bf16.msra.mxu0 %v1987
        %2539 = vmatprep.subr.bf16.mxu0 0
        %2540 = vmatpush2.bf16.msra.mxu0 %v1982
        %2541 = vmatprep.subr.bf16.mxu0 0
        %2542 = vmatpush2.bf16.msra.mxu0 %v1977
        %2543 = vmatprep.subr.bf16.mxu0 0
        %2544 = vmatpush2.bf16.msra.mxu0 %v1972
        %2545 = vmatprep.subr.bf16.mxu0 0
        %2546 = vmatpush2.bf16.msra.mxu0 %v1967
        %2547 = vmatprep.subr.bf16.mxu0 0
        %2548 = vmatpush2.bf16.msra.mxu0 %v1962
        %2549 = vmatprep.subr.bf16.mxu0 0
        %2550 = vmatpush2.bf16.msra.mxu0 %v1957
        %2551 = vmatprep.mubr.bf16.mxu0 %v924
        %2552 = vmatmul.mubr.bf16.gmra.mxu0 %v923
        %v2553 = vpop.f32.mrf.mxu0
        %v2554 = vadd.f32 %v2514, %v2553
        %v2555 = vpop.f32.mrf.mxu0
        %v2556 = vpop.f32.mrf.mxu0
        %v2557 = vpop.f32.mrf.mxu0
        %2558 = vdwg.mxu0
        %2559 = vmatprep.subr.bf16.mxu0 0
        %2560 = vmatpush1.bf16.msra.mxu0 %v2032
        %2561 = vmatprep.subr.bf16.mxu0 0
        %2562 = vmatpush1.bf16.msra.mxu0 %v2027
        %2563 = vmatprep.subr.bf16.mxu0 0
        %2564 = vmatpush1.bf16.msra.mxu0 %v2022
        %2565 = vmatprep.subr.bf16.mxu0 0
        %2566 = vmatpush1.bf16.msra.mxu0 %v2017
        %2567 = vmatprep.subr.bf16.mxu0 0
        %2568 = vmatpush1.bf16.msra.mxu0 %v2012
        %2569 = vmatprep.subr.bf16.mxu0 0
        %2570 = vmatpush1.bf16.msra.mxu0 %v2007
        %2571 = vmatprep.subr.bf16.mxu0 0
        %2572 = vmatpush1.bf16.msra.mxu0 %v2002
        %2573 = vmatprep.subr.bf16.mxu0 0
        %2574 = vmatpush1.bf16.msra.mxu0 %v1997
        %2575 = vmatprep.subr.bf16.mxu0 0
        %2576 = vmatpush2.bf16.msra.mxu0 0
        %2577 = vmatprep.subr.bf16.mxu0 0
        %2578 = vmatpush2.bf16.msra.mxu0 0
        %2579 = vmatprep.subr.bf16.mxu0 0
        %2580 = vmatpush2.bf16.msra.mxu0 0
        %2581 = vmatprep.subr.bf16.mxu0 0
        %2582 = vmatpush2.bf16.msra.mxu0 0
        %2583 = vmatprep.subr.bf16.mxu0 0
        %2584 = vmatpush2.bf16.msra.mxu0 0
        %2585 = vmatprep.subr.bf16.mxu0 0
        %2586 = vmatpush2.bf16.msra.mxu0 0
        %2587 = vmatprep.subr.bf16.mxu0 0
        %2588 = vmatpush2.bf16.msra.mxu0 0
        %2589 = vmatprep.subr.bf16.mxu0 0
        %2590 = vmatpush2.bf16.msra.mxu0 0
        %2591 = vmatprep.mubr.bf16.mxu0 0
        %2592 = vmatmul.mubr.bf16.gmra.mxu0 %v925
        %v2593 = vpop.f32.mrf.mxu0
        %v2594 = vadd.f32 %v2554, %v2593
        %v2595 = vpop.f32.mrf.mxu0
        %v2596 = vpop.f32.mrf.mxu0
        %v2597 = vpop.f32.mrf.mxu0
        %2598 = vdwg.mxu0
        %v2599 = vtanh.pop %v2350
        %v2600 = vtanh.pop %v2352
        %v2601 = vtanh.pop %v2473
        %v2602 = vtanh.pop %v2475
        %v2603 = vtanh.pop %v2594
        %v2604 = vpack.c.bf16 %v2599, %v2599
        %v2605 = vpack.c.bf16 %v2600, %v2600
        %v2606 = vpack.c.bf16 %v2601, %v2601
        %v2607 = vpack.c.bf16 %v2602, %v2602
        %v2608 = vpack.c.bf16 %v2603, %v2603
        %v2609 = vld [vmem:[#allocation6] sm:$0xff]
        %v2610 = vld [vmem:[#allocation6 + $0x8] sm:$0xff]
        %v2611 = vld [vmem:[#allocation6 + $0x10] sm:$0xf]
        %v2612 = vld [vmem:[#allocation6 + $0x14] sm:$0xff]
        %v2613 = vld [vmem:[#allocation6 + $0x1c] sm:$0xff]
        %v2614 = vld [vmem:[#allocation6 + $0x24] sm:$0xf]
        %v2615 = vld [vmem:[#allocation6 + $0x28] sm:$0xff]
        %v2616 = vld [vmem:[#allocation6 + $0x30] sm:$0xff]
        %v2617 = vld [vmem:[#allocation6 + $0x38] sm:$0xf]
        %v2618 = vld [vmem:[#allocation6 + $0x3c] sm:$0xff]
        %v2619 = vld [vmem:[#allocation6 + $0x44] sm:$0xff]
        %v2620 = vld [vmem:[#allocation6 + $0x4c] sm:$0xf]
        %v2621 = vld [vmem:[#allocation6 + $0x50] sm:$0xff]
        %v2622 = vld [vmem:[#allocation6 + $0x58] sm:$0xff]
        %v2623 = vld [vmem:[#allocation6 + $0x60] sm:$0xf]
        %v2624 = vld [vmem:[#allocation6 + $0x64] sm:$0xff]
        %v2625 = vld [vmem:[#allocation6 + $0x6c] sm:$0xff]
        %v2626 = vld [vmem:[#allocation6 + $0x74] sm:$0xf]
        %v2627 = vld [vmem:[#allocation6 + $0x78] sm:$0xff]
        %v2628 = vld [vmem:[#allocation6 + $0x80] sm:$0xff]
        %v2629 = vld [vmem:[#allocation6 + $0x88] sm:$0xf]
        %v2630 = vld [vmem:[#allocation6 + $0x8c] sm:$0xff]
        %v2631 = vld [vmem:[#allocation6 + $0x94] sm:$0xff]
        %v2632 = vld [vmem:[#allocation6 + $0x9c] sm:$0xf]
        %v2633 = vld [vmem:[#allocation6 + $0xa0] sm:$0xff]
        %v2634 = vld [vmem:[#allocation6 + $0xa8] sm:$0xff]
        %v2635 = vld [vmem:[#allocation6 + $0xb0] sm:$0xf]
        %v2636 = vld [vmem:[#allocation6 + $0xb4] sm:$0xff]
        %v2637 = vld [vmem:[#allocation6 + $0xbc] sm:$0xff]
        %v2638 = vld [vmem:[#allocation6 + $0xc4] sm:$0xf]
        %v2639 = vld [vmem:[#allocation6 + $0xc8] sm:$0xff]
        %v2640 = vld [vmem:[#allocation6 + $0xd0] sm:$0xff]
        %v2641 = vld [vmem:[#allocation6 + $0xd8] sm:$0xf]
        %v2642 = vld [vmem:[#allocation6 + $0xdc] sm:$0xff]
        %v2643 = vld [vmem:[#allocation6 + $0xe4] sm:$0xff]
        %v2644 = vld [vmem:[#allocation6 + $0xec] sm:$0xf]
        %v2645 = vld [vmem:[#allocation6 + $0xf0] sm:$0xff]
        %v2646 = vld [vmem:[#allocation6 + $0xf8] sm:$0xff]
        %v2647 = vld [vmem:[#allocation6 + $0x100] sm:$0xf]
        %v2648 = vld [vmem:[#allocation6 + $0x104] sm:$0xff]
        %v2649 = vld [vmem:[#allocation6 + $0x10c] sm:$0xff]
        %v2650 = vld [vmem:[#allocation6 + $0x114] sm:$0xf]
        %v2651 = vld [vmem:[#allocation6 + $0x118] sm:$0xff]
        %v2652 = vld [vmem:[#allocation6 + $0x120] sm:$0xff]
        %v2653 = vld [vmem:[#allocation6 + $0x128] sm:$0xf]
        %v2654 = vld [vmem:[#allocation6 + $0x12c] sm:$0xff]
        %v2655 = vld [vmem:[#allocation6 + $0x134] sm:$0xff]
        %v2656 = vld [vmem:[#allocation6 + $0x13c] sm:$0xf]
        %v2657 = vld [vmem:[#allocation6 + $0x140] sm:$0xff]
        %v2658 = vld [vmem:[#allocation6 + $0x148] sm:$0xff]
        %v2659 = vld [vmem:[#allocation6 + $0x150] sm:$0xf]
        %v2660 = vld [vmem:[#allocation6 + $0x154] sm:$0xff]
        %v2661 = vld [vmem:[#allocation6 + $0x15c] sm:$0xff]
        %v2662 = vld [vmem:[#allocation6 + $0x164] sm:$0xf]
        %v2663 = vld [vmem:[#allocation6 + $0x168] sm:$0xff]
        %v2664 = vld [vmem:[#allocation6 + $0x170] sm:$0xff]
        %v2665 = vld [vmem:[#allocation6 + $0x178] sm:$0xf]
        %v2666 = vld [vmem:[#allocation6 + $0x17c] sm:$0xff]
        %v2667 = vld [vmem:[#allocation6 + $0x184] sm:$0xff]
        %v2668 = vld [vmem:[#allocation6 + $0x18c] sm:$0xf]
        %v2669 = vld [vmem:[#allocation6 + $0x190] sm:$0xff]
        %v2670 = vld [vmem:[#allocation6 + $0x198] sm:$0xff]
        %v2671 = vld [vmem:[#allocation6 + $0x1a0] sm:$0xf]
        %v2672 = vld [vmem:[#allocation6 + $0x1a4] sm:$0xff]
        %v2673 = vld [vmem:[#allocation6 + $0x1ac] sm:$0xff]
        %v2674 = vld [vmem:[#allocation6 + $0x1b4] sm:$0xf]
        %v2675 = vld [vmem:[#allocation6 + $0x1b8] sm:$0xff]
        %v2676 = vld [vmem:[#allocation6 + $0x1c0] sm:$0xff]
        %v2677 = vld [vmem:[#allocation6 + $0x1c8] sm:$0xf]
        %v2678 = vld [vmem:[#allocation6 + $0x1cc] sm:$0xff]
        %v2679 = vld [vmem:[#allocation6 + $0x1d4] sm:$0xff]
        %v2680 = vld [vmem:[#allocation6 + $0x1dc] sm:$0xf]
        %v2681 = vld [vmem:[#allocation6 + $0x1e0] sm:$0xff]
        %v2682 = vld [vmem:[#allocation6 + $0x1e8] sm:$0xff]
        %v2683 = vld [vmem:[#allocation6 + $0x1f0] sm:$0xf]
        %v2684 = vld [vmem:[#allocation6 + $0x1f4] sm:$0xff]
        %v2685 = vld [vmem:[#allocation6 + $0x1fc] sm:$0xff]
        %v2686 = vld [vmem:[#allocation6 + $0x204] sm:$0xf]
        %v2687 = vld [vmem:[#allocation6 + $0x208] sm:$0xff]
        %v2688 = vld [vmem:[#allocation6 + $0x210] sm:$0xff]
        %v2689 = vld [vmem:[#allocation6 + $0x218] sm:$0xf]
        %v2690 = vld [vmem:[#allocation6 + $0x21c] sm:$0xff]
        %v2691 = vld [vmem:[#allocation6 + $0x224] sm:$0xff]
        %v2692 = vld [vmem:[#allocation6 + $0x22c] sm:$0xf]
        %v2693 = vld [vmem:[#allocation6 + $0x230] sm:$0xff]
        %v2694 = vld [vmem:[#allocation6 + $0x238] sm:$0xff]
        %v2695 = vld [vmem:[#allocation6 + $0x240] sm:$0xf]
        %v2696 = vld [vmem:[#allocation6 + $0x244] sm:$0xff]
        %v2697 = vld [vmem:[#allocation6 + $0x24c] sm:$0xff]
        %v2698 = vld [vmem:[#allocation6 + $0x254] sm:$0xf]
        %v2699 = vld [vmem:[#allocation6 + $0x258] sm:$0xff]
        %v2700 = vld [vmem:[#allocation6 + $0x260] sm:$0xff]
        %v2701 = vld [vmem:[#allocation6 + $0x268] sm:$0xf]
        %v2702 = vld [vmem:[#allocation6 + $0x26c] sm:$0xff]
        %v2703 = vld [vmem:[#allocation6 + $0x274] sm:$0xff]
        %v2704 = vld [vmem:[#allocation6 + $0x27c] sm:$0xf]
        %v2705 = vld [vmem:[#allocation6 + $0x280] sm:$0xff]
        %v2706 = vld [vmem:[#allocation6 + $0x288] sm:$0xff]
        %v2707 = vld [vmem:[#allocation6 + $0x290] sm:$0xf]
        %v2708 = vld [vmem:[#allocation6 + $0x294] sm:$0xff]
        %v2709 = vld [vmem:[#allocation6 + $0x29c] sm:$0xff]
        %v2710 = vld [vmem:[#allocation6 + $0x2a4] sm:$0xf]
        %v2711 = vld [vmem:[#allocation6 + $0x2a8] sm:$0xff]
        %v2712 = vld [vmem:[#allocation6 + $0x2b0] sm:$0xff]
        %v2713 = vld [vmem:[#allocation6 + $0x2b8] sm:$0xf]
        %v2714 = vld [vmem:[#allocation6 + $0x2bc] sm:$0xff]
        %v2715 = vld [vmem:[#allocation6 + $0x2c4] sm:$0xff]
        %v2716 = vld [vmem:[#allocation6 + $0x2cc] sm:$0xf]
        %v2717 = vld [vmem:[#allocation6 + $0x2d0] sm:$0xff]
        %v2718 = vld [vmem:[#allocation6 + $0x2d8] sm:$0xff]
        %v2719 = vld [vmem:[#allocation6 + $0x2e0] sm:$0xf]
        %v2720 = vld [vmem:[#allocation6 + $0x2e4] sm:$0xff]
        %v2721 = vld [vmem:[#allocation6 + $0x2ec] sm:$0xff]
        %v2722 = vld [vmem:[#allocation6 + $0x2f4] sm:$0xf]
        %v2723 = vld [vmem:[#allocation6 + $0x2f8] sm:$0xff]
        %v2724 = vld [vmem:[#allocation6 + $0x300] sm:$0xff]
        %v2725 = vld [vmem:[#allocation6 + $0x308] sm:$0xf]
        %v2726 = vld [vmem:[#allocation6 + $0x30c] sm:$0xff]
        %v2727 = vld [vmem:[#allocation6 + $0x314] sm:$0xff]
        %v2728 = vld [vmem:[#allocation6 + $0x31c] sm:$0xf]
        %v2729 = vld [vmem:[#allocation6 + $0x320] sm:$0xff]
        %v2730 = vld [vmem:[#allocation6 + $0x328] sm:$0xff]
        %v2731 = vld [vmem:[#allocation6 + $0x330] sm:$0xf]
        %v2732 = vld [vmem:[#allocation6 + $0x334] sm:$0xff]
        %v2733 = vld [vmem:[#allocation6 + $0x33c] sm:$0xff]
        %v2734 = vld [vmem:[#allocation6 + $0x344] sm:$0xf]
        %v2735 = vld [vmem:[#allocation6 + $0x348] sm:$0xff]
        %v2736 = vld [vmem:[#allocation6 + $0x350] sm:$0xff]
        %v2737 = vld [vmem:[#allocation6 + $0x358] sm:$0xf]
        %v2738 = vld [vmem:[#allocation6 + $0x35c] sm:$0xff]
        %v2739 = vld [vmem:[#allocation6 + $0x364] sm:$0xff]
        %v2740 = vld [vmem:[#allocation6 + $0x36c] sm:$0xf]
        %v2741 = vld [vmem:[#allocation6 + $0x370] sm:$0xff]
        %v2742 = vld [vmem:[#allocation6 + $0x378] sm:$0xff]
        %v2743 = vld [vmem:[#allocation6 + $0x380] sm:$0xf]
        %v2744 = vld [vmem:[#allocation6 + $0x384] sm:$0xff]
        %v2745 = vld [vmem:[#allocation6 + $0x38c] sm:$0xff]
        %v2746 = vld [vmem:[#allocation6 + $0x394] sm:$0xf]
        %v2747 = vld [vmem:[#allocation6 + $0x398] sm:$0xff]
        %v2748 = vld [vmem:[#allocation6 + $0x3a0] sm:$0xff]
        %v2749 = vld [vmem:[#allocation6 + $0x3a8] sm:$0xf]
        %v2750 = vld [vmem:[#allocation6 + $0x3ac] sm:$0xff]
        %v2751 = vld [vmem:[#allocation6 + $0x3b4] sm:$0xff]
        %v2752 = vld [vmem:[#allocation6 + $0x3bc] sm:$0xf]
        %v2753 = vld [vmem:[#allocation6 + $0x3c0] sm:$0xff]
        %v2754 = vld [vmem:[#allocation6 + $0x3c8] sm:$0xff]
        %v2755 = vld [vmem:[#allocation6 + $0x3d0] sm:$0xf]
        %v2756 = vld [vmem:[#allocation6 + $0x3d4] sm:$0xff]
        %v2757 = vld [vmem:[#allocation6 + $0x3dc] sm:$0xff]
        %v2758 = vld [vmem:[#allocation6 + $0x3e4] sm:$0xf]
        %v2759 = vld [vmem:[#allocation6 + $0x3e8] sm:$0xff]
        %v2760 = vld [vmem:[#allocation6 + $0x3f0] sm:$0xff]
        %v2761 = vld [vmem:[#allocation6 + $0x3f8] sm:$0xf]
        %v2762 = vld [vmem:[#allocation6 + $0x3fc] sm:$0xff]
        %v2763 = vld [vmem:[#allocation6 + $0x404] sm:$0xff]
        %v2764 = vld [vmem:[#allocation6 + $0x40c] sm:$0xf]
        %v2765 = vld [vmem:[#allocation6 + $0x410] sm:$0xff]
        %v2766 = vld [vmem:[#allocation6 + $0x418] sm:$0xff]
        %v2767 = vld [vmem:[#allocation6 + $0x420] sm:$0xf]
        %v2768 = vld [vmem:[#allocation6 + $0x424] sm:$0xff]
        %v2769 = vld [vmem:[#allocation6 + $0x42c] sm:$0xff]
        %v2770 = vld [vmem:[#allocation6 + $0x434] sm:$0xf]
        %v2771 = vld [vmem:[#allocation6 + $0x438] sm:$0xff]
        %v2772 = vld [vmem:[#allocation6 + $0x440] sm:$0xff]
        %v2773 = vld [vmem:[#allocation6 + $0x448] sm:$0xf]
        %v2774 = vld [vmem:[#allocation6 + $0x44c] sm:$0xff]
        %v2775 = vld [vmem:[#allocation6 + $0x454] sm:$0xff]
        %v2776 = vld [vmem:[#allocation6 + $0x45c] sm:$0xf]
        %v2777 = vld [vmem:[#allocation6 + $0x460] sm:$0xff]
        %v2778 = vld [vmem:[#allocation6 + $0x468] sm:$0xff]
        %v2779 = vld [vmem:[#allocation6 + $0x470] sm:$0xf]
        %v2780 = vld [vmem:[#allocation6 + $0x474] sm:$0xff]
        %v2781 = vld [vmem:[#allocation6 + $0x47c] sm:$0xff]
        %v2782 = vld [vmem:[#allocation6 + $0x484] sm:$0xf]
        %v2783 = vld [vmem:[#allocation6 + $0x488] sm:$0xff]
        %v2784 = vld [vmem:[#allocation6 + $0x490] sm:$0xff]
        %v2785 = vld [vmem:[#allocation6 + $0x498] sm:$0xf]
        %v2786 = vld [vmem:[#allocation6 + $0x49c] sm:$0xff]
        %v2787 = vld [vmem:[#allocation6 + $0x4a4] sm:$0xff]
        %v2788 = vld [vmem:[#allocation6 + $0x4ac] sm:$0xf]
        %v2789 = vld [vmem:[#allocation6 + $0x4b0] sm:$0xff]
        %v2790 = vld [vmem:[#allocation6 + $0x4b8] sm:$0xff]
        %v2791 = vld [vmem:[#allocation6 + $0x4c0] sm:$0xf]
        %v2792 = vld [vmem:[#allocation6 + $0x4c4] sm:$0xff]
        %v2793 = vld [vmem:[#allocation6 + $0x4cc] sm:$0xff]
        %v2794 = vld [vmem:[#allocation6 + $0x4d4] sm:$0xf]
        %v2795 = vld [vmem:[#allocation6 + $0x4d8] sm:$0xff]
        %v2796 = vld [vmem:[#allocation6 + $0x4e0] sm:$0xff]
        %v2797 = vld [vmem:[#allocation6 + $0x4e8] sm:$0xf]
        %v2798 = vld [vmem:[#allocation6 + $0x4ec] sm:$0xff]
        %v2799 = vld [vmem:[#allocation6 + $0x4f4] sm:$0xff]
        %v2800 = vld [vmem:[#allocation6 + $0x4fc] sm:$0xf]
        %v2801 = vld [vmem:[#allocation6 + $0x500] sm:$0xff]
        %v2802 = vld [vmem:[#allocation6 + $0x508] sm:$0xff]
        %v2803 = vld [vmem:[#allocation6 + $0x510] sm:$0xf]
        %v2804 = vld [vmem:[#allocation6 + $0x514] sm:$0xff]
        %v2805 = vld [vmem:[#allocation6 + $0x51c] sm:$0xff]
        %v2806 = vld [vmem:[#allocation6 + $0x524] sm:$0xf]
        %v2807 = vld [vmem:[#allocation6 + $0x528] sm:$0xff]
        %v2808 = vld [vmem:[#allocation6 + $0x530] sm:$0xff]
        %v2809 = vld [vmem:[#allocation6 + $0x538] sm:$0xf]
        %v2810 = vld [vmem:[#allocation6 + $0x53c] sm:$0xff]
        %v2811 = vld [vmem:[#allocation6 + $0x544] sm:$0xff]
        %v2812 = vld [vmem:[#allocation6 + $0x54c] sm:$0xf]
        %v2813 = vld [vmem:[#allocation6 + $0x550] sm:$0xff]
        %v2814 = vld [vmem:[#allocation6 + $0x558] sm:$0xff]
        %v2815 = vld [vmem:[#allocation6 + $0x560] sm:$0xf]
        %v2816 = vld [vmem:[#allocation6 + $0x564] sm:$0xff]
        %v2817 = vld [vmem:[#allocation6 + $0x56c] sm:$0xff]
        %v2818 = vld [vmem:[#allocation6 + $0x574] sm:$0xf]
        %v2819 = vld [vmem:[#allocation6 + $0x578] sm:$0xff]
        %v2820 = vld [vmem:[#allocation6 + $0x580] sm:$0xff]
        %v2821 = vld [vmem:[#allocation6 + $0x588] sm:$0xf]
        %v2822 = vld [vmem:[#allocation6 + $0x58c] sm:$0xff]
        %v2823 = vld [vmem:[#allocation6 + $0x594] sm:$0xff]
        %v2824 = vld [vmem:[#allocation6 + $0x59c] sm:$0xf]
        %v2825 = vld [vmem:[#allocation6 + $0x5a0] sm:$0xff]
        %v2826 = vld [vmem:[#allocation6 + $0x5a8] sm:$0xff]
        %v2827 = vld [vmem:[#allocation6 + $0x5b0] sm:$0xf]
        %v2828 = vld [vmem:[#allocation6 + $0x5b4] sm:$0xff]
        %v2829 = vld [vmem:[#allocation6 + $0x5bc] sm:$0xff]
        %v2830 = vld [vmem:[#allocation6 + $0x5c4] sm:$0xf]
        %v2831 = vld [vmem:[#allocation6 + $0x5c8] sm:$0xff]
        %v2832 = vld [vmem:[#allocation6 + $0x5d0] sm:$0xff]
        %v2833 = vld [vmem:[#allocation6 + $0x5d8] sm:$0xf]
        %v2834 = vld [vmem:[#allocation6 + $0x5dc] sm:$0xff]
        %v2835 = vld [vmem:[#allocation6 + $0x5e4] sm:$0xff]
        %v2836 = vld [vmem:[#allocation6 + $0x5ec] sm:$0xf]
        %v2837 = vld [vmem:[#allocation6 + $0x5f0] sm:$0xff]
        %v2838 = vld [vmem:[#allocation6 + $0x5f8] sm:$0xff]
        %v2839 = vld [vmem:[#allocation6 + $0x600] sm:$0xf]
        %v2840 = vld [vmem:[#allocation6 + $0x604] sm:$0xff]
        %v2841 = vld [vmem:[#allocation6 + $0x60c] sm:$0xff]
        %v2842 = vld [vmem:[#allocation6 + $0x614] sm:$0xf]
        %v2843 = vld [vmem:[#allocation6 + $0x618] sm:$0xff]
        %v2844 = vld [vmem:[#allocation6 + $0x620] sm:$0xff]
        %v2845 = vld [vmem:[#allocation6 + $0x628] sm:$0xf]
        %v2846 = vld [vmem:[#allocation6 + $0x62c] sm:$0xff]
        %v2847 = vld [vmem:[#allocation6 + $0x634] sm:$0xff]
        %v2848 = vld [vmem:[#allocation6 + $0x63c] sm:$0xf]
        %v2849 = vld [vmem:[%s6] sm:$0x1f]
        %v2851 = vlaneseq
        %v2852 = vshrl.u32 %v2851, 7
        %v2853 = vsub.s32 0, %v2852
        %v2854 = vrot.slane %v2849, %v2853
        %v2855 = vlaneseq
        %v2856 = vshrl.u32 %v2855, 7
        %v2857 = vsub.s32 1, %v2856
        %v2858 = vrot.slane %v2849, %v2857
        %v2859 = vlaneseq
        %v2860 = vshrl.u32 %v2859, 7
        %v2861 = vsub.s32 2, %v2860
        %v2862 = vrot.slane %v2849, %v2861
        %v2863 = vlaneseq
        %v2864 = vshrl.u32 %v2863, 7
        %v2865 = vsub.s32 3, %v2864
        %v2866 = vrot.slane %v2849, %v2865
        %v2867 = vlaneseq
        %v2868 = vshrl.u32 %v2867, 7
        %v2869 = vsub.s32 4, %v2868
        %v2870 = vrot.slane %v2849, %v2869
        %v3116 = vunpack.c.l.b16 %v2609
        %v3117 = vunpack.c.h.b16 %v2609
        %v3118 = vunpack.c.l.b16 %v2610
        %v3119 = vunpack.c.h.b16 %v2610
        %v3120 = vunpack.c.l.b16 %v2611
        %v3121 = vunpack.c.l.b16 %v2612
        %v3122 = vunpack.c.h.b16 %v2612
        %v3123 = vunpack.c.l.b16 %v2613
        %v3124 = vunpack.c.h.b16 %v2613
        %v3125 = vunpack.c.l.b16 %v2614
        %v3126 = vunpack.c.l.b16 %v2615
        %v3127 = vunpack.c.h.b16 %v2615
        %v3128 = vunpack.c.l.b16 %v2616
        %v3129 = vunpack.c.h.b16 %v2616
        %v3130 = vunpack.c.l.b16 %v2617
        %v3131 = vunpack.c.l.b16 %v2618
        %v3132 = vunpack.c.h.b16 %v2618
        %v3133 = vunpack.c.l.b16 %v2619
        %v3134 = vunpack.c.h.b16 %v2619
        %v3135 = vunpack.c.l.b16 %v2620
        %v3136 = vunpack.c.l.b16 %v2621
        %v3137 = vunpack.c.h.b16 %v2621
        %v3138 = vunpack.c.l.b16 %v2622
        %v3139 = vunpack.c.h.b16 %v2622
        %v3140 = vunpack.c.l.b16 %v2623
        %v3141 = vunpack.c.l.b16 %v2624
        %v3142 = vunpack.c.h.b16 %v2624
        %v3143 = vunpack.c.l.b16 %v2625
        %v3144 = vunpack.c.h.b16 %v2625
        %v3145 = vunpack.c.l.b16 %v2626
        %v3146 = vunpack.c.l.b16 %v2627
        %v3147 = vunpack.c.h.b16 %v2627
        %v3148 = vunpack.c.l.b16 %v2628
        %v3149 = vunpack.c.h.b16 %v2628
        %v3150 = vunpack.c.l.b16 %v2629
        %v3151 = vunpack.c.l.b16 %v2630
        %v3152 = vunpack.c.h.b16 %v2630
        %v3153 = vunpack.c.l.b16 %v2631
        %v3154 = vunpack.c.h.b16 %v2631
        %v3155 = vunpack.c.l.b16 %v2632
        %v3156 = vunpack.c.l.b16 %v2633
        %v3157 = vunpack.c.h.b16 %v2633
        %v3158 = vunpack.c.l.b16 %v2634
        %v3159 = vunpack.c.h.b16 %v2634
        %v3160 = vunpack.c.l.b16 %v2635
        %v3161 = vunpack.c.l.b16 %v2636
        %v3162 = vunpack.c.h.b16 %v2636
        %v3163 = vunpack.c.l.b16 %v2637
        %v3164 = vunpack.c.h.b16 %v2637
        %v3165 = vunpack.c.l.b16 %v2638
        %v3166 = vunpack.c.l.b16 %v2639
        %v3167 = vunpack.c.h.b16 %v2639
        %v3168 = vunpack.c.l.b16 %v2640
        %v3169 = vunpack.c.h.b16 %v2640
        %v3170 = vunpack.c.l.b16 %v2641
        %v3171 = vunpack.c.l.b16 %v2642
        %v3172 = vunpack.c.h.b16 %v2642
        %v3173 = vunpack.c.l.b16 %v2643
        %v3174 = vunpack.c.h.b16 %v2643
        %v3175 = vunpack.c.l.b16 %v2644
        %v3176 = vunpack.c.l.b16 %v2645
        %v3177 = vunpack.c.h.b16 %v2645
        %v3178 = vunpack.c.l.b16 %v2646
        %v3179 = vunpack.c.h.b16 %v2646
        %v3180 = vunpack.c.l.b16 %v2647
        %v3181 = vunpack.c.l.b16 %v2648
        %v3182 = vunpack.c.h.b16 %v2648
        %v3183 = vunpack.c.l.b16 %v2649
        %v3184 = vunpack.c.h.b16 %v2649
        %v3185 = vunpack.c.l.b16 %v2650
        %v3186 = vunpack.c.l.b16 %v2651
        %v3187 = vunpack.c.h.b16 %v2651
        %v3188 = vunpack.c.l.b16 %v2652
        %v3189 = vunpack.c.h.b16 %v2652
        %v3190 = vunpack.c.l.b16 %v2653
        %v3191 = vunpack.c.l.b16 %v2654
        %v3192 = vunpack.c.h.b16 %v2654
        %v3193 = vunpack.c.l.b16 %v2655
        %v3194 = vunpack.c.h.b16 %v2655
        %v3195 = vunpack.c.l.b16 %v2656
        %v3196 = vunpack.c.l.b16 %v2657
        %v3197 = vunpack.c.h.b16 %v2657
        %v3198 = vunpack.c.l.b16 %v2658
        %v3199 = vunpack.c.h.b16 %v2658
        %v3200 = vunpack.c.l.b16 %v2659
        %v3201 = vunpack.c.l.b16 %v2660
        %v3202 = vunpack.c.h.b16 %v2660
        %v3203 = vunpack.c.l.b16 %v2661
        %v3204 = vunpack.c.h.b16 %v2661
        %v3205 = vunpack.c.l.b16 %v2662
        %v3206 = vunpack.c.l.b16 %v2663
        %v3207 = vunpack.c.h.b16 %v2663
        %v3208 = vunpack.c.l.b16 %v2664
        %v3209 = vunpack.c.h.b16 %v2664
        %v3210 = vunpack.c.l.b16 %v2665
        %v3211 = vunpack.c.l.b16 %v2666
        %v3212 = vunpack.c.h.b16 %v2666
        %v3213 = vunpack.c.l.b16 %v2667
        %v3214 = vunpack.c.h.b16 %v2667
        %v3215 = vunpack.c.l.b16 %v2668
        %v3216 = vunpack.c.l.b16 %v2669
        %v3217 = vunpack.c.h.b16 %v2669
        %v3218 = vunpack.c.l.b16 %v2670
        %v3219 = vunpack.c.h.b16 %v2670
        %v3220 = vunpack.c.l.b16 %v2671
        %v3221 = vunpack.c.l.b16 %v2672
        %v3222 = vunpack.c.h.b16 %v2672
        %v3223 = vunpack.c.l.b16 %v2673
        %v3224 = vunpack.c.h.b16 %v2673
        %v3225 = vunpack.c.l.b16 %v2674
        %v3226 = vunpack.c.l.b16 %v2675
        %v3227 = vunpack.c.h.b16 %v2675
        %v3228 = vunpack.c.l.b16 %v2676
        %v3229 = vunpack.c.h.b16 %v2676
        %v3230 = vunpack.c.l.b16 %v2677
        %v3231 = vunpack.c.l.b16 %v2678
        %v3232 = vunpack.c.h.b16 %v2678
        %v3233 = vunpack.c.l.b16 %v2679
        %v3234 = vunpack.c.h.b16 %v2679
        %v3235 = vunpack.c.l.b16 %v2680
        %v3236 = vunpack.c.l.b16 %v2681
        %v3237 = vunpack.c.h.b16 %v2681
        %v3238 = vunpack.c.l.b16 %v2682
        %v3239 = vunpack.c.h.b16 %v2682
        %v3240 = vunpack.c.l.b16 %v2683
        %v3241 = vunpack.c.l.b16 %v2684
        %v3242 = vunpack.c.h.b16 %v2684
        %v3243 = vunpack.c.l.b16 %v2685
        %v3244 = vunpack.c.h.b16 %v2685
        %v3245 = vunpack.c.l.b16 %v2686
        %v3246 = vunpack.c.l.b16 %v2687
        %v3247 = vunpack.c.h.b16 %v2687
        %v3248 = vunpack.c.l.b16 %v2688
        %v3249 = vunpack.c.h.b16 %v2688
        %v3250 = vunpack.c.l.b16 %v2689
        %v3251 = vunpack.c.l.b16 %v2690
        %v3252 = vunpack.c.h.b16 %v2690
        %v3253 = vunpack.c.l.b16 %v2691
        %v3254 = vunpack.c.h.b16 %v2691
        %v3255 = vunpack.c.l.b16 %v2692
        %v3256 = vunpack.c.l.b16 %v2693
        %v3257 = vunpack.c.h.b16 %v2693
        %v3258 = vunpack.c.l.b16 %v2694
        %v3259 = vunpack.c.h.b16 %v2694
        %v3260 = vunpack.c.l.b16 %v2695
        %v3261 = vunpack.c.l.b16 %v2696
        %v3262 = vunpack.c.h.b16 %v2696
        %v3263 = vunpack.c.l.b16 %v2697
        %v3264 = vunpack.c.h.b16 %v2697
        %v3265 = vunpack.c.l.b16 %v2698
        %v3266 = vunpack.c.l.b16 %v2699
        %v3267 = vunpack.c.h.b16 %v2699
        %v3268 = vunpack.c.l.b16 %v2700
        %v3269 = vunpack.c.h.b16 %v2700
        %v3270 = vunpack.c.l.b16 %v2701
        %v3271 = vunpack.c.l.b16 %v2702
        %v3272 = vunpack.c.h.b16 %v2702
        %v3273 = vunpack.c.l.b16 %v2703
        %v3274 = vunpack.c.h.b16 %v2703
        %v3275 = vunpack.c.l.b16 %v2704
        %v3276 = vunpack.c.l.b16 %v2705
        %v3277 = vunpack.c.h.b16 %v2705
        %v3278 = vunpack.c.l.b16 %v2706
        %v3279 = vunpack.c.h.b16 %v2706
        %v3280 = vunpack.c.l.b16 %v2707
        %v3281 = vunpack.c.l.b16 %v2708
        %v3282 = vunpack.c.h.b16 %v2708
        %v3283 = vunpack.c.l.b16 %v2709
        %v3284 = vunpack.c.h.b16 %v2709
        %v3285 = vunpack.c.l.b16 %v2710
        %v3286 = vunpack.c.l.b16 %v2711
        %v3287 = vunpack.c.h.b16 %v2711
        %v3288 = vunpack.c.l.b16 %v2712
        %v3289 = vunpack.c.h.b16 %v2712
        %v3290 = vunpack.c.l.b16 %v2713
        %v3291 = vunpack.c.l.b16 %v2714
        %v3292 = vunpack.c.h.b16 %v2714
        %v3293 = vunpack.c.l.b16 %v2715
        %v3294 = vunpack.c.h.b16 %v2715
        %v3295 = vunpack.c.l.b16 %v2716
        %v3296 = vunpack.c.l.b16 %v2717
        %v3297 = vunpack.c.h.b16 %v2717
        %v3298 = vunpack.c.l.b16 %v2718
        %v3299 = vunpack.c.h.b16 %v2718
        %v3300 = vunpack.c.l.b16 %v2719
        %v3301 = vunpack.c.l.b16 %v2720
        %v3302 = vunpack.c.h.b16 %v2720
        %v3303 = vunpack.c.l.b16 %v2721
        %v3304 = vunpack.c.h.b16 %v2721
        %v3305 = vunpack.c.l.b16 %v2722
        %v3306 = vunpack.c.l.b16 %v2723
        %v3307 = vunpack.c.h.b16 %v2723
        %v3308 = vunpack.c.l.b16 %v2724
        %v3309 = vunpack.c.h.b16 %v2724
        %v3310 = vunpack.c.l.b16 %v2725
        %v3311 = vunpack.c.l.b16 %v2726
        %v3312 = vunpack.c.h.b16 %v2726
        %v3313 = vunpack.c.l.b16 %v2727
        %v3314 = vunpack.c.h.b16 %v2727
        %v3315 = vunpack.c.l.b16 %v2728
        %v3316 = vunpack.c.l.b16 %v2729
        %v3317 = vunpack.c.h.b16 %v2729
        %v3318 = vunpack.c.l.b16 %v2730
        %v3319 = vunpack.c.h.b16 %v2730
        %v3320 = vunpack.c.l.b16 %v2731
        %v3321 = vunpack.c.l.b16 %v2732
        %v3322 = vunpack.c.h.b16 %v2732
        %v3323 = vunpack.c.l.b16 %v2733
        %v3324 = vunpack.c.h.b16 %v2733
        %v3325 = vunpack.c.l.b16 %v2734
        %v3326 = vunpack.c.l.b16 %v2735
        %v3327 = vunpack.c.h.b16 %v2735
        %v3328 = vunpack.c.l.b16 %v2736
        %v3329 = vunpack.c.h.b16 %v2736
        %v3330 = vunpack.c.l.b16 %v2737
        %v3331 = vunpack.c.l.b16 %v2738
        %v3332 = vunpack.c.h.b16 %v2738
        %v3333 = vunpack.c.l.b16 %v2739
        %v3334 = vunpack.c.h.b16 %v2739
        %v3335 = vunpack.c.l.b16 %v2740
        %v3336 = vunpack.c.l.b16 %v2741
        %v3337 = vunpack.c.h.b16 %v2741
        %v3338 = vunpack.c.l.b16 %v2742
        %v3339 = vunpack.c.h.b16 %v2742
        %v3340 = vunpack.c.l.b16 %v2743
        %v3341 = vunpack.c.l.b16 %v2744
        %v3342 = vunpack.c.h.b16 %v2744
        %v3343 = vunpack.c.l.b16 %v2745
        %v3344 = vunpack.c.h.b16 %v2745
        %v3345 = vunpack.c.l.b16 %v2746
        %v3346 = vunpack.c.l.b16 %v2747
        %v3347 = vunpack.c.h.b16 %v2747
        %v3348 = vunpack.c.l.b16 %v2748
        %v3349 = vunpack.c.h.b16 %v2748
        %v3350 = vunpack.c.l.b16 %v2749
        %v3351 = vunpack.c.l.b16 %v2750
        %v3352 = vunpack.c.h.b16 %v2750
        %v3353 = vunpack.c.l.b16 %v2751
        %v3354 = vunpack.c.h.b16 %v2751
        %v3355 = vunpack.c.l.b16 %v2752
        %v3356 = vunpack.c.l.b16 %v2753
        %v3357 = vunpack.c.h.b16 %v2753
        %v3358 = vunpack.c.l.b16 %v2754
        %v3359 = vunpack.c.h.b16 %v2754
        %v3360 = vunpack.c.l.b16 %v2755
        %v3361 = vunpack.c.l.b16 %v2756
        %v3362 = vunpack.c.h.b16 %v2756
        %v3363 = vunpack.c.l.b16 %v2757
        %v3364 = vunpack.c.h.b16 %v2757
        %v3365 = vunpack.c.l.b16 %v2758
        %v3366 = vunpack.c.l.b16 %v2759
        %v3367 = vunpack.c.h.b16 %v2759
        %v3368 = vunpack.c.l.b16 %v2760
        %v3369 = vunpack.c.h.b16 %v2760
        %v3370 = vunpack.c.l.b16 %v2761
        %v3371 = vunpack.c.l.b16 %v2762
        %v3372 = vunpack.c.h.b16 %v2762
        %v3373 = vunpack.c.l.b16 %v2763
        %v3374 = vunpack.c.h.b16 %v2763
        %v3375 = vunpack.c.l.b16 %v2764
        %v3376 = vunpack.c.l.b16 %v2765
        %v3377 = vunpack.c.h.b16 %v2765
        %v3378 = vunpack.c.l.b16 %v2766
        %v3379 = vunpack.c.h.b16 %v2766
        %v3380 = vunpack.c.l.b16 %v2767
        %v3381 = vunpack.c.l.b16 %v2768
        %v3382 = vunpack.c.h.b16 %v2768
        %v3383 = vunpack.c.l.b16 %v2769
        %v3384 = vunpack.c.h.b16 %v2769
        %v3385 = vunpack.c.l.b16 %v2770
        %v3386 = vunpack.c.l.b16 %v2771
        %v3387 = vunpack.c.h.b16 %v2771
        %v3388 = vunpack.c.l.b16 %v2772
        %v3389 = vunpack.c.h.b16 %v2772
        %v3390 = vunpack.c.l.b16 %v2773
        %v3391 = vunpack.c.l.b16 %v2774
        %v3392 = vunpack.c.h.b16 %v2774
        %v3393 = vunpack.c.l.b16 %v2775
        %v3394 = vunpack.c.h.b16 %v2775
        %v3395 = vunpack.c.l.b16 %v2776
        %v3396 = vunpack.c.l.b16 %v2777
        %v3397 = vunpack.c.h.b16 %v2777
        %v3398 = vunpack.c.l.b16 %v2778
        %v3399 = vunpack.c.h.b16 %v2778
        %v3400 = vunpack.c.l.b16 %v2779
        %v3401 = vunpack.c.l.b16 %v2780
        %v3402 = vunpack.c.h.b16 %v2780
        %v3403 = vunpack.c.l.b16 %v2781
        %v3404 = vunpack.c.h.b16 %v2781
        %v3405 = vunpack.c.l.b16 %v2782
        %v3406 = vunpack.c.l.b16 %v2783
        %v3407 = vunpack.c.h.b16 %v2783
        %v3408 = vunpack.c.l.b16 %v2784
        %v3409 = vunpack.c.h.b16 %v2784
        %v3410 = vunpack.c.l.b16 %v2785
        %v3411 = vunpack.c.l.b16 %v2786
        %v3412 = vunpack.c.h.b16 %v2786
        %v3413 = vunpack.c.l.b16 %v2787
        %v3414 = vunpack.c.h.b16 %v2787
        %v3415 = vunpack.c.l.b16 %v2788
        %v3416 = vunpack.c.l.b16 %v2789
        %v3417 = vunpack.c.h.b16 %v2789
        %v3418 = vunpack.c.l.b16 %v2790
        %v3419 = vunpack.c.h.b16 %v2790
        %v3420 = vunpack.c.l.b16 %v2791
        %v3421 = vunpack.c.l.b16 %v2792
        %v3422 = vunpack.c.h.b16 %v2792
        %v3423 = vunpack.c.l.b16 %v2793
        %v3424 = vunpack.c.h.b16 %v2793
        %v3425 = vunpack.c.l.b16 %v2794
        %v3426 = vunpack.c.l.b16 %v2795
        %v3427 = vunpack.c.h.b16 %v2795
        %v3428 = vunpack.c.l.b16 %v2796
        %v3429 = vunpack.c.h.b16 %v2796
        %v3430 = vunpack.c.l.b16 %v2797
        %v3431 = vunpack.c.l.b16 %v2798
        %v3432 = vunpack.c.h.b16 %v2798
        %v3433 = vunpack.c.l.b16 %v2799
        %v3434 = vunpack.c.h.b16 %v2799
        %v3435 = vunpack.c.l.b16 %v2800
        %v3436 = vunpack.c.l.b16 %v2801
        %v3437 = vunpack.c.h.b16 %v2801
        %v3438 = vunpack.c.l.b16 %v2802
        %v3439 = vunpack.c.h.b16 %v2802
        %v3440 = vunpack.c.l.b16 %v2803
        %v3441 = vunpack.c.l.b16 %v2804
        %v3442 = vunpack.c.h.b16 %v2804
        %v3443 = vunpack.c.l.b16 %v2805
        %v3444 = vunpack.c.h.b16 %v2805
        %v3445 = vunpack.c.l.b16 %v2806
        %v3446 = vunpack.c.l.b16 %v2807
        %v3447 = vunpack.c.h.b16 %v2807
        %v3448 = vunpack.c.l.b16 %v2808
        %v3449 = vunpack.c.h.b16 %v2808
        %v3450 = vunpack.c.l.b16 %v2809
        %v3451 = vunpack.c.l.b16 %v2810
        %v3452 = vunpack.c.h.b16 %v2810
        %v3453 = vunpack.c.l.b16 %v2811
        %v3454 = vunpack.c.h.b16 %v2811
        %v3455 = vunpack.c.l.b16 %v2812
        %v3456 = vunpack.c.l.b16 %v2813
        %v3457 = vunpack.c.h.b16 %v2813
        %v3458 = vunpack.c.l.b16 %v2814
        %v3459 = vunpack.c.h.b16 %v2814
        %v3460 = vunpack.c.l.b16 %v2815
        %v3461 = vunpack.c.l.b16 %v2816
        %v3462 = vunpack.c.h.b16 %v2816
        %v3463 = vunpack.c.l.b16 %v2817
        %v3464 = vunpack.c.h.b16 %v2817
        %v3465 = vunpack.c.l.b16 %v2818
        %v3466 = vunpack.c.l.b16 %v2819
        %v3467 = vunpack.c.h.b16 %v2819
        %v3468 = vunpack.c.l.b16 %v2820
        %v3469 = vunpack.c.h.b16 %v2820
        %v3470 = vunpack.c.l.b16 %v2821
        %v3471 = vunpack.c.l.b16 %v2822
        %v3472 = vunpack.c.h.b16 %v2822
        %v3473 = vunpack.c.l.b16 %v2823
        %v3474 = vunpack.c.h.b16 %v2823
        %v3475 = vunpack.c.l.b16 %v2824
        %v3476 = vunpack.c.l.b16 %v2825
        %v3477 = vunpack.c.h.b16 %v2825
        %v3478 = vunpack.c.l.b16 %v2826
        %v3479 = vunpack.c.h.b16 %v2826
        %v3480 = vunpack.c.l.b16 %v2827
        %v3481 = vunpack.c.l.b16 %v2828
        %v3482 = vunpack.c.h.b16 %v2828
        %v3483 = vunpack.c.l.b16 %v2829
        %v3484 = vunpack.c.h.b16 %v2829
        %v3485 = vunpack.c.l.b16 %v2830
        %v3486 = vunpack.c.l.b16 %v2831
        %v3487 = vunpack.c.h.b16 %v2831
        %v3488 = vunpack.c.l.b16 %v2832
        %v3489 = vunpack.c.h.b16 %v2832
        %v3490 = vunpack.c.l.b16 %v2833
        %v3491 = vunpack.c.l.b16 %v2834
        %v3492 = vunpack.c.h.b16 %v2834
        %v3493 = vunpack.c.l.b16 %v2835
        %v3494 = vunpack.c.h.b16 %v2835
        %v3495 = vunpack.c.l.b16 %v2836
        %v3496 = vunpack.c.l.b16 %v2837
        %v3497 = vunpack.c.h.b16 %v2837
        %v3498 = vunpack.c.l.b16 %v2838
        %v3499 = vunpack.c.h.b16 %v2838
        %v3500 = vunpack.c.l.b16 %v2839
        %v3501 = vunpack.c.l.b16 %v2840
        %v3502 = vunpack.c.h.b16 %v2840
        %v3503 = vunpack.c.l.b16 %v2841
        %v3504 = vunpack.c.h.b16 %v2841
        %v3505 = vunpack.c.l.b16 %v2842
        %v3506 = vunpack.c.l.b16 %v2843
        %v3507 = vunpack.c.h.b16 %v2843
        %v3508 = vunpack.c.l.b16 %v2844
        %v3509 = vunpack.c.h.b16 %v2844
        %v3510 = vunpack.c.l.b16 %v2845
        %v3511 = vunpack.c.l.b16 %v2846
        %v3512 = vunpack.c.h.b16 %v2846
        %v3513 = vunpack.c.l.b16 %v2847
        %v3514 = vunpack.c.h.b16 %v2847
        %v3515 = vunpack.c.l.b16 %v2848
        %v3516 = vpack.c.b16 %v3121, %v3116
        %v3517 = vpack.c.b16 %v3122, %v3117
        %v3518 = vpack.c.b16 %v3123, %v3118
        %v3519 = vpack.c.b16 %v3124, %v3119
        %v3520 = vpack.c.b16 %v3125, %v3120
        %v3521 = vpack.c.b16 %v3131, %v3126
        %v3522 = vpack.c.b16 %v3132, %v3127
        %v3523 = vpack.c.b16 %v3133, %v3128
        %v3524 = vpack.c.b16 %v3134, %v3129
        %v3525 = vpack.c.b16 %v3135, %v3130
        %v3526 = vpack.c.b16 %v3141, %v3136
        %v3527 = vpack.c.b16 %v3142, %v3137
        %v3528 = vpack.c.b16 %v3143, %v3138
        %v3529 = vpack.c.b16 %v3144, %v3139
        %v3530 = vpack.c.b16 %v3145, %v3140
        %v3531 = vpack.c.b16 %v3151, %v3146
        %v3532 = vpack.c.b16 %v3152, %v3147
        %v3533 = vpack.c.b16 %v3153, %v3148
        %v3534 = vpack.c.b16 %v3154, %v3149
        %v3535 = vpack.c.b16 %v3155, %v3150
        %v3536 = vpack.c.b16 %v3161, %v3156
        %v3537 = vpack.c.b16 %v3162, %v3157
        %v3538 = vpack.c.b16 %v3163, %v3158
        %v3539 = vpack.c.b16 %v3164, %v3159
        %v3540 = vpack.c.b16 %v3165, %v3160
        %v3541 = vpack.c.b16 %v3171, %v3166
        %v3542 = vpack.c.b16 %v3172, %v3167
        %v3543 = vpack.c.b16 %v3173, %v3168
        %v3544 = vpack.c.b16 %v3174, %v3169
        %v3545 = vpack.c.b16 %v3175, %v3170
        %v3546 = vpack.c.b16 %v3181, %v3176
        %v3547 = vpack.c.b16 %v3182, %v3177
        %v3548 = vpack.c.b16 %v3183, %v3178
        %v3549 = vpack.c.b16 %v3184, %v3179
        %v3550 = vpack.c.b16 %v3185, %v3180
        %v3551 = vpack.c.b16 %v3191, %v3186
        %v3552 = vpack.c.b16 %v3192, %v3187
        %v3553 = vpack.c.b16 %v3193, %v3188
        %v3554 = vpack.c.b16 %v3194, %v3189
        %v3555 = vpack.c.b16 %v3195, %v3190
        %v3556 = vpack.c.b16 %v3201, %v3196
        %v3557 = vpack.c.b16 %v3202, %v3197
        %v3558 = vpack.c.b16 %v3203, %v3198
        %v3559 = vpack.c.b16 %v3204, %v3199
        %v3560 = vpack.c.b16 %v3205, %v3200
        %v3561 = vpack.c.b16 %v3211, %v3206
        %v3562 = vpack.c.b16 %v3212, %v3207
        %v3563 = vpack.c.b16 %v3213, %v3208
        %v3564 = vpack.c.b16 %v3214, %v3209
        %v3565 = vpack.c.b16 %v3215, %v3210
        %v3566 = vpack.c.b16 %v3221, %v3216
        %v3567 = vpack.c.b16 %v3222, %v3217
        %v3568 = vpack.c.b16 %v3223, %v3218
        %v3569 = vpack.c.b16 %v3224, %v3219
        %v3570 = vpack.c.b16 %v3225, %v3220
        %v3571 = vpack.c.b16 %v3231, %v3226
        %v3572 = vpack.c.b16 %v3232, %v3227
        %v3573 = vpack.c.b16 %v3233, %v3228
        %v3574 = vpack.c.b16 %v3234, %v3229
        %v3575 = vpack.c.b16 %v3235, %v3230
        %v3576 = vpack.c.b16 %v3241, %v3236
        %v3577 = vpack.c.b16 %v3242, %v3237
        %v3578 = vpack.c.b16 %v3243, %v3238
        %v3579 = vpack.c.b16 %v3244, %v3239
        %v3580 = vpack.c.b16 %v3245, %v3240
        %v3581 = vpack.c.b16 %v3251, %v3246
        %v3582 = vpack.c.b16 %v3252, %v3247
        %v3583 = vpack.c.b16 %v3253, %v3248
        %v3584 = vpack.c.b16 %v3254, %v3249
        %v3585 = vpack.c.b16 %v3255, %v3250
        %v3586 = vpack.c.b16 %v3261, %v3256
        %v3587 = vpack.c.b16 %v3262, %v3257
        %v3588 = vpack.c.b16 %v3263, %v3258
        %v3589 = vpack.c.b16 %v3264, %v3259
        %v3590 = vpack.c.b16 %v3265, %v3260
        %v3591 = vpack.c.b16 %v3271, %v3266
        %v3592 = vpack.c.b16 %v3272, %v3267
        %v3593 = vpack.c.b16 %v3273, %v3268
        %v3594 = vpack.c.b16 %v3274, %v3269
        %v3595 = vpack.c.b16 %v3275, %v3270
        %v3596 = vpack.c.b16 %v3281, %v3276
        %v3597 = vpack.c.b16 %v3282, %v3277
        %v3598 = vpack.c.b16 %v3283, %v3278
        %v3599 = vpack.c.b16 %v3284, %v3279
        %v3600 = vpack.c.b16 %v3285, %v3280
        %v3601 = vpack.c.b16 %v3291, %v3286
        %v3602 = vpack.c.b16 %v3292, %v3287
        %v3603 = vpack.c.b16 %v3293, %v3288
        %v3604 = vpack.c.b16 %v3294, %v3289
        %v3605 = vpack.c.b16 %v3295, %v3290
        %v3606 = vpack.c.b16 %v3301, %v3296
        %v3607 = vpack.c.b16 %v3302, %v3297
        %v3608 = vpack.c.b16 %v3303, %v3298
        %v3609 = vpack.c.b16 %v3304, %v3299
        %v3610 = vpack.c.b16 %v3305, %v3300
        %v3611 = vpack.c.b16 %v3311, %v3306
        %v3612 = vpack.c.b16 %v3312, %v3307
        %v3613 = vpack.c.b16 %v3313, %v3308
        %v3614 = vpack.c.b16 %v3314, %v3309
        %v3615 = vpack.c.b16 %v3315, %v3310
        %v3616 = vpack.c.b16 %v3321, %v3316
        %v3617 = vpack.c.b16 %v3322, %v3317
        %v3618 = vpack.c.b16 %v3323, %v3318
        %v3619 = vpack.c.b16 %v3324, %v3319
        %v3620 = vpack.c.b16 %v3325, %v3320
        %v3621 = vpack.c.b16 %v3331, %v3326
        %v3622 = vpack.c.b16 %v3332, %v3327
        %v3623 = vpack.c.b16 %v3333, %v3328
        %v3624 = vpack.c.b16 %v3334, %v3329
        %v3625 = vpack.c.b16 %v3335, %v3330
        %v3626 = vpack.c.b16 %v3341, %v3336
        %v3627 = vpack.c.b16 %v3342, %v3337
        %v3628 = vpack.c.b16 %v3343, %v3338
        %v3629 = vpack.c.b16 %v3344, %v3339
        %v3630 = vpack.c.b16 %v3345, %v3340
        %v3631 = vpack.c.b16 %v3351, %v3346
        %v3632 = vpack.c.b16 %v3352, %v3347
        %v3633 = vpack.c.b16 %v3353, %v3348
        %v3634 = vpack.c.b16 %v3354, %v3349
        %v3635 = vpack.c.b16 %v3355, %v3350
        %v3636 = vpack.c.b16 %v3361, %v3356
        %v3637 = vpack.c.b16 %v3362, %v3357
        %v3638 = vpack.c.b16 %v3363, %v3358
        %v3639 = vpack.c.b16 %v3364, %v3359
        %v3640 = vpack.c.b16 %v3365, %v3360
        %v3641 = vpack.c.b16 %v3371, %v3366
        %v3642 = vpack.c.b16 %v3372, %v3367
        %v3643 = vpack.c.b16 %v3373, %v3368
        %v3644 = vpack.c.b16 %v3374, %v3369
        %v3645 = vpack.c.b16 %v3375, %v3370
        %v3646 = vpack.c.b16 %v3381, %v3376
        %v3647 = vpack.c.b16 %v3382, %v3377
        %v3648 = vpack.c.b16 %v3383, %v3378
        %v3649 = vpack.c.b16 %v3384, %v3379
        %v3650 = vpack.c.b16 %v3385, %v3380
        %v3651 = vpack.c.b16 %v3391, %v3386
        %v3652 = vpack.c.b16 %v3392, %v3387
        %v3653 = vpack.c.b16 %v3393, %v3388
        %v3654 = vpack.c.b16 %v3394, %v3389
        %v3655 = vpack.c.b16 %v3395, %v3390
        %v3656 = vpack.c.b16 %v3401, %v3396
        %v3657 = vpack.c.b16 %v3402, %v3397
        %v3658 = vpack.c.b16 %v3403, %v3398
        %v3659 = vpack.c.b16 %v3404, %v3399
        %v3660 = vpack.c.b16 %v3405, %v3400
        %v3661 = vpack.c.b16 %v3411, %v3406
        %v3662 = vpack.c.b16 %v3412, %v3407
        %v3663 = vpack.c.b16 %v3413, %v3408
        %v3664 = vpack.c.b16 %v3414, %v3409
        %v3665 = vpack.c.b16 %v3415, %v3410
        %v3666 = vpack.c.b16 %v3421, %v3416
        %v3667 = vpack.c.b16 %v3422, %v3417
        %v3668 = vpack.c.b16 %v3423, %v3418
        %v3669 = vpack.c.b16 %v3424, %v3419
        %v3670 = vpack.c.b16 %v3425, %v3420
        %v3671 = vpack.c.b16 %v3431, %v3426
        %v3672 = vpack.c.b16 %v3432, %v3427
        %v3673 = vpack.c.b16 %v3433, %v3428
        %v3674 = vpack.c.b16 %v3434, %v3429
        %v3675 = vpack.c.b16 %v3435, %v3430
        %v3676 = vpack.c.b16 %v3441, %v3436
        %v3677 = vpack.c.b16 %v3442, %v3437
        %v3678 = vpack.c.b16 %v3443, %v3438
        %v3679 = vpack.c.b16 %v3444, %v3439
        %v3680 = vpack.c.b16 %v3445, %v3440
        %v3681 = vpack.c.b16 %v3451, %v3446
        %v3682 = vpack.c.b16 %v3452, %v3447
        %v3683 = vpack.c.b16 %v3453, %v3448
        %v3684 = vpack.c.b16 %v3454, %v3449
        %v3685 = vpack.c.b16 %v3455, %v3450
        %v3686 = vpack.c.b16 %v3461, %v3456
        %v3687 = vpack.c.b16 %v3462, %v3457
        %v3688 = vpack.c.b16 %v3463, %v3458
        %v3689 = vpack.c.b16 %v3464, %v3459
        %v3690 = vpack.c.b16 %v3465, %v3460
        %v3691 = vpack.c.b16 %v3471, %v3466
        %v3692 = vpack.c.b16 %v3472, %v3467
        %v3693 = vpack.c.b16 %v3473, %v3468
        %v3694 = vpack.c.b16 %v3474, %v3469
        %v3695 = vpack.c.b16 %v3475, %v3470
        %v3696 = vpack.c.b16 %v3481, %v3476
        %v3697 = vpack.c.b16 %v3482, %v3477
        %v3698 = vpack.c.b16 %v3483, %v3478
        %v3699 = vpack.c.b16 %v3484, %v3479
        %v3700 = vpack.c.b16 %v3485, %v3480
        %v3701 = vpack.c.b16 %v3491, %v3486
        %v3702 = vpack.c.b16 %v3492, %v3487
        %v3703 = vpack.c.b16 %v3493, %v3488
        %v3704 = vpack.c.b16 %v3494, %v3489
        %v3705 = vpack.c.b16 %v3495, %v3490
        %v3706 = vpack.c.b16 %v3501, %v3496
        %v3707 = vpack.c.b16 %v3502, %v3497
        %v3708 = vpack.c.b16 %v3503, %v3498
        %v3709 = vpack.c.b16 %v3504, %v3499
        %v3710 = vpack.c.b16 %v3505, %v3500
        %v3711 = vpack.c.b16 %v3511, %v3506
        %v3712 = vpack.c.b16 %v3512, %v3507
        %v3713 = vpack.c.b16 %v3513, %v3508
        %v3714 = vpack.c.b16 %v3514, %v3509
        %v3715 = vpack.c.b16 %v3515, %v3510
        %3916 = vmatprep.subr.bf16.mxu0 %v3552
        %3917 = vmatpush1.bf16.msra.mxu0 %v3551
        %3918 = vmatprep.subr.bf16.mxu0 %v3547
        %3919 = vmatpush1.bf16.msra.mxu0 %v3546
        %3920 = vmatprep.subr.bf16.mxu0 %v3542
        %3921 = vmatpush1.bf16.msra.mxu0 %v3541
        %3922 = vmatprep.subr.bf16.mxu0 %v3537
        %3923 = vmatpush1.bf16.msra.mxu0 %v3536
        %3924 = vmatprep.subr.bf16.mxu0 %v3532
        %3925 = vmatpush1.bf16.msra.mxu0 %v3531
        %3926 = vmatprep.subr.bf16.mxu0 %v3527
        %3927 = vmatpush1.bf16.msra.mxu0 %v3526
        %3928 = vmatprep.subr.bf16.mxu0 %v3522
        %3929 = vmatpush1.bf16.msra.mxu0 %v3521
        %3930 = vmatprep.subr.bf16.mxu0 %v3517
        %3931 = vmatpush1.bf16.msra.mxu0 %v3516
        %3932 = vmatprep.subr.bf16.mxu0 %v3592
        %3933 = vmatpush2.bf16.msra.mxu0 %v3591
        %3934 = vmatprep.subr.bf16.mxu0 %v3587
        %3935 = vmatpush2.bf16.msra.mxu0 %v3586
        %3936 = vmatprep.subr.bf16.mxu0 %v3582
        %3937 = vmatpush2.bf16.msra.mxu0 %v3581
        %3938 = vmatprep.subr.bf16.mxu0 %v3577
        %3939 = vmatpush2.bf16.msra.mxu0 %v3576
        %3940 = vmatprep.subr.bf16.mxu0 %v3572
        %3941 = vmatpush2.bf16.msra.mxu0 %v3571
        %3942 = vmatprep.subr.bf16.mxu0 %v3567
        %3943 = vmatpush2.bf16.msra.mxu0 %v3566
        %3944 = vmatprep.subr.bf16.mxu0 %v3562
        %3945 = vmatpush2.bf16.msra.mxu0 %v3561
        %3946 = vmatprep.subr.bf16.mxu0 %v3557
        %3947 = vmatpush2.bf16.msra.mxu0 %v3556
        %3948 = vmatprep.mubr.bf16.mxu0 %v2605
        %3949 = vmatmul.mubr.bf16.gmra.mxu0 %v2604
        %v3950 = vpop.f32.mrf.mxu0
        %v3951 = vadd.f32 %v2854, %v3950
        %v3952 = vpop.f32.mrf.mxu0
        %v3953 = vadd.f32 %v2858, %v3952
        %v3954 = vpop.f32.mrf.mxu0
        %v3955 = vpop.f32.mrf.mxu0
        %3956 = vdwg.mxu0
        %3957 = vmatprep.subr.bf16.mxu0 %v3632
        %3958 = vmatpush1.bf16.msra.mxu0 %v3631
        %3959 = vmatprep.subr.bf16.mxu0 %v3627
        %3960 = vmatpush1.bf16.msra.mxu0 %v3626
        %3961 = vmatprep.subr.bf16.mxu0 %v3622
        %3962 = vmatpush1.bf16.msra.mxu0 %v3621
        %3963 = vmatprep.subr.bf16.mxu0 %v3617
        %3964 = vmatpush1.bf16.msra.mxu0 %v3616
        %3965 = vmatprep.subr.bf16.mxu0 %v3612
        %3966 = vmatpush1.bf16.msra.mxu0 %v3611
        %3967 = vmatprep.subr.bf16.mxu0 %v3607
        %3968 = vmatpush1.bf16.msra.mxu0 %v3606
        %3969 = vmatprep.subr.bf16.mxu0 %v3602
        %3970 = vmatpush1.bf16.msra.mxu0 %v3601
        %3971 = vmatprep.subr.bf16.mxu0 %v3597
        %3972 = vmatpush1.bf16.msra.mxu0 %v3596
        %3973 = vmatprep.subr.bf16.mxu0 %v3672
        %3974 = vmatpush2.bf16.msra.mxu0 %v3671
        %3975 = vmatprep.subr.bf16.mxu0 %v3667
        %3976 = vmatpush2.bf16.msra.mxu0 %v3666
        %3977 = vmatprep.subr.bf16.mxu0 %v3662
        %3978 = vmatpush2.bf16.msra.mxu0 %v3661
        %3979 = vmatprep.subr.bf16.mxu0 %v3657
        %3980 = vmatpush2.bf16.msra.mxu0 %v3656
        %3981 = vmatprep.subr.bf16.mxu0 %v3652
        %3982 = vmatpush2.bf16.msra.mxu0 %v3651
        %3983 = vmatprep.subr.bf16.mxu0 %v3647
        %3984 = vmatpush2.bf16.msra.mxu0 %v3646
        %3985 = vmatprep.subr.bf16.mxu0 %v3642
        %3986 = vmatpush2.bf16.msra.mxu0 %v3641
        %3987 = vmatprep.subr.bf16.mxu0 %v3637
        %3988 = vmatpush2.bf16.msra.mxu0 %v3636
        %3989 = vmatprep.mubr.bf16.mxu0 %v2607
        %3990 = vmatmul.mubr.bf16.gmra.mxu0 %v2606
        %v3991 = vpop.f32.mrf.mxu0
        %v3992 = vadd.f32 %v3951, %v3991
        %v3993 = vpop.f32.mrf.mxu0
        %v3994 = vadd.f32 %v3953, %v3993
        %v3995 = vpop.f32.mrf.mxu0
        %v3996 = vpop.f32.mrf.mxu0
        %3997 = vdwg.mxu0
        %3998 = vmatprep.subr.bf16.mxu0 %v3712
        %3999 = vmatpush1.bf16.msra.mxu0 %v3711
        %4000 = vmatprep.subr.bf16.mxu0 %v3707
        %4001 = vmatpush1.bf16.msra.mxu0 %v3706
        %4002 = vmatprep.subr.bf16.mxu0 %v3702
        %4003 = vmatpush1.bf16.msra.mxu0 %v3701
        %4004 = vmatprep.subr.bf16.mxu0 %v3697
        %4005 = vmatpush1.bf16.msra.mxu0 %v3696
        %4006 = vmatprep.subr.bf16.mxu0 %v3692
        %4007 = vmatpush1.bf16.msra.mxu0 %v3691
        %4008 = vmatprep.subr.bf16.mxu0 %v3687
        %4009 = vmatpush1.bf16.msra.mxu0 %v3686
        %4010 = vmatprep.subr.bf16.mxu0 %v3682
        %4011 = vmatpush1.bf16.msra.mxu0 %v3681
        %4012 = vmatprep.subr.bf16.mxu0 %v3677
        %4013 = vmatpush1.bf16.msra.mxu0 %v3676
        %4014 = vmatprep.subr.bf16.mxu0 0
        %4015 = vmatpush2.bf16.msra.mxu0 0
        %4016 = vmatprep.subr.bf16.mxu0 0
        %4017 = vmatpush2.bf16.msra.mxu0 0
        %4018 = vmatprep.subr.bf16.mxu0 0
        %4019 = vmatpush2.bf16.msra.mxu0 0
        %4020 = vmatprep.subr.bf16.mxu0 0
        %4021 = vmatpush2.bf16.msra.mxu0 0
        %4022 = vmatprep.subr.bf16.mxu0 0
        %4023 = vmatpush2.bf16.msra.mxu0 0
        %4024 = vmatprep.subr.bf16.mxu0 0
        %4025 = vmatpush2.bf16.msra.mxu0 0
        %4026 = vmatprep.subr.bf16.mxu0 0
        %4027 = vmatpush2.bf16.msra.mxu0 0
        %4028 = vmatprep.subr.bf16.mxu0 0
        %4029 = vmatpush2.bf16.msra.mxu0 0
        %4030 = vmatprep.mubr.bf16.mxu0 0
        %4031 = vmatmul.mubr.bf16.gmra.mxu0 %v2608
        %v4032 = vpop.f32.mrf.mxu0
        %v4033 = vadd.f32 %v3992, %v4032
        %v4034 = vpop.f32.mrf.mxu0
        %v4035 = vadd.f32 %v3994, %v4034
        %v4036 = vpop.f32.mrf.mxu0
        %v4037 = vpop.f32.mrf.mxu0
        %4038 = vdwg.mxu0
        %4039 = vmatprep.subr.bf16.mxu0 %v3554
        %4040 = vmatpush1.bf16.msra.mxu0 %v3553
        %4041 = vmatprep.subr.bf16.mxu0 %v3549
        %4042 = vmatpush1.bf16.msra.mxu0 %v3548
        %4043 = vmatprep.subr.bf16.mxu0 %v3544
        %4044 = vmatpush1.bf16.msra.mxu0 %v3543
        %4045 = vmatprep.subr.bf16.mxu0 %v3539
        %4046 = vmatpush1.bf16.msra.mxu0 %v3538
        %4047 = vmatprep.subr.bf16.mxu0 %v3534
        %4048 = vmatpush1.bf16.msra.mxu0 %v3533
        %4049 = vmatprep.subr.bf16.mxu0 %v3529
        %4050 = vmatpush1.bf16.msra.mxu0 %v3528
        %4051 = vmatprep.subr.bf16.mxu0 %v3524
        %4052 = vmatpush1.bf16.msra.mxu0 %v3523
        %4053 = vmatprep.subr.bf16.mxu0 %v3519
        %4054 = vmatpush1.bf16.msra.mxu0 %v3518
        %4055 = vmatprep.subr.bf16.mxu0 %v3594
        %4056 = vmatpush2.bf16.msra.mxu0 %v3593
        %4057 = vmatprep.subr.bf16.mxu0 %v3589
        %4058 = vmatpush2.bf16.msra.mxu0 %v3588
        %4059 = vmatprep.subr.bf16.mxu0 %v3584
        %4060 = vmatpush2.bf16.msra.mxu0 %v3583
        %4061 = vmatprep.subr.bf16.mxu0 %v3579
        %4062 = vmatpush2.bf16.msra.mxu0 %v3578
        %4063 = vmatprep.subr.bf16.mxu0 %v3574
        %4064 = vmatpush2.bf16.msra.mxu0 %v3573
        %4065 = vmatprep.subr.bf16.mxu0 %v3569
        %4066 = vmatpush2.bf16.msra.mxu0 %v3568
        %4067 = vmatprep.subr.bf16.mxu0 %v3564
        %4068 = vmatpush2.bf16.msra.mxu0 %v3563
        %4069 = vmatprep.subr.bf16.mxu0 %v3559
        %4070 = vmatpush2.bf16.msra.mxu0 %v3558
        %4071 = vmatprep.mubr.bf16.mxu0 %v2605
        %4072 = vmatmul.mubr.bf16.gmra.mxu0 %v2604
        %v4073 = vpop.f32.mrf.mxu0
        %v4074 = vadd.f32 %v2862, %v4073
        %v4075 = vpop.f32.mrf.mxu0
        %v4076 = vadd.f32 %v2866, %v4075
        %v4077 = vpop.f32.mrf.mxu0
        %v4078 = vpop.f32.mrf.mxu0
        %4079 = vdwg.mxu0
        %4080 = vmatprep.subr.bf16.mxu0 %v3634
        %4081 = vmatpush1.bf16.msra.mxu0 %v3633
        %4082 = vmatprep.subr.bf16.mxu0 %v3629
        %4083 = vmatpush1.bf16.msra.mxu0 %v3628
        %4084 = vmatprep.subr.bf16.mxu0 %v3624
        %4085 = vmatpush1.bf16.msra.mxu0 %v3623
        %4086 = vmatprep.subr.bf16.mxu0 %v3619
        %4087 = vmatpush1.bf16.msra.mxu0 %v3618
        %4088 = vmatprep.subr.bf16.mxu0 %v3614
        %4089 = vmatpush1.bf16.msra.mxu0 %v3613
        %4090 = vmatprep.subr.bf16.mxu0 %v3609
        %4091 = vmatpush1.bf16.msra.mxu0 %v3608
        %4092 = vmatprep.subr.bf16.mxu0 %v3604
        %4093 = vmatpush1.bf16.msra.mxu0 %v3603
        %4094 = vmatprep.subr.bf16.mxu0 %v3599
        %4095 = vmatpush1.bf16.msra.mxu0 %v3598
        %4096 = vmatprep.subr.bf16.mxu0 %v3674
        %4097 = vmatpush2.bf16.msra.mxu0 %v3673
        %4098 = vmatprep.subr.bf16.mxu0 %v3669
        %4099 = vmatpush2.bf16.msra.mxu0 %v3668
        %4100 = vmatprep.subr.bf16.mxu0 %v3664
        %4101 = vmatpush2.bf16.msra.mxu0 %v3663
        %4102 = vmatprep.subr.bf16.mxu0 %v3659
        %4103 = vmatpush2.bf16.msra.mxu0 %v3658
        %4104 = vmatprep.subr.bf16.mxu0 %v3654
        %4105 = vmatpush2.bf16.msra.mxu0 %v3653
        %4106 = vmatprep.subr.bf16.mxu0 %v3649
        %4107 = vmatpush2.bf16.msra.mxu0 %v3648
        %4108 = vmatprep.subr.bf16.mxu0 %v3644
        %4109 = vmatpush2.bf16.msra.mxu0 %v3643
        %4110 = vmatprep.subr.bf16.mxu0 %v3639
        %4111 = vmatpush2.bf16.msra.mxu0 %v3638
        %4112 = vmatprep.mubr.bf16.mxu0 %v2607
        %4113 = vmatmul.mubr.bf16.gmra.mxu0 %v2606
        %v4114 = vpop.f32.mrf.mxu0
        %v4115 = vadd.f32 %v4074, %v4114
        %v4116 = vpop.f32.mrf.mxu0
        %v4117 = vadd.f32 %v4076, %v4116
        %v4118 = vpop.f32.mrf.mxu0
        %v4119 = vpop.f32.mrf.mxu0
        %4120 = vdwg.mxu0
        %4121 = vmatprep.subr.bf16.mxu0 %v3714
        %4122 = vmatpush1.bf16.msra.mxu0 %v3713
        %4123 = vmatprep.subr.bf16.mxu0 %v3709
        %4124 = vmatpush1.bf16.msra.mxu0 %v3708
        %4125 = vmatprep.subr.bf16.mxu0 %v3704
        %4126 = vmatpush1.bf16.msra.mxu0 %v3703
        %4127 = vmatprep.subr.bf16.mxu0 %v3699
        %4128 = vmatpush1.bf16.msra.mxu0 %v3698
        %4129 = vmatprep.subr.bf16.mxu0 %v3694
        %4130 = vmatpush1.bf16.msra.mxu0 %v3693
        %4131 = vmatprep.subr.bf16.mxu0 %v3689
        %4132 = vmatpush1.bf16.msra.mxu0 %v3688
        %4133 = vmatprep.subr.bf16.mxu0 %v3684
        %4134 = vmatpush1.bf16.msra.mxu0 %v3683
        %4135 = vmatprep.subr.bf16.mxu0 %v3679
        %4136 = vmatpush1.bf16.msra.mxu0 %v3678
        %4137 = vmatprep.subr.bf16.mxu0 0
        %4138 = vmatpush2.bf16.msra.mxu0 0
        %4139 = vmatprep.subr.bf16.mxu0 0
        %4140 = vmatpush2.bf16.msra.mxu0 0
        %4141 = vmatprep.subr.bf16.mxu0 0
        %4142 = vmatpush2.bf16.msra.mxu0 0
        %4143 = vmatprep.subr.bf16.mxu0 0
        %4144 = vmatpush2.bf16.msra.mxu0 0
        %4145 = vmatprep.subr.bf16.mxu0 0
        %4146 = vmatpush2.bf16.msra.mxu0 0
        %4147 = vmatprep.subr.bf16.mxu0 0
        %4148 = vmatpush2.bf16.msra.mxu0 0
        %4149 = vmatprep.subr.bf16.mxu0 0
        %4150 = vmatpush2.bf16.msra.mxu0 0
        %4151 = vmatprep.subr.bf16.mxu0 0
        %4152 = vmatpush2.bf16.msra.mxu0 0
        %4153 = vmatprep.mubr.bf16.mxu0 0
        %4154 = vmatmul.mubr.bf16.gmra.mxu0 %v2608
        %v4155 = vpop.f32.mrf.mxu0
        %v4156 = vadd.f32 %v4115, %v4155
        %v4157 = vpop.f32.mrf.mxu0
        %v4158 = vadd.f32 %v4117, %v4157
        %v4159 = vpop.f32.mrf.mxu0
        %v4160 = vpop.f32.mrf.mxu0
        %4161 = vdwg.mxu0
        %4162 = vmatprep.subr.bf16.mxu0 0
        %4163 = vmatpush1.bf16.msra.mxu0 %v3555
        %4164 = vmatprep.subr.bf16.mxu0 0
        %4165 = vmatpush1.bf16.msra.mxu0 %v3550
        %4166 = vmatprep.subr.bf16.mxu0 0
        %4167 = vmatpush1.bf16.msra.mxu0 %v3545
        %4168 = vmatprep.subr.bf16.mxu0 0
        %4169 = vmatpush1.bf16.msra.mxu0 %v3540
        %4170 = vmatprep.subr.bf16.mxu0 0
        %4171 = vmatpush1.bf16.msra.mxu0 %v3535
        %4172 = vmatprep.subr.bf16.mxu0 0
        %4173 = vmatpush1.bf16.msra.mxu0 %v3530
        %4174 = vmatprep.subr.bf16.mxu0 0
        %4175 = vmatpush1.bf16.msra.mxu0 %v3525
        %4176 = vmatprep.subr.bf16.mxu0 0
        %4177 = vmatpush1.bf16.msra.mxu0 %v3520
        %4178 = vmatprep.subr.bf16.mxu0 0
        %4179 = vmatpush2.bf16.msra.mxu0 %v3595
        %4180 = vmatprep.subr.bf16.mxu0 0
        %4181 = vmatpush2.bf16.msra.mxu0 %v3590
        %4182 = vmatprep.subr.bf16.mxu0 0
        %4183 = vmatpush2.bf16.msra.mxu0 %v3585
        %4184 = vmatprep.subr.bf16.mxu0 0
        %4185 = vmatpush2.bf16.msra.mxu0 %v3580
        %4186 = vmatprep.subr.bf16.mxu0 0
        %4187 = vmatpush2.bf16.msra.mxu0 %v3575
        %4188 = vmatprep.subr.bf16.mxu0 0
        %4189 = vmatpush2.bf16.msra.mxu0 %v3570
        %4190 = vmatprep.subr.bf16.mxu0 0
        %4191 = vmatpush2.bf16.msra.mxu0 %v3565
        %4192 = vmatprep.subr.bf16.mxu0 0
        %4193 = vmatpush2.bf16.msra.mxu0 %v3560
        %4194 = vmatprep.mubr.bf16.mxu0 %v2605
        %4195 = vmatmul.mubr.bf16.gmra.mxu0 %v2604
        %v4196 = vpop.f32.mrf.mxu0
        %v4197 = vadd.f32 %v2870, %v4196
        %v4198 = vpop.f32.mrf.mxu0
        %v4199 = vpop.f32.mrf.mxu0
        %v4200 = vpop.f32.mrf.mxu0
        %4201 = vdwg.mxu0
        %4202 = vmatprep.subr.bf16.mxu0 0
        %4203 = vmatpush1.bf16.msra.mxu0 %v3635
        %4204 = vmatprep.subr.bf16.mxu0 0
        %4205 = vmatpush1.bf16.msra.mxu0 %v3630
        %4206 = vmatprep.subr.bf16.mxu0 0
        %4207 = vmatpush1.bf16.msra.mxu0 %v3625
        %4208 = vmatprep.subr.bf16.mxu0 0
        %4209 = vmatpush1.bf16.msra.mxu0 %v3620
        %4210 = vmatprep.subr.bf16.mxu0 0
        %4211 = vmatpush1.bf16.msra.mxu0 %v3615
        %4212 = vmatprep.subr.bf16.mxu0 0
        %4213 = vmatpush1.bf16.msra.mxu0 %v3610
        %4214 = vmatprep.subr.bf16.mxu0 0
        %4215 = vmatpush1.bf16.msra.mxu0 %v3605
        %4216 = vmatprep.subr.bf16.mxu0 0
        %4217 = vmatpush1.bf16.msra.mxu0 %v3600
        %4218 = vmatprep.subr.bf16.mxu0 0
        %4219 = vmatpush2.bf16.msra.mxu0 %v3675
        %4220 = vmatprep.subr.bf16.mxu0 0
        %4221 = vmatpush2.bf16.msra.mxu0 %v3670
        %4222 = vmatprep.subr.bf16.mxu0 0
        %4223 = vmatpush2.bf16.msra.mxu0 %v3665
        %4224 = vmatprep.subr.bf16.mxu0 0
        %4225 = vmatpush2.bf16.msra.mxu0 %v3660
        %4226 = vmatprep.subr.bf16.mxu0 0
        %4227 = vmatpush2.bf16.msra.mxu0 %v3655
        %4228 = vmatprep.subr.bf16.mxu0 0
        %4229 = vmatpush2.bf16.msra.mxu0 %v3650
        %4230 = vmatprep.subr.bf16.mxu0 0
        %4231 = vmatpush2.bf16.msra.mxu0 %v3645
        %4232 = vmatprep.subr.bf16.mxu0 0
        %4233 = vmatpush2.bf16.msra.mxu0 %v3640
        %4234 = vmatprep.mubr.bf16.mxu0 %v2607
        %4235 = vmatmul.mubr.bf16.gmra.mxu0 %v2606
        %v4236 = vpop.f32.mrf.mxu0
        %v4237 = vadd.f32 %v4197, %v4236
        %v4238 = vpop.f32.mrf.mxu0
        %v4239 = vpop.f32.mrf.mxu0
        %v4240 = vpop.f32.mrf.mxu0
        %4241 = vdwg.mxu0
        %4242 = vmatprep.subr.bf16.mxu0 0
        %4243 = vmatpush1.bf16.msra.mxu0 %v3715
        %4244 = vmatprep.subr.bf16.mxu0 0
        %4245 = vmatpush1.bf16.msra.mxu0 %v3710
        %4246 = vmatprep.subr.bf16.mxu0 0
        %4247 = vmatpush1.bf16.msra.mxu0 %v3705
        %4248 = vmatprep.subr.bf16.mxu0 0
        %4249 = vmatpush1.bf16.msra.mxu0 %v3700
        %4250 = vmatprep.subr.bf16.mxu0 0
        %4251 = vmatpush1.bf16.msra.mxu0 %v3695
        %4252 = vmatprep.subr.bf16.mxu0 0
        %4253 = vmatpush1.bf16.msra.mxu0 %v3690
        %4254 = vmatprep.subr.bf16.mxu0 0
        %4255 = vmatpush1.bf16.msra.mxu0 %v3685
        %4256 = vmatprep.subr.bf16.mxu0 0
        %4257 = vmatpush1.bf16.msra.mxu0 %v3680
        %4258 = vmatprep.subr.bf16.mxu0 0
        %4259 = vmatpush2.bf16.msra.mxu0 0
        %4260 = vmatprep.subr.bf16.mxu0 0
        %4261 = vmatpush2.bf16.msra.mxu0 0
        %4262 = vmatprep.subr.bf16.mxu0 0
        %4263 = vmatpush2.bf16.msra.mxu0 0
        %4264 = vmatprep.subr.bf16.mxu0 0
        %4265 = vmatpush2.bf16.msra.mxu0 0
        %4266 = vmatprep.subr.bf16.mxu0 0
        %4267 = vmatpush2.bf16.msra.mxu0 0
        %4268 = vmatprep.subr.bf16.mxu0 0
        %4269 = vmatpush2.bf16.msra.mxu0 0
        %4270 = vmatprep.subr.bf16.mxu0 0
        %4271 = vmatpush2.bf16.msra.mxu0 0
        %4272 = vmatprep.subr.bf16.mxu0 0
        %4273 = vmatpush2.bf16.msra.mxu0 0
        %4274 = vmatprep.mubr.bf16.mxu0 0
        %4275 = vmatmul.mubr.bf16.gmra.mxu0 %v2608
        %v4276 = vpop.f32.mrf.mxu0
        %v4277 = vadd.f32 %v4237, %v4276
        %v4278 = vpop.f32.mrf.mxu0
        %v4279 = vpop.f32.mrf.mxu0
        %v4280 = vpop.f32.mrf.mxu0
        %4281 = vdwg.mxu0
        %v4282 = vtanh.pop %v4033
        %v4283 = vtanh.pop %v4035
        %v4284 = vtanh.pop %v4156
        %v4285 = vtanh.pop %v4158
        %v4286 = vtanh.pop %v4277
        %v4287 = vpack.c.bf16 %v4282, %v4282
        %v4288 = vpack.c.bf16 %v4283, %v4283
        %v4289 = vpack.c.bf16 %v4284, %v4284
        %v4290 = vpack.c.bf16 %v4285, %v4285
        %v4291 = vpack.c.bf16 %v4286, %v4286
        %v4292 = vld [vmem:[#allocation7] sm:$0xff]
        %v4293 = vld [vmem:[#allocation7 + $0x8] sm:$0xff]
        %v4294 = vld [vmem:[#allocation7 + $0x10] sm:$0xf]
        %v4295 = vld [vmem:[#allocation7 + $0x14] sm:$0xff]
        %v4296 = vld [vmem:[#allocation7 + $0x1c] sm:$0xff]
        %v4297 = vld [vmem:[#allocation7 + $0x24] sm:$0xf]
        %v4298 = vld [vmem:[#allocation7 + $0x28] sm:$0xff]
        %v4299 = vld [vmem:[#allocation7 + $0x30] sm:$0xff]
        %v4300 = vld [vmem:[#allocation7 + $0x38] sm:$0xf]
        %v4301 = vld [vmem:[#allocation7 + $0x3c] sm:$0xff]
        %v4302 = vld [vmem:[#allocation7 + $0x44] sm:$0xff]
        %v4303 = vld [vmem:[#allocation7 + $0x4c] sm:$0xf]
        %v4304 = vld [vmem:[#allocation7 + $0x50] sm:$0xff]
        %v4305 = vld [vmem:[#allocation7 + $0x58] sm:$0xff]
        %v4306 = vld [vmem:[#allocation7 + $0x60] sm:$0xf]
        %v4307 = vld [vmem:[#allocation7 + $0x64] sm:$0xff]
        %v4308 = vld [vmem:[#allocation7 + $0x6c] sm:$0xff]
        %v4309 = vld [vmem:[#allocation7 + $0x74] sm:$0xf]
        %v4310 = vld [vmem:[#allocation7 + $0x78] sm:$0xff]
        %v4311 = vld [vmem:[#allocation7 + $0x80] sm:$0xff]
        %v4312 = vld [vmem:[#allocation7 + $0x88] sm:$0xf]
        %v4313 = vld [vmem:[#allocation7 + $0x8c] sm:$0xff]
        %v4314 = vld [vmem:[#allocation7 + $0x94] sm:$0xff]
        %v4315 = vld [vmem:[#allocation7 + $0x9c] sm:$0xf]
        %v4316 = vld [vmem:[#allocation7 + $0xa0] sm:$0xff]
        %v4317 = vld [vmem:[#allocation7 + $0xa8] sm:$0xff]
        %v4318 = vld [vmem:[#allocation7 + $0xb0] sm:$0xf]
        %v4319 = vld [vmem:[#allocation7 + $0xb4] sm:$0xff]
        %v4320 = vld [vmem:[#allocation7 + $0xbc] sm:$0xff]
        %v4321 = vld [vmem:[#allocation7 + $0xc4] sm:$0xf]
        %v4322 = vld [vmem:[#allocation7 + $0xc8] sm:$0xff]
        %v4323 = vld [vmem:[#allocation7 + $0xd0] sm:$0xff]
        %v4324 = vld [vmem:[#allocation7 + $0xd8] sm:$0xf]
        %v4325 = vld [vmem:[#allocation7 + $0xdc] sm:$0xff]
        %v4326 = vld [vmem:[#allocation7 + $0xe4] sm:$0xff]
        %v4327 = vld [vmem:[#allocation7 + $0xec] sm:$0xf]
        %v4328 = vld [vmem:[#allocation7 + $0xf0] sm:$0xff]
        %v4329 = vld [vmem:[#allocation7 + $0xf8] sm:$0xff]
        %v4330 = vld [vmem:[#allocation7 + $0x100] sm:$0xf]
        %v4331 = vld [vmem:[#allocation7 + $0x104] sm:$0xff]
        %v4332 = vld [vmem:[#allocation7 + $0x10c] sm:$0xff]
        %v4333 = vld [vmem:[#allocation7 + $0x114] sm:$0xf]
        %v4334 = vld [vmem:[#allocation7 + $0x118] sm:$0xff]
        %v4335 = vld [vmem:[#allocation7 + $0x120] sm:$0xff]
        %v4336 = vld [vmem:[#allocation7 + $0x128] sm:$0xf]
        %v4337 = vld [vmem:[#allocation7 + $0x12c] sm:$0xff]
        %v4338 = vld [vmem:[#allocation7 + $0x134] sm:$0xff]
        %v4339 = vld [vmem:[#allocation7 + $0x13c] sm:$0xf]
        %v4340 = vld [vmem:[#allocation7 + $0x140] sm:$0xff]
        %v4341 = vld [vmem:[#allocation7 + $0x148] sm:$0xff]
        %v4342 = vld [vmem:[#allocation7 + $0x150] sm:$0xf]
        %v4343 = vld [vmem:[#allocation7 + $0x154] sm:$0xff]
        %v4344 = vld [vmem:[#allocation7 + $0x15c] sm:$0xff]
        %v4345 = vld [vmem:[#allocation7 + $0x164] sm:$0xf]
        %v4346 = vld [vmem:[#allocation7 + $0x168] sm:$0xff]
        %v4347 = vld [vmem:[#allocation7 + $0x170] sm:$0xff]
        %v4348 = vld [vmem:[#allocation7 + $0x178] sm:$0xf]
        %v4349 = vld [vmem:[#allocation7 + $0x17c] sm:$0xff]
        %v4350 = vld [vmem:[#allocation7 + $0x184] sm:$0xff]
        %v4351 = vld [vmem:[#allocation7 + $0x18c] sm:$0xf]
        %v4352 = vld [vmem:[#allocation7 + $0x190] sm:$0xff]
        %v4353 = vld [vmem:[#allocation7 + $0x198] sm:$0xff]
        %v4354 = vld [vmem:[#allocation7 + $0x1a0] sm:$0xf]
        %v4355 = vld [vmem:[#allocation7 + $0x1a4] sm:$0xff]
        %v4356 = vld [vmem:[#allocation7 + $0x1ac] sm:$0xff]
        %v4357 = vld [vmem:[#allocation7 + $0x1b4] sm:$0xf]
        %v4358 = vld [vmem:[#allocation7 + $0x1b8] sm:$0xff]
        %v4359 = vld [vmem:[#allocation7 + $0x1c0] sm:$0xff]
        %v4360 = vld [vmem:[#allocation7 + $0x1c8] sm:$0xf]
        %v4361 = vld [vmem:[#allocation7 + $0x1cc] sm:$0xff]
        %v4362 = vld [vmem:[#allocation7 + $0x1d4] sm:$0xff]
        %v4363 = vld [vmem:[#allocation7 + $0x1dc] sm:$0xf]
        %v4364 = vld [vmem:[#allocation7 + $0x1e0] sm:$0xff]
        %v4365 = vld [vmem:[#allocation7 + $0x1e8] sm:$0xff]
        %v4366 = vld [vmem:[#allocation7 + $0x1f0] sm:$0xf]
        %v4367 = vld [vmem:[#allocation7 + $0x1f4] sm:$0xff]
        %v4368 = vld [vmem:[#allocation7 + $0x1fc] sm:$0xff]
        %v4369 = vld [vmem:[#allocation7 + $0x204] sm:$0xf]
        %v4370 = vld [vmem:[#allocation7 + $0x208] sm:$0xff]
        %v4371 = vld [vmem:[#allocation7 + $0x210] sm:$0xff]
        %v4372 = vld [vmem:[#allocation7 + $0x218] sm:$0xf]
        %v4373 = vld [vmem:[#allocation7 + $0x21c] sm:$0xff]
        %v4374 = vld [vmem:[#allocation7 + $0x224] sm:$0xff]
        %v4375 = vld [vmem:[#allocation7 + $0x22c] sm:$0xf]
        %v4376 = vld [vmem:[#allocation7 + $0x230] sm:$0xff]
        %v4377 = vld [vmem:[#allocation7 + $0x238] sm:$0xff]
        %v4378 = vld [vmem:[#allocation7 + $0x240] sm:$0xf]
        %v4379 = vld [vmem:[#allocation7 + $0x244] sm:$0xff]
        %v4380 = vld [vmem:[#allocation7 + $0x24c] sm:$0xff]
        %v4381 = vld [vmem:[#allocation7 + $0x254] sm:$0xf]
        %v4382 = vld [vmem:[#allocation7 + $0x258] sm:$0xff]
        %v4383 = vld [vmem:[#allocation7 + $0x260] sm:$0xff]
        %v4384 = vld [vmem:[#allocation7 + $0x268] sm:$0xf]
        %v4385 = vld [vmem:[#allocation7 + $0x26c] sm:$0xff]
        %v4386 = vld [vmem:[#allocation7 + $0x274] sm:$0xff]
        %v4387 = vld [vmem:[#allocation7 + $0x27c] sm:$0xf]
        %v4388 = vld [vmem:[#allocation7 + $0x280] sm:$0xff]
        %v4389 = vld [vmem:[#allocation7 + $0x288] sm:$0xff]
        %v4390 = vld [vmem:[#allocation7 + $0x290] sm:$0xf]
        %v4391 = vld [vmem:[#allocation7 + $0x294] sm:$0xff]
        %v4392 = vld [vmem:[#allocation7 + $0x29c] sm:$0xff]
        %v4393 = vld [vmem:[#allocation7 + $0x2a4] sm:$0xf]
        %v4394 = vld [vmem:[#allocation7 + $0x2a8] sm:$0xff]
        %v4395 = vld [vmem:[#allocation7 + $0x2b0] sm:$0xff]
        %v4396 = vld [vmem:[#allocation7 + $0x2b8] sm:$0xf]
        %v4397 = vld [vmem:[#allocation7 + $0x2bc] sm:$0xff]
        %v4398 = vld [vmem:[#allocation7 + $0x2c4] sm:$0xff]
        %v4399 = vld [vmem:[#allocation7 + $0x2cc] sm:$0xf]
        %v4400 = vld [vmem:[#allocation7 + $0x2d0] sm:$0xff]
        %v4401 = vld [vmem:[#allocation7 + $0x2d8] sm:$0xff]
        %v4402 = vld [vmem:[#allocation7 + $0x2e0] sm:$0xf]
        %v4403 = vld [vmem:[#allocation7 + $0x2e4] sm:$0xff]
        %v4404 = vld [vmem:[#allocation7 + $0x2ec] sm:$0xff]
        %v4405 = vld [vmem:[#allocation7 + $0x2f4] sm:$0xf]
        %v4406 = vld [vmem:[#allocation7 + $0x2f8] sm:$0xff]
        %v4407 = vld [vmem:[#allocation7 + $0x300] sm:$0xff]
        %v4408 = vld [vmem:[#allocation7 + $0x308] sm:$0xf]
        %v4409 = vld [vmem:[#allocation7 + $0x30c] sm:$0xff]
        %v4410 = vld [vmem:[#allocation7 + $0x314] sm:$0xff]
        %v4411 = vld [vmem:[#allocation7 + $0x31c] sm:$0xf]
        %v4412 = vld [vmem:[#allocation7 + $0x320] sm:$0xff]
        %v4413 = vld [vmem:[#allocation7 + $0x328] sm:$0xff]
        %v4414 = vld [vmem:[#allocation7 + $0x330] sm:$0xf]
        %v4415 = vld [vmem:[#allocation7 + $0x334] sm:$0xff]
        %v4416 = vld [vmem:[#allocation7 + $0x33c] sm:$0xff]
        %v4417 = vld [vmem:[#allocation7 + $0x344] sm:$0xf]
        %v4418 = vld [vmem:[#allocation7 + $0x348] sm:$0xff]
        %v4419 = vld [vmem:[#allocation7 + $0x350] sm:$0xff]
        %v4420 = vld [vmem:[#allocation7 + $0x358] sm:$0xf]
        %v4421 = vld [vmem:[#allocation7 + $0x35c] sm:$0xff]
        %v4422 = vld [vmem:[#allocation7 + $0x364] sm:$0xff]
        %v4423 = vld [vmem:[#allocation7 + $0x36c] sm:$0xf]
        %v4424 = vld [vmem:[#allocation7 + $0x370] sm:$0xff]
        %v4425 = vld [vmem:[#allocation7 + $0x378] sm:$0xff]
        %v4426 = vld [vmem:[#allocation7 + $0x380] sm:$0xf]
        %v4427 = vld [vmem:[#allocation7 + $0x384] sm:$0xff]
        %v4428 = vld [vmem:[#allocation7 + $0x38c] sm:$0xff]
        %v4429 = vld [vmem:[#allocation7 + $0x394] sm:$0xf]
        %v4430 = vld [vmem:[#allocation7 + $0x398] sm:$0xff]
        %v4431 = vld [vmem:[#allocation7 + $0x3a0] sm:$0xff]
        %v4432 = vld [vmem:[#allocation7 + $0x3a8] sm:$0xf]
        %v4433 = vld [vmem:[#allocation7 + $0x3ac] sm:$0xff]
        %v4434 = vld [vmem:[#allocation7 + $0x3b4] sm:$0xff]
        %v4435 = vld [vmem:[#allocation7 + $0x3bc] sm:$0xf]
        %v4436 = vld [vmem:[#allocation7 + $0x3c0] sm:$0xff]
        %v4437 = vld [vmem:[#allocation7 + $0x3c8] sm:$0xff]
        %v4438 = vld [vmem:[#allocation7 + $0x3d0] sm:$0xf]
        %v4439 = vld [vmem:[#allocation7 + $0x3d4] sm:$0xff]
        %v4440 = vld [vmem:[#allocation7 + $0x3dc] sm:$0xff]
        %v4441 = vld [vmem:[#allocation7 + $0x3e4] sm:$0xf]
        %v4442 = vld [vmem:[#allocation7 + $0x3e8] sm:$0xff]
        %v4443 = vld [vmem:[#allocation7 + $0x3f0] sm:$0xff]
        %v4444 = vld [vmem:[#allocation7 + $0x3f8] sm:$0xf]
        %v4445 = vld [vmem:[#allocation7 + $0x3fc] sm:$0xff]
        %v4446 = vld [vmem:[#allocation7 + $0x404] sm:$0xff]
        %v4447 = vld [vmem:[#allocation7 + $0x40c] sm:$0xf]
        %v4448 = vld [vmem:[#allocation7 + $0x410] sm:$0xff]
        %v4449 = vld [vmem:[#allocation7 + $0x418] sm:$0xff]
        %v4450 = vld [vmem:[#allocation7 + $0x420] sm:$0xf]
        %v4451 = vld [vmem:[#allocation7 + $0x424] sm:$0xff]
        %v4452 = vld [vmem:[#allocation7 + $0x42c] sm:$0xff]
        %v4453 = vld [vmem:[#allocation7 + $0x434] sm:$0xf]
        %v4454 = vld [vmem:[#allocation7 + $0x438] sm:$0xff]
        %v4455 = vld [vmem:[#allocation7 + $0x440] sm:$0xff]
        %v4456 = vld [vmem:[#allocation7 + $0x448] sm:$0xf]
        %v4457 = vld [vmem:[#allocation7 + $0x44c] sm:$0xff]
        %v4458 = vld [vmem:[#allocation7 + $0x454] sm:$0xff]
        %v4459 = vld [vmem:[#allocation7 + $0x45c] sm:$0xf]
        %v4460 = vld [vmem:[#allocation7 + $0x460] sm:$0xff]
        %v4461 = vld [vmem:[#allocation7 + $0x468] sm:$0xff]
        %v4462 = vld [vmem:[#allocation7 + $0x470] sm:$0xf]
        %v4463 = vld [vmem:[#allocation7 + $0x474] sm:$0xff]
        %v4464 = vld [vmem:[#allocation7 + $0x47c] sm:$0xff]
        %v4465 = vld [vmem:[#allocation7 + $0x484] sm:$0xf]
        %v4466 = vld [vmem:[#allocation7 + $0x488] sm:$0xff]
        %v4467 = vld [vmem:[#allocation7 + $0x490] sm:$0xff]
        %v4468 = vld [vmem:[#allocation7 + $0x498] sm:$0xf]
        %v4469 = vld [vmem:[#allocation7 + $0x49c] sm:$0xff]
        %v4470 = vld [vmem:[#allocation7 + $0x4a4] sm:$0xff]
        %v4471 = vld [vmem:[#allocation7 + $0x4ac] sm:$0xf]
        %v4472 = vld [vmem:[#allocation7 + $0x4b0] sm:$0xff]
        %v4473 = vld [vmem:[#allocation7 + $0x4b8] sm:$0xff]
        %v4474 = vld [vmem:[#allocation7 + $0x4c0] sm:$0xf]
        %v4475 = vld [vmem:[#allocation7 + $0x4c4] sm:$0xff]
        %v4476 = vld [vmem:[#allocation7 + $0x4cc] sm:$0xff]
        %v4477 = vld [vmem:[#allocation7 + $0x4d4] sm:$0xf]
        %v4478 = vld [vmem:[#allocation7 + $0x4d8] sm:$0xff]
        %v4479 = vld [vmem:[#allocation7 + $0x4e0] sm:$0xff]
        %v4480 = vld [vmem:[#allocation7 + $0x4e8] sm:$0xf]
        %v4481 = vld [vmem:[#allocation7 + $0x4ec] sm:$0xff]
        %v4482 = vld [vmem:[#allocation7 + $0x4f4] sm:$0xff]
        %v4483 = vld [vmem:[#allocation7 + $0x4fc] sm:$0xf]
        %v4484 = vld [vmem:[#allocation7 + $0x500] sm:$0xff]
        %v4485 = vld [vmem:[#allocation7 + $0x508] sm:$0xff]
        %v4486 = vld [vmem:[#allocation7 + $0x510] sm:$0xf]
        %v4487 = vld [vmem:[#allocation7 + $0x514] sm:$0xff]
        %v4488 = vld [vmem:[#allocation7 + $0x51c] sm:$0xff]
        %v4489 = vld [vmem:[#allocation7 + $0x524] sm:$0xf]
        %v4490 = vld [vmem:[#allocation7 + $0x528] sm:$0xff]
        %v4491 = vld [vmem:[#allocation7 + $0x530] sm:$0xff]
        %v4492 = vld [vmem:[#allocation7 + $0x538] sm:$0xf]
        %v4493 = vld [vmem:[#allocation7 + $0x53c] sm:$0xff]
        %v4494 = vld [vmem:[#allocation7 + $0x544] sm:$0xff]
        %v4495 = vld [vmem:[#allocation7 + $0x54c] sm:$0xf]
        %v4496 = vld [vmem:[#allocation7 + $0x550] sm:$0xff]
        %v4497 = vld [vmem:[#allocation7 + $0x558] sm:$0xff]
        %v4498 = vld [vmem:[#allocation7 + $0x560] sm:$0xf]
        %v4499 = vld [vmem:[#allocation7 + $0x564] sm:$0xff]
        %v4500 = vld [vmem:[#allocation7 + $0x56c] sm:$0xff]
        %v4501 = vld [vmem:[#allocation7 + $0x574] sm:$0xf]
        %v4502 = vld [vmem:[#allocation7 + $0x578] sm:$0xff]
        %v4503 = vld [vmem:[#allocation7 + $0x580] sm:$0xff]
        %v4504 = vld [vmem:[#allocation7 + $0x588] sm:$0xf]
        %v4505 = vld [vmem:[#allocation7 + $0x58c] sm:$0xff]
        %v4506 = vld [vmem:[#allocation7 + $0x594] sm:$0xff]
        %v4507 = vld [vmem:[#allocation7 + $0x59c] sm:$0xf]
        %v4508 = vld [vmem:[#allocation7 + $0x5a0] sm:$0xff]
        %v4509 = vld [vmem:[#allocation7 + $0x5a8] sm:$0xff]
        %v4510 = vld [vmem:[#allocation7 + $0x5b0] sm:$0xf]
        %v4511 = vld [vmem:[#allocation7 + $0x5b4] sm:$0xff]
        %v4512 = vld [vmem:[#allocation7 + $0x5bc] sm:$0xff]
        %v4513 = vld [vmem:[#allocation7 + $0x5c4] sm:$0xf]
        %v4514 = vld [vmem:[#allocation7 + $0x5c8] sm:$0xff]
        %v4515 = vld [vmem:[#allocation7 + $0x5d0] sm:$0xff]
        %v4516 = vld [vmem:[#allocation7 + $0x5d8] sm:$0xf]
        %v4517 = vld [vmem:[#allocation7 + $0x5dc] sm:$0xff]
        %v4518 = vld [vmem:[#allocation7 + $0x5e4] sm:$0xff]
        %v4519 = vld [vmem:[#allocation7 + $0x5ec] sm:$0xf]
        %v4520 = vld [vmem:[#allocation7 + $0x5f0] sm:$0xff]
        %v4521 = vld [vmem:[#allocation7 + $0x5f8] sm:$0xff]
        %v4522 = vld [vmem:[#allocation7 + $0x600] sm:$0xf]
        %v4523 = vld [vmem:[#allocation7 + $0x604] sm:$0xff]
        %v4524 = vld [vmem:[#allocation7 + $0x60c] sm:$0xff]
        %v4525 = vld [vmem:[#allocation7 + $0x614] sm:$0xf]
        %v4526 = vld [vmem:[#allocation7 + $0x618] sm:$0xff]
        %v4527 = vld [vmem:[#allocation7 + $0x620] sm:$0xff]
        %v4528 = vld [vmem:[#allocation7 + $0x628] sm:$0xf]
        %v4529 = vld [vmem:[#allocation7 + $0x62c] sm:$0xff]
        %v4530 = vld [vmem:[#allocation7 + $0x634] sm:$0xff]
        %v4531 = vld [vmem:[#allocation7 + $0x63c] sm:$0xf]
        %v4532 = vld [vmem:[%s8] sm:$0x1f]
        %v4534 = vlaneseq
        %v4535 = vshrl.u32 %v4534, 7
        %v4536 = vsub.s32 0, %v4535
        %v4537 = vrot.slane %v4532, %v4536
        %v4538 = vlaneseq
        %v4539 = vshrl.u32 %v4538, 7
        %v4540 = vsub.s32 1, %v4539
        %v4541 = vrot.slane %v4532, %v4540
        %v4542 = vlaneseq
        %v4543 = vshrl.u32 %v4542, 7
        %v4544 = vsub.s32 2, %v4543
        %v4545 = vrot.slane %v4532, %v4544
        %v4546 = vlaneseq
        %v4547 = vshrl.u32 %v4546, 7
        %v4548 = vsub.s32 3, %v4547
        %v4549 = vrot.slane %v4532, %v4548
        %v4550 = vlaneseq
        %v4551 = vshrl.u32 %v4550, 7
        %v4552 = vsub.s32 4, %v4551
        %v4553 = vrot.slane %v4532, %v4552
        %v4799 = vunpack.c.l.b16 %v4292
        %v4800 = vunpack.c.h.b16 %v4292
        %v4801 = vunpack.c.l.b16 %v4293
        %v4802 = vunpack.c.h.b16 %v4293
        %v4803 = vunpack.c.l.b16 %v4294
        %v4804 = vunpack.c.l.b16 %v4295
        %v4805 = vunpack.c.h.b16 %v4295
        %v4806 = vunpack.c.l.b16 %v4296
        %v4807 = vunpack.c.h.b16 %v4296
        %v4808 = vunpack.c.l.b16 %v4297
        %v4809 = vunpack.c.l.b16 %v4298
        %v4810 = vunpack.c.h.b16 %v4298
        %v4811 = vunpack.c.l.b16 %v4299
        %v4812 = vunpack.c.h.b16 %v4299
        %v4813 = vunpack.c.l.b16 %v4300
        %v4814 = vunpack.c.l.b16 %v4301
        %v4815 = vunpack.c.h.b16 %v4301
        %v4816 = vunpack.c.l.b16 %v4302
        %v4817 = vunpack.c.h.b16 %v4302
        %v4818 = vunpack.c.l.b16 %v4303
        %v4819 = vunpack.c.l.b16 %v4304
        %v4820 = vunpack.c.h.b16 %v4304
        %v4821 = vunpack.c.l.b16 %v4305
        %v4822 = vunpack.c.h.b16 %v4305
        %v4823 = vunpack.c.l.b16 %v4306
        %v4824 = vunpack.c.l.b16 %v4307
        %v4825 = vunpack.c.h.b16 %v4307
        %v4826 = vunpack.c.l.b16 %v4308
        %v4827 = vunpack.c.h.b16 %v4308
        %v4828 = vunpack.c.l.b16 %v4309
        %v4829 = vunpack.c.l.b16 %v4310
        %v4830 = vunpack.c.h.b16 %v4310
        %v4831 = vunpack.c.l.b16 %v4311
        %v4832 = vunpack.c.h.b16 %v4311
        %v4833 = vunpack.c.l.b16 %v4312
        %v4834 = vunpack.c.l.b16 %v4313
        %v4835 = vunpack.c.h.b16 %v4313
        %v4836 = vunpack.c.l.b16 %v4314
        %v4837 = vunpack.c.h.b16 %v4314
        %v4838 = vunpack.c.l.b16 %v4315
        %v4839 = vunpack.c.l.b16 %v4316
        %v4840 = vunpack.c.h.b16 %v4316
        %v4841 = vunpack.c.l.b16 %v4317
        %v4842 = vunpack.c.h.b16 %v4317
        %v4843 = vunpack.c.l.b16 %v4318
        %v4844 = vunpack.c.l.b16 %v4319
        %v4845 = vunpack.c.h.b16 %v4319
        %v4846 = vunpack.c.l.b16 %v4320
        %v4847 = vunpack.c.h.b16 %v4320
        %v4848 = vunpack.c.l.b16 %v4321
        %v4849 = vunpack.c.l.b16 %v4322
        %v4850 = vunpack.c.h.b16 %v4322
        %v4851 = vunpack.c.l.b16 %v4323
        %v4852 = vunpack.c.h.b16 %v4323
        %v4853 = vunpack.c.l.b16 %v4324
        %v4854 = vunpack.c.l.b16 %v4325
        %v4855 = vunpack.c.h.b16 %v4325
        %v4856 = vunpack.c.l.b16 %v4326
        %v4857 = vunpack.c.h.b16 %v4326
        %v4858 = vunpack.c.l.b16 %v4327
        %v4859 = vunpack.c.l.b16 %v4328
        %v4860 = vunpack.c.h.b16 %v4328
        %v4861 = vunpack.c.l.b16 %v4329
        %v4862 = vunpack.c.h.b16 %v4329
        %v4863 = vunpack.c.l.b16 %v4330
        %v4864 = vunpack.c.l.b16 %v4331
        %v4865 = vunpack.c.h.b16 %v4331
        %v4866 = vunpack.c.l.b16 %v4332
        %v4867 = vunpack.c.h.b16 %v4332
        %v4868 = vunpack.c.l.b16 %v4333
        %v4869 = vunpack.c.l.b16 %v4334
        %v4870 = vunpack.c.h.b16 %v4334
        %v4871 = vunpack.c.l.b16 %v4335
        %v4872 = vunpack.c.h.b16 %v4335
        %v4873 = vunpack.c.l.b16 %v4336
        %v4874 = vunpack.c.l.b16 %v4337
        %v4875 = vunpack.c.h.b16 %v4337
        %v4876 = vunpack.c.l.b16 %v4338
        %v4877 = vunpack.c.h.b16 %v4338
        %v4878 = vunpack.c.l.b16 %v4339
        %v4879 = vunpack.c.l.b16 %v4340
        %v4880 = vunpack.c.h.b16 %v4340
        %v4881 = vunpack.c.l.b16 %v4341
        %v4882 = vunpack.c.h.b16 %v4341
        %v4883 = vunpack.c.l.b16 %v4342
        %v4884 = vunpack.c.l.b16 %v4343
        %v4885 = vunpack.c.h.b16 %v4343
        %v4886 = vunpack.c.l.b16 %v4344
        %v4887 = vunpack.c.h.b16 %v4344
        %v4888 = vunpack.c.l.b16 %v4345
        %v4889 = vunpack.c.l.b16 %v4346
        %v4890 = vunpack.c.h.b16 %v4346
        %v4891 = vunpack.c.l.b16 %v4347
        %v4892 = vunpack.c.h.b16 %v4347
        %v4893 = vunpack.c.l.b16 %v4348
        %v4894 = vunpack.c.l.b16 %v4349
        %v4895 = vunpack.c.h.b16 %v4349
        %v4896 = vunpack.c.l.b16 %v4350
        %v4897 = vunpack.c.h.b16 %v4350
        %v4898 = vunpack.c.l.b16 %v4351
        %v4899 = vunpack.c.l.b16 %v4352
        %v4900 = vunpack.c.h.b16 %v4352
        %v4901 = vunpack.c.l.b16 %v4353
        %v4902 = vunpack.c.h.b16 %v4353
        %v4903 = vunpack.c.l.b16 %v4354
        %v4904 = vunpack.c.l.b16 %v4355
        %v4905 = vunpack.c.h.b16 %v4355
        %v4906 = vunpack.c.l.b16 %v4356
        %v4907 = vunpack.c.h.b16 %v4356
        %v4908 = vunpack.c.l.b16 %v4357
        %v4909 = vunpack.c.l.b16 %v4358
        %v4910 = vunpack.c.h.b16 %v4358
        %v4911 = vunpack.c.l.b16 %v4359
        %v4912 = vunpack.c.h.b16 %v4359
        %v4913 = vunpack.c.l.b16 %v4360
        %v4914 = vunpack.c.l.b16 %v4361
        %v4915 = vunpack.c.h.b16 %v4361
        %v4916 = vunpack.c.l.b16 %v4362
        %v4917 = vunpack.c.h.b16 %v4362
        %v4918 = vunpack.c.l.b16 %v4363
        %v4919 = vunpack.c.l.b16 %v4364
        %v4920 = vunpack.c.h.b16 %v4364
        %v4921 = vunpack.c.l.b16 %v4365
        %v4922 = vunpack.c.h.b16 %v4365
        %v4923 = vunpack.c.l.b16 %v4366
        %v4924 = vunpack.c.l.b16 %v4367
        %v4925 = vunpack.c.h.b16 %v4367
        %v4926 = vunpack.c.l.b16 %v4368
        %v4927 = vunpack.c.h.b16 %v4368
        %v4928 = vunpack.c.l.b16 %v4369
        %v4929 = vunpack.c.l.b16 %v4370
        %v4930 = vunpack.c.h.b16 %v4370
        %v4931 = vunpack.c.l.b16 %v4371
        %v4932 = vunpack.c.h.b16 %v4371
        %v4933 = vunpack.c.l.b16 %v4372
        %v4934 = vunpack.c.l.b16 %v4373
        %v4935 = vunpack.c.h.b16 %v4373
        %v4936 = vunpack.c.l.b16 %v4374
        %v4937 = vunpack.c.h.b16 %v4374
        %v4938 = vunpack.c.l.b16 %v4375
        %v4939 = vunpack.c.l.b16 %v4376
        %v4940 = vunpack.c.h.b16 %v4376
        %v4941 = vunpack.c.l.b16 %v4377
        %v4942 = vunpack.c.h.b16 %v4377
        %v4943 = vunpack.c.l.b16 %v4378
        %v4944 = vunpack.c.l.b16 %v4379
        %v4945 = vunpack.c.h.b16 %v4379
        %v4946 = vunpack.c.l.b16 %v4380
        %v4947 = vunpack.c.h.b16 %v4380
        %v4948 = vunpack.c.l.b16 %v4381
        %v4949 = vunpack.c.l.b16 %v4382
        %v4950 = vunpack.c.h.b16 %v4382
        %v4951 = vunpack.c.l.b16 %v4383
        %v4952 = vunpack.c.h.b16 %v4383
        %v4953 = vunpack.c.l.b16 %v4384
        %v4954 = vunpack.c.l.b16 %v4385
        %v4955 = vunpack.c.h.b16 %v4385
        %v4956 = vunpack.c.l.b16 %v4386
        %v4957 = vunpack.c.h.b16 %v4386
        %v4958 = vunpack.c.l.b16 %v4387
        %v4959 = vunpack.c.l.b16 %v4388
        %v4960 = vunpack.c.h.b16 %v4388
        %v4961 = vunpack.c.l.b16 %v4389
        %v4962 = vunpack.c.h.b16 %v4389
        %v4963 = vunpack.c.l.b16 %v4390
        %v4964 = vunpack.c.l.b16 %v4391
        %v4965 = vunpack.c.h.b16 %v4391
        %v4966 = vunpack.c.l.b16 %v4392
        %v4967 = vunpack.c.h.b16 %v4392
        %v4968 = vunpack.c.l.b16 %v4393
        %v4969 = vunpack.c.l.b16 %v4394
        %v4970 = vunpack.c.h.b16 %v4394
        %v4971 = vunpack.c.l.b16 %v4395
        %v4972 = vunpack.c.h.b16 %v4395
        %v4973 = vunpack.c.l.b16 %v4396
        %v4974 = vunpack.c.l.b16 %v4397
        %v4975 = vunpack.c.h.b16 %v4397
        %v4976 = vunpack.c.l.b16 %v4398
        %v4977 = vunpack.c.h.b16 %v4398
        %v4978 = vunpack.c.l.b16 %v4399
        %v4979 = vunpack.c.l.b16 %v4400
        %v4980 = vunpack.c.h.b16 %v4400
        %v4981 = vunpack.c.l.b16 %v4401
        %v4982 = vunpack.c.h.b16 %v4401
        %v4983 = vunpack.c.l.b16 %v4402
        %v4984 = vunpack.c.l.b16 %v4403
        %v4985 = vunpack.c.h.b16 %v4403
        %v4986 = vunpack.c.l.b16 %v4404
        %v4987 = vunpack.c.h.b16 %v4404
        %v4988 = vunpack.c.l.b16 %v4405
        %v4989 = vunpack.c.l.b16 %v4406
        %v4990 = vunpack.c.h.b16 %v4406
        %v4991 = vunpack.c.l.b16 %v4407
        %v4992 = vunpack.c.h.b16 %v4407
        %v4993 = vunpack.c.l.b16 %v4408
        %v4994 = vunpack.c.l.b16 %v4409
        %v4995 = vunpack.c.h.b16 %v4409
        %v4996 = vunpack.c.l.b16 %v4410
        %v4997 = vunpack.c.h.b16 %v4410
        %v4998 = vunpack.c.l.b16 %v4411
        %v4999 = vunpack.c.l.b16 %v4412
        %v5000 = vunpack.c.h.b16 %v4412
        %v5001 = vunpack.c.l.b16 %v4413
        %v5002 = vunpack.c.h.b16 %v4413
        %v5003 = vunpack.c.l.b16 %v4414
        %v5004 = vunpack.c.l.b16 %v4415
        %v5005 = vunpack.c.h.b16 %v4415
        %v5006 = vunpack.c.l.b16 %v4416
        %v5007 = vunpack.c.h.b16 %v4416
        %v5008 = vunpack.c.l.b16 %v4417
        %v5009 = vunpack.c.l.b16 %v4418
        %v5010 = vunpack.c.h.b16 %v4418
        %v5011 = vunpack.c.l.b16 %v4419
        %v5012 = vunpack.c.h.b16 %v4419
        %v5013 = vunpack.c.l.b16 %v4420
        %v5014 = vunpack.c.l.b16 %v4421
        %v5015 = vunpack.c.h.b16 %v4421
        %v5016 = vunpack.c.l.b16 %v4422
        %v5017 = vunpack.c.h.b16 %v4422
        %v5018 = vunpack.c.l.b16 %v4423
        %v5019 = vunpack.c.l.b16 %v4424
        %v5020 = vunpack.c.h.b16 %v4424
        %v5021 = vunpack.c.l.b16 %v4425
        %v5022 = vunpack.c.h.b16 %v4425
        %v5023 = vunpack.c.l.b16 %v4426
        %v5024 = vunpack.c.l.b16 %v4427
        %v5025 = vunpack.c.h.b16 %v4427
        %v5026 = vunpack.c.l.b16 %v4428
        %v5027 = vunpack.c.h.b16 %v4428
        %v5028 = vunpack.c.l.b16 %v4429
        %v5029 = vunpack.c.l.b16 %v4430
        %v5030 = vunpack.c.h.b16 %v4430
        %v5031 = vunpack.c.l.b16 %v4431
        %v5032 = vunpack.c.h.b16 %v4431
        %v5033 = vunpack.c.l.b16 %v4432
        %v5034 = vunpack.c.l.b16 %v4433
        %v5035 = vunpack.c.h.b16 %v4433
        %v5036 = vunpack.c.l.b16 %v4434
        %v5037 = vunpack.c.h.b16 %v4434
        %v5038 = vunpack.c.l.b16 %v4435
        %v5039 = vunpack.c.l.b16 %v4436
        %v5040 = vunpack.c.h.b16 %v4436
        %v5041 = vunpack.c.l.b16 %v4437
        %v5042 = vunpack.c.h.b16 %v4437
        %v5043 = vunpack.c.l.b16 %v4438
        %v5044 = vunpack.c.l.b16 %v4439
        %v5045 = vunpack.c.h.b16 %v4439
        %v5046 = vunpack.c.l.b16 %v4440
        %v5047 = vunpack.c.h.b16 %v4440
        %v5048 = vunpack.c.l.b16 %v4441
        %v5049 = vunpack.c.l.b16 %v4442
        %v5050 = vunpack.c.h.b16 %v4442
        %v5051 = vunpack.c.l.b16 %v4443
        %v5052 = vunpack.c.h.b16 %v4443
        %v5053 = vunpack.c.l.b16 %v4444
        %v5054 = vunpack.c.l.b16 %v4445
        %v5055 = vunpack.c.h.b16 %v4445
        %v5056 = vunpack.c.l.b16 %v4446
        %v5057 = vunpack.c.h.b16 %v4446
        %v5058 = vunpack.c.l.b16 %v4447
        %v5059 = vunpack.c.l.b16 %v4448
        %v5060 = vunpack.c.h.b16 %v4448
        %v5061 = vunpack.c.l.b16 %v4449
        %v5062 = vunpack.c.h.b16 %v4449
        %v5063 = vunpack.c.l.b16 %v4450
        %v5064 = vunpack.c.l.b16 %v4451
        %v5065 = vunpack.c.h.b16 %v4451
        %v5066 = vunpack.c.l.b16 %v4452
        %v5067 = vunpack.c.h.b16 %v4452
        %v5068 = vunpack.c.l.b16 %v4453
        %v5069 = vunpack.c.l.b16 %v4454
        %v5070 = vunpack.c.h.b16 %v4454
        %v5071 = vunpack.c.l.b16 %v4455
        %v5072 = vunpack.c.h.b16 %v4455
        %v5073 = vunpack.c.l.b16 %v4456
        %v5074 = vunpack.c.l.b16 %v4457
        %v5075 = vunpack.c.h.b16 %v4457
        %v5076 = vunpack.c.l.b16 %v4458
        %v5077 = vunpack.c.h.b16 %v4458
        %v5078 = vunpack.c.l.b16 %v4459
        %v5079 = vunpack.c.l.b16 %v4460
        %v5080 = vunpack.c.h.b16 %v4460
        %v5081 = vunpack.c.l.b16 %v4461
        %v5082 = vunpack.c.h.b16 %v4461
        %v5083 = vunpack.c.l.b16 %v4462
        %v5084 = vunpack.c.l.b16 %v4463
        %v5085 = vunpack.c.h.b16 %v4463
        %v5086 = vunpack.c.l.b16 %v4464
        %v5087 = vunpack.c.h.b16 %v4464
        %v5088 = vunpack.c.l.b16 %v4465
        %v5089 = vunpack.c.l.b16 %v4466
        %v5090 = vunpack.c.h.b16 %v4466
        %v5091 = vunpack.c.l.b16 %v4467
        %v5092 = vunpack.c.h.b16 %v4467
        %v5093 = vunpack.c.l.b16 %v4468
        %v5094 = vunpack.c.l.b16 %v4469
        %v5095 = vunpack.c.h.b16 %v4469
        %v5096 = vunpack.c.l.b16 %v4470
        %v5097 = vunpack.c.h.b16 %v4470
        %v5098 = vunpack.c.l.b16 %v4471
        %v5099 = vunpack.c.l.b16 %v4472
        %v5100 = vunpack.c.h.b16 %v4472
        %v5101 = vunpack.c.l.b16 %v4473
        %v5102 = vunpack.c.h.b16 %v4473
        %v5103 = vunpack.c.l.b16 %v4474
        %v5104 = vunpack.c.l.b16 %v4475
        %v5105 = vunpack.c.h.b16 %v4475
        %v5106 = vunpack.c.l.b16 %v4476
        %v5107 = vunpack.c.h.b16 %v4476
        %v5108 = vunpack.c.l.b16 %v4477
        %v5109 = vunpack.c.l.b16 %v4478
        %v5110 = vunpack.c.h.b16 %v4478
        %v5111 = vunpack.c.l.b16 %v4479
        %v5112 = vunpack.c.h.b16 %v4479
        %v5113 = vunpack.c.l.b16 %v4480
        %v5114 = vunpack.c.l.b16 %v4481
        %v5115 = vunpack.c.h.b16 %v4481
        %v5116 = vunpack.c.l.b16 %v4482
        %v5117 = vunpack.c.h.b16 %v4482
        %v5118 = vunpack.c.l.b16 %v4483
        %v5119 = vunpack.c.l.b16 %v4484
        %v5120 = vunpack.c.h.b16 %v4484
        %v5121 = vunpack.c.l.b16 %v4485
        %v5122 = vunpack.c.h.b16 %v4485
        %v5123 = vunpack.c.l.b16 %v4486
        %v5124 = vunpack.c.l.b16 %v4487
        %v5125 = vunpack.c.h.b16 %v4487
        %v5126 = vunpack.c.l.b16 %v4488
        %v5127 = vunpack.c.h.b16 %v4488
        %v5128 = vunpack.c.l.b16 %v4489
        %v5129 = vunpack.c.l.b16 %v4490
        %v5130 = vunpack.c.h.b16 %v4490
        %v5131 = vunpack.c.l.b16 %v4491
        %v5132 = vunpack.c.h.b16 %v4491
        %v5133 = vunpack.c.l.b16 %v4492
        %v5134 = vunpack.c.l.b16 %v4493
        %v5135 = vunpack.c.h.b16 %v4493
        %v5136 = vunpack.c.l.b16 %v4494
        %v5137 = vunpack.c.h.b16 %v4494
        %v5138 = vunpack.c.l.b16 %v4495
        %v5139 = vunpack.c.l.b16 %v4496
        %v5140 = vunpack.c.h.b16 %v4496
        %v5141 = vunpack.c.l.b16 %v4497
        %v5142 = vunpack.c.h.b16 %v4497
        %v5143 = vunpack.c.l.b16 %v4498
        %v5144 = vunpack.c.l.b16 %v4499
        %v5145 = vunpack.c.h.b16 %v4499
        %v5146 = vunpack.c.l.b16 %v4500
        %v5147 = vunpack.c.h.b16 %v4500
        %v5148 = vunpack.c.l.b16 %v4501
        %v5149 = vunpack.c.l.b16 %v4502
        %v5150 = vunpack.c.h.b16 %v4502
        %v5151 = vunpack.c.l.b16 %v4503
        %v5152 = vunpack.c.h.b16 %v4503
        %v5153 = vunpack.c.l.b16 %v4504
        %v5154 = vunpack.c.l.b16 %v4505
        %v5155 = vunpack.c.h.b16 %v4505
        %v5156 = vunpack.c.l.b16 %v4506
        %v5157 = vunpack.c.h.b16 %v4506
        %v5158 = vunpack.c.l.b16 %v4507
        %v5159 = vunpack.c.l.b16 %v4508
        %v5160 = vunpack.c.h.b16 %v4508
        %v5161 = vunpack.c.l.b16 %v4509
        %v5162 = vunpack.c.h.b16 %v4509
        %v5163 = vunpack.c.l.b16 %v4510
        %v5164 = vunpack.c.l.b16 %v4511
        %v5165 = vunpack.c.h.b16 %v4511
        %v5166 = vunpack.c.l.b16 %v4512
        %v5167 = vunpack.c.h.b16 %v4512
        %v5168 = vunpack.c.l.b16 %v4513
        %v5169 = vunpack.c.l.b16 %v4514
        %v5170 = vunpack.c.h.b16 %v4514
        %v5171 = vunpack.c.l.b16 %v4515
        %v5172 = vunpack.c.h.b16 %v4515
        %v5173 = vunpack.c.l.b16 %v4516
        %v5174 = vunpack.c.l.b16 %v4517
        %v5175 = vunpack.c.h.b16 %v4517
        %v5176 = vunpack.c.l.b16 %v4518
        %v5177 = vunpack.c.h.b16 %v4518
        %v5178 = vunpack.c.l.b16 %v4519
        %v5179 = vunpack.c.l.b16 %v4520
        %v5180 = vunpack.c.h.b16 %v4520
        %v5181 = vunpack.c.l.b16 %v4521
        %v5182 = vunpack.c.h.b16 %v4521
        %v5183 = vunpack.c.l.b16 %v4522
        %v5184 = vunpack.c.l.b16 %v4523
        %v5185 = vunpack.c.h.b16 %v4523
        %v5186 = vunpack.c.l.b16 %v4524
        %v5187 = vunpack.c.h.b16 %v4524
        %v5188 = vunpack.c.l.b16 %v4525
        %v5189 = vunpack.c.l.b16 %v4526
        %v5190 = vunpack.c.h.b16 %v4526
        %v5191 = vunpack.c.l.b16 %v4527
        %v5192 = vunpack.c.h.b16 %v4527
        %v5193 = vunpack.c.l.b16 %v4528
        %v5194 = vunpack.c.l.b16 %v4529
        %v5195 = vunpack.c.h.b16 %v4529
        %v5196 = vunpack.c.l.b16 %v4530
        %v5197 = vunpack.c.h.b16 %v4530
        %v5198 = vunpack.c.l.b16 %v4531
        %v5199 = vpack.c.b16 %v4804, %v4799
        %v5200 = vpack.c.b16 %v4805, %v4800
        %v5201 = vpack.c.b16 %v4806, %v4801
        %v5202 = vpack.c.b16 %v4807, %v4802
        %v5203 = vpack.c.b16 %v4808, %v4803
        %v5204 = vpack.c.b16 %v4814, %v4809
        %v5205 = vpack.c.b16 %v4815, %v4810
        %v5206 = vpack.c.b16 %v4816, %v4811
        %v5207 = vpack.c.b16 %v4817, %v4812
        %v5208 = vpack.c.b16 %v4818, %v4813
        %v5209 = vpack.c.b16 %v4824, %v4819
        %v5210 = vpack.c.b16 %v4825, %v4820
        %v5211 = vpack.c.b16 %v4826, %v4821
        %v5212 = vpack.c.b16 %v4827, %v4822
        %v5213 = vpack.c.b16 %v4828, %v4823
        %v5214 = vpack.c.b16 %v4834, %v4829
        %v5215 = vpack.c.b16 %v4835, %v4830
        %v5216 = vpack.c.b16 %v4836, %v4831
        %v5217 = vpack.c.b16 %v4837, %v4832
        %v5218 = vpack.c.b16 %v4838, %v4833
        %v5219 = vpack.c.b16 %v4844, %v4839
        %v5220 = vpack.c.b16 %v4845, %v4840
        %v5221 = vpack.c.b16 %v4846, %v4841
        %v5222 = vpack.c.b16 %v4847, %v4842
        %v5223 = vpack.c.b16 %v4848, %v4843
        %v5224 = vpack.c.b16 %v4854, %v4849
        %v5225 = vpack.c.b16 %v4855, %v4850
        %v5226 = vpack.c.b16 %v4856, %v4851
        %v5227 = vpack.c.b16 %v4857, %v4852
        %v5228 = vpack.c.b16 %v4858, %v4853
        %v5229 = vpack.c.b16 %v4864, %v4859
        %v5230 = vpack.c.b16 %v4865, %v4860
        %v5231 = vpack.c.b16 %v4866, %v4861
        %v5232 = vpack.c.b16 %v4867, %v4862
        %v5233 = vpack.c.b16 %v4868, %v4863
        %v5234 = vpack.c.b16 %v4874, %v4869
        %v5235 = vpack.c.b16 %v4875, %v4870
        %v5236 = vpack.c.b16 %v4876, %v4871
        %v5237 = vpack.c.b16 %v4877, %v4872
        %v5238 = vpack.c.b16 %v4878, %v4873
        %v5239 = vpack.c.b16 %v4884, %v4879
        %v5240 = vpack.c.b16 %v4885, %v4880
        %v5241 = vpack.c.b16 %v4886, %v4881
        %v5242 = vpack.c.b16 %v4887, %v4882
        %v5243 = vpack.c.b16 %v4888, %v4883
        %v5244 = vpack.c.b16 %v4894, %v4889
        %v5245 = vpack.c.b16 %v4895, %v4890
        %v5246 = vpack.c.b16 %v4896, %v4891
        %v5247 = vpack.c.b16 %v4897, %v4892
        %v5248 = vpack.c.b16 %v4898, %v4893
        %v5249 = vpack.c.b16 %v4904, %v4899
        %v5250 = vpack.c.b16 %v4905, %v4900
        %v5251 = vpack.c.b16 %v4906, %v4901
        %v5252 = vpack.c.b16 %v4907, %v4902
        %v5253 = vpack.c.b16 %v4908, %v4903
        %v5254 = vpack.c.b16 %v4914, %v4909
        %v5255 = vpack.c.b16 %v4915, %v4910
        %v5256 = vpack.c.b16 %v4916, %v4911
        %v5257 = vpack.c.b16 %v4917, %v4912
        %v5258 = vpack.c.b16 %v4918, %v4913
        %v5259 = vpack.c.b16 %v4924, %v4919
        %v5260 = vpack.c.b16 %v4925, %v4920
        %v5261 = vpack.c.b16 %v4926, %v4921
        %v5262 = vpack.c.b16 %v4927, %v4922
        %v5263 = vpack.c.b16 %v4928, %v4923
        %v5264 = vpack.c.b16 %v4934, %v4929
        %v5265 = vpack.c.b16 %v4935, %v4930
        %v5266 = vpack.c.b16 %v4936, %v4931
        %v5267 = vpack.c.b16 %v4937, %v4932
        %v5268 = vpack.c.b16 %v4938, %v4933
        %v5269 = vpack.c.b16 %v4944, %v4939
        %v5270 = vpack.c.b16 %v4945, %v4940
        %v5271 = vpack.c.b16 %v4946, %v4941
        %v5272 = vpack.c.b16 %v4947, %v4942
        %v5273 = vpack.c.b16 %v4948, %v4943
        %v5274 = vpack.c.b16 %v4954, %v4949
        %v5275 = vpack.c.b16 %v4955, %v4950
        %v5276 = vpack.c.b16 %v4956, %v4951
        %v5277 = vpack.c.b16 %v4957, %v4952
        %v5278 = vpack.c.b16 %v4958, %v4953
        %v5279 = vpack.c.b16 %v4964, %v4959
        %v5280 = vpack.c.b16 %v4965, %v4960
        %v5281 = vpack.c.b16 %v4966, %v4961
        %v5282 = vpack.c.b16 %v4967, %v4962
        %v5283 = vpack.c.b16 %v4968, %v4963
        %v5284 = vpack.c.b16 %v4974, %v4969
        %v5285 = vpack.c.b16 %v4975, %v4970
        %v5286 = vpack.c.b16 %v4976, %v4971
        %v5287 = vpack.c.b16 %v4977, %v4972
        %v5288 = vpack.c.b16 %v4978, %v4973
        %v5289 = vpack.c.b16 %v4984, %v4979
        %v5290 = vpack.c.b16 %v4985, %v4980
        %v5291 = vpack.c.b16 %v4986, %v4981
        %v5292 = vpack.c.b16 %v4987, %v4982
        %v5293 = vpack.c.b16 %v4988, %v4983
        %v5294 = vpack.c.b16 %v4994, %v4989
        %v5295 = vpack.c.b16 %v4995, %v4990
        %v5296 = vpack.c.b16 %v4996, %v4991
        %v5297 = vpack.c.b16 %v4997, %v4992
        %v5298 = vpack.c.b16 %v4998, %v4993
        %v5299 = vpack.c.b16 %v5004, %v4999
        %v5300 = vpack.c.b16 %v5005, %v5000
        %v5301 = vpack.c.b16 %v5006, %v5001
        %v5302 = vpack.c.b16 %v5007, %v5002
        %v5303 = vpack.c.b16 %v5008, %v5003
        %v5304 = vpack.c.b16 %v5014, %v5009
        %v5305 = vpack.c.b16 %v5015, %v5010
        %v5306 = vpack.c.b16 %v5016, %v5011
        %v5307 = vpack.c.b16 %v5017, %v5012
        %v5308 = vpack.c.b16 %v5018, %v5013
        %v5309 = vpack.c.b16 %v5024, %v5019
        %v5310 = vpack.c.b16 %v5025, %v5020
        %v5311 = vpack.c.b16 %v5026, %v5021
        %v5312 = vpack.c.b16 %v5027, %v5022
        %v5313 = vpack.c.b16 %v5028, %v5023
        %v5314 = vpack.c.b16 %v5034, %v5029
        %v5315 = vpack.c.b16 %v5035, %v5030
        %v5316 = vpack.c.b16 %v5036, %v5031
        %v5317 = vpack.c.b16 %v5037, %v5032
        %v5318 = vpack.c.b16 %v5038, %v5033
        %v5319 = vpack.c.b16 %v5044, %v5039
        %v5320 = vpack.c.b16 %v5045, %v5040
        %v5321 = vpack.c.b16 %v5046, %v5041
        %v5322 = vpack.c.b16 %v5047, %v5042
        %v5323 = vpack.c.b16 %v5048, %v5043
        %v5324 = vpack.c.b16 %v5054, %v5049
        %v5325 = vpack.c.b16 %v5055, %v5050
        %v5326 = vpack.c.b16 %v5056, %v5051
        %v5327 = vpack.c.b16 %v5057, %v5052
        %v5328 = vpack.c.b16 %v5058, %v5053
        %v5329 = vpack.c.b16 %v5064, %v5059
        %v5330 = vpack.c.b16 %v5065, %v5060
        %v5331 = vpack.c.b16 %v5066, %v5061
        %v5332 = vpack.c.b16 %v5067, %v5062
        %v5333 = vpack.c.b16 %v5068, %v5063
        %v5334 = vpack.c.b16 %v5074, %v5069
        %v5335 = vpack.c.b16 %v5075, %v5070
        %v5336 = vpack.c.b16 %v5076, %v5071
        %v5337 = vpack.c.b16 %v5077, %v5072
        %v5338 = vpack.c.b16 %v5078, %v5073
        %v5339 = vpack.c.b16 %v5084, %v5079
        %v5340 = vpack.c.b16 %v5085, %v5080
        %v5341 = vpack.c.b16 %v5086, %v5081
        %v5342 = vpack.c.b16 %v5087, %v5082
        %v5343 = vpack.c.b16 %v5088, %v5083
        %v5344 = vpack.c.b16 %v5094, %v5089
        %v5345 = vpack.c.b16 %v5095, %v5090
        %v5346 = vpack.c.b16 %v5096, %v5091
        %v5347 = vpack.c.b16 %v5097, %v5092
        %v5348 = vpack.c.b16 %v5098, %v5093
        %v5349 = vpack.c.b16 %v5104, %v5099
        %v5350 = vpack.c.b16 %v5105, %v5100
        %v5351 = vpack.c.b16 %v5106, %v5101
        %v5352 = vpack.c.b16 %v5107, %v5102
        %v5353 = vpack.c.b16 %v5108, %v5103
        %v5354 = vpack.c.b16 %v5114, %v5109
        %v5355 = vpack.c.b16 %v5115, %v5110
        %v5356 = vpack.c.b16 %v5116, %v5111
        %v5357 = vpack.c.b16 %v5117, %v5112
        %v5358 = vpack.c.b16 %v5118, %v5113
        %v5359 = vpack.c.b16 %v5124, %v5119
        %v5360 = vpack.c.b16 %v5125, %v5120
        %v5361 = vpack.c.b16 %v5126, %v5121
        %v5362 = vpack.c.b16 %v5127, %v5122
        %v5363 = vpack.c.b16 %v5128, %v5123
        %v5364 = vpack.c.b16 %v5134, %v5129
        %v5365 = vpack.c.b16 %v5135, %v5130
        %v5366 = vpack.c.b16 %v5136, %v5131
        %v5367 = vpack.c.b16 %v5137, %v5132
        %v5368 = vpack.c.b16 %v5138, %v5133
        %v5369 = vpack.c.b16 %v5144, %v5139
        %v5370 = vpack.c.b16 %v5145, %v5140
        %v5371 = vpack.c.b16 %v5146, %v5141
        %v5372 = vpack.c.b16 %v5147, %v5142
        %v5373 = vpack.c.b16 %v5148, %v5143
        %v5374 = vpack.c.b16 %v5154, %v5149
        %v5375 = vpack.c.b16 %v5155, %v5150
        %v5376 = vpack.c.b16 %v5156, %v5151
        %v5377 = vpack.c.b16 %v5157, %v5152
        %v5378 = vpack.c.b16 %v5158, %v5153
        %v5379 = vpack.c.b16 %v5164, %v5159
        %v5380 = vpack.c.b16 %v5165, %v5160
        %v5381 = vpack.c.b16 %v5166, %v5161
        %v5382 = vpack.c.b16 %v5167, %v5162
        %v5383 = vpack.c.b16 %v5168, %v5163
        %v5384 = vpack.c.b16 %v5174, %v5169
        %v5385 = vpack.c.b16 %v5175, %v5170
        %v5386 = vpack.c.b16 %v5176, %v5171
        %v5387 = vpack.c.b16 %v5177, %v5172
        %v5388 = vpack.c.b16 %v5178, %v5173
        %v5389 = vpack.c.b16 %v5184, %v5179
        %v5390 = vpack.c.b16 %v5185, %v5180
        %v5391 = vpack.c.b16 %v5186, %v5181
        %v5392 = vpack.c.b16 %v5187, %v5182
        %v5393 = vpack.c.b16 %v5188, %v5183
        %v5394 = vpack.c.b16 %v5194, %v5189
        %v5395 = vpack.c.b16 %v5195, %v5190
        %v5396 = vpack.c.b16 %v5196, %v5191
        %v5397 = vpack.c.b16 %v5197, %v5192
        %v5398 = vpack.c.b16 %v5198, %v5193
        %5599 = vmatprep.subr.bf16.mxu0 %v5235
        %5600 = vmatpush1.bf16.msra.mxu0 %v5234
        %5601 = vmatprep.subr.bf16.mxu0 %v5230
        %5602 = vmatpush1.bf16.msra.mxu0 %v5229
        %5603 = vmatprep.subr.bf16.mxu0 %v5225
        %5604 = vmatpush1.bf16.msra.mxu0 %v5224
        %5605 = vmatprep.subr.bf16.mxu0 %v5220
        %5606 = vmatpush1.bf16.msra.mxu0 %v5219
        %5607 = vmatprep.subr.bf16.mxu0 %v5215
        %5608 = vmatpush1.bf16.msra.mxu0 %v5214
        %5609 = vmatprep.subr.bf16.mxu0 %v5210
        %5610 = vmatpush1.bf16.msra.mxu0 %v5209
        %5611 = vmatprep.subr.bf16.mxu0 %v5205
        %5612 = vmatpush1.bf16.msra.mxu0 %v5204
        %5613 = vmatprep.subr.bf16.mxu0 %v5200
        %5614 = vmatpush1.bf16.msra.mxu0 %v5199
        %5615 = vmatprep.subr.bf16.mxu0 %v5275
        %5616 = vmatpush2.bf16.msra.mxu0 %v5274
        %5617 = vmatprep.subr.bf16.mxu0 %v5270
        %5618 = vmatpush2.bf16.msra.mxu0 %v5269
        %5619 = vmatprep.subr.bf16.mxu0 %v5265
        %5620 = vmatpush2.bf16.msra.mxu0 %v5264
        %5621 = vmatprep.subr.bf16.mxu0 %v5260
        %5622 = vmatpush2.bf16.msra.mxu0 %v5259
        %5623 = vmatprep.subr.bf16.mxu0 %v5255
        %5624 = vmatpush2.bf16.msra.mxu0 %v5254
        %5625 = vmatprep.subr.bf16.mxu0 %v5250
        %5626 = vmatpush2.bf16.msra.mxu0 %v5249
        %5627 = vmatprep.subr.bf16.mxu0 %v5245
        %5628 = vmatpush2.bf16.msra.mxu0 %v5244
        %5629 = vmatprep.subr.bf16.mxu0 %v5240
        %5630 = vmatpush2.bf16.msra.mxu0 %v5239
        %5631 = vmatprep.mubr.bf16.mxu0 %v4288
        %5632 = vmatmul.mubr.bf16.gmra.mxu0 %v4287
        %v5633 = vpop.f32.mrf.mxu0
        %v5634 = vadd.f32 %v4537, %v5633
        %v5635 = vpop.f32.mrf.mxu0
        %v5636 = vadd.f32 %v4541, %v5635
        %v5637 = vpop.f32.mrf.mxu0
        %v5638 = vpop.f32.mrf.mxu0
        %5639 = vdwg.mxu0
        %5640 = vmatprep.subr.bf16.mxu0 %v5315
        %5641 = vmatpush1.bf16.msra.mxu0 %v5314
        %5642 = vmatprep.subr.bf16.mxu0 %v5310
        %5643 = vmatpush1.bf16.msra.mxu0 %v5309
        %5644 = vmatprep.subr.bf16.mxu0 %v5305
        %5645 = vmatpush1.bf16.msra.mxu0 %v5304
        %5646 = vmatprep.subr.bf16.mxu0 %v5300
        %5647 = vmatpush1.bf16.msra.mxu0 %v5299
        %5648 = vmatprep.subr.bf16.mxu0 %v5295
        %5649 = vmatpush1.bf16.msra.mxu0 %v5294
        %5650 = vmatprep.subr.bf16.mxu0 %v5290
        %5651 = vmatpush1.bf16.msra.mxu0 %v5289
        %5652 = vmatprep.subr.bf16.mxu0 %v5285
        %5653 = vmatpush1.bf16.msra.mxu0 %v5284
        %5654 = vmatprep.subr.bf16.mxu0 %v5280
        %5655 = vmatpush1.bf16.msra.mxu0 %v5279
        %5656 = vmatprep.subr.bf16.mxu0 %v5355
        %5657 = vmatpush2.bf16.msra.mxu0 %v5354
        %5658 = vmatprep.subr.bf16.mxu0 %v5350
        %5659 = vmatpush2.bf16.msra.mxu0 %v5349
        %5660 = vmatprep.subr.bf16.mxu0 %v5345
        %5661 = vmatpush2.bf16.msra.mxu0 %v5344
        %5662 = vmatprep.subr.bf16.mxu0 %v5340
        %5663 = vmatpush2.bf16.msra.mxu0 %v5339
        %5664 = vmatprep.subr.bf16.mxu0 %v5335
        %5665 = vmatpush2.bf16.msra.mxu0 %v5334
        %5666 = vmatprep.subr.bf16.mxu0 %v5330
        %5667 = vmatpush2.bf16.msra.mxu0 %v5329
        %5668 = vmatprep.subr.bf16.mxu0 %v5325
        %5669 = vmatpush2.bf16.msra.mxu0 %v5324
        %5670 = vmatprep.subr.bf16.mxu0 %v5320
        %5671 = vmatpush2.bf16.msra.mxu0 %v5319
        %5672 = vmatprep.mubr.bf16.mxu0 %v4290
        %5673 = vmatmul.mubr.bf16.gmra.mxu0 %v4289
        %v5674 = vpop.f32.mrf.mxu0
        %v5675 = vadd.f32 %v5634, %v5674
        %v5676 = vpop.f32.mrf.mxu0
        %v5677 = vadd.f32 %v5636, %v5676
        %v5678 = vpop.f32.mrf.mxu0
        %v5679 = vpop.f32.mrf.mxu0
        %5680 = vdwg.mxu0
        %5681 = vmatprep.subr.bf16.mxu0 %v5395
        %5682 = vmatpush1.bf16.msra.mxu0 %v5394
        %5683 = vmatprep.subr.bf16.mxu0 %v5390
        %5684 = vmatpush1.bf16.msra.mxu0 %v5389
        %5685 = vmatprep.subr.bf16.mxu0 %v5385
        %5686 = vmatpush1.bf16.msra.mxu0 %v5384
        %5687 = vmatprep.subr.bf16.mxu0 %v5380
        %5688 = vmatpush1.bf16.msra.mxu0 %v5379
        %5689 = vmatprep.subr.bf16.mxu0 %v5375
        %5690 = vmatpush1.bf16.msra.mxu0 %v5374
        %5691 = vmatprep.subr.bf16.mxu0 %v5370
        %5692 = vmatpush1.bf16.msra.mxu0 %v5369
        %5693 = vmatprep.subr.bf16.mxu0 %v5365
        %5694 = vmatpush1.bf16.msra.mxu0 %v5364
        %5695 = vmatprep.subr.bf16.mxu0 %v5360
        %5696 = vmatpush1.bf16.msra.mxu0 %v5359
        %5697 = vmatprep.subr.bf16.mxu0 0
        %5698 = vmatpush2.bf16.msra.mxu0 0
        %5699 = vmatprep.subr.bf16.mxu0 0
        %5700 = vmatpush2.bf16.msra.mxu0 0
        %5701 = vmatprep.subr.bf16.mxu0 0
        %5702 = vmatpush2.bf16.msra.mxu0 0
        %5703 = vmatprep.subr.bf16.mxu0 0
        %5704 = vmatpush2.bf16.msra.mxu0 0
        %5705 = vmatprep.subr.bf16.mxu0 0
        %5706 = vmatpush2.bf16.msra.mxu0 0
        %5707 = vmatprep.subr.bf16.mxu0 0
        %5708 = vmatpush2.bf16.msra.mxu0 0
        %5709 = vmatprep.subr.bf16.mxu0 0
        %5710 = vmatpush2.bf16.msra.mxu0 0
        %5711 = vmatprep.subr.bf16.mxu0 0
        %5712 = vmatpush2.bf16.msra.mxu0 0
        %5713 = vmatprep.mubr.bf16.mxu0 0
        %5714 = vmatmul.mubr.bf16.gmra.mxu0 %v4291
        %v5715 = vpop.f32.mrf.mxu0
        %v5716 = vadd.f32 %v5675, %v5715
        %v5717 = vpop.f32.mrf.mxu0
        %v5718 = vadd.f32 %v5677, %v5717
        %v5719 = vpop.f32.mrf.mxu0
        %v5720 = vpop.f32.mrf.mxu0
        %5721 = vdwg.mxu0
        %5722 = vmatprep.subr.bf16.mxu0 %v5237
        %5723 = vmatpush1.bf16.msra.mxu0 %v5236
        %5724 = vmatprep.subr.bf16.mxu0 %v5232
        %5725 = vmatpush1.bf16.msra.mxu0 %v5231
        %5726 = vmatprep.subr.bf16.mxu0 %v5227
        %5727 = vmatpush1.bf16.msra.mxu0 %v5226
        %5728 = vmatprep.subr.bf16.mxu0 %v5222
        %5729 = vmatpush1.bf16.msra.mxu0 %v5221
        %5730 = vmatprep.subr.bf16.mxu0 %v5217
        %5731 = vmatpush1.bf16.msra.mxu0 %v5216
        %5732 = vmatprep.subr.bf16.mxu0 %v5212
        %5733 = vmatpush1.bf16.msra.mxu0 %v5211
        %5734 = vmatprep.subr.bf16.mxu0 %v5207
        %5735 = vmatpush1.bf16.msra.mxu0 %v5206
        %5736 = vmatprep.subr.bf16.mxu0 %v5202
        %5737 = vmatpush1.bf16.msra.mxu0 %v5201
        %5738 = vmatprep.subr.bf16.mxu0 %v5277
        %5739 = vmatpush2.bf16.msra.mxu0 %v5276
        %5740 = vmatprep.subr.bf16.mxu0 %v5272
        %5741 = vmatpush2.bf16.msra.mxu0 %v5271
        %5742 = vmatprep.subr.bf16.mxu0 %v5267
        %5743 = vmatpush2.bf16.msra.mxu0 %v5266
        %5744 = vmatprep.subr.bf16.mxu0 %v5262
        %5745 = vmatpush2.bf16.msra.mxu0 %v5261
        %5746 = vmatprep.subr.bf16.mxu0 %v5257
        %5747 = vmatpush2.bf16.msra.mxu0 %v5256
        %5748 = vmatprep.subr.bf16.mxu0 %v5252
        %5749 = vmatpush2.bf16.msra.mxu0 %v5251
        %5750 = vmatprep.subr.bf16.mxu0 %v5247
        %5751 = vmatpush2.bf16.msra.mxu0 %v5246
        %5752 = vmatprep.subr.bf16.mxu0 %v5242
        %5753 = vmatpush2.bf16.msra.mxu0 %v5241
        %5754 = vmatprep.mubr.bf16.mxu0 %v4288
        %5755 = vmatmul.mubr.bf16.gmra.mxu0 %v4287
        %v5756 = vpop.f32.mrf.mxu0
        %v5757 = vadd.f32 %v4545, %v5756
        %v5758 = vpop.f32.mrf.mxu0
        %v5759 = vadd.f32 %v4549, %v5758
        %v5760 = vpop.f32.mrf.mxu0
        %v5761 = vpop.f32.mrf.mxu0
        %5762 = vdwg.mxu0
        %5763 = vmatprep.subr.bf16.mxu0 %v5317
        %5764 = vmatpush1.bf16.msra.mxu0 %v5316
        %5765 = vmatprep.subr.bf16.mxu0 %v5312
        %5766 = vmatpush1.bf16.msra.mxu0 %v5311
        %5767 = vmatprep.subr.bf16.mxu0 %v5307
        %5768 = vmatpush1.bf16.msra.mxu0 %v5306
        %5769 = vmatprep.subr.bf16.mxu0 %v5302
        %5770 = vmatpush1.bf16.msra.mxu0 %v5301
        %5771 = vmatprep.subr.bf16.mxu0 %v5297
        %5772 = vmatpush1.bf16.msra.mxu0 %v5296
        %5773 = vmatprep.subr.bf16.mxu0 %v5292
        %5774 = vmatpush1.bf16.msra.mxu0 %v5291
        %5775 = vmatprep.subr.bf16.mxu0 %v5287
        %5776 = vmatpush1.bf16.msra.mxu0 %v5286
        %5777 = vmatprep.subr.bf16.mxu0 %v5282
        %5778 = vmatpush1.bf16.msra.mxu0 %v5281
        %5779 = vmatprep.subr.bf16.mxu0 %v5357
        %5780 = vmatpush2.bf16.msra.mxu0 %v5356
        %5781 = vmatprep.subr.bf16.mxu0 %v5352
        %5782 = vmatpush2.bf16.msra.mxu0 %v5351
        %5783 = vmatprep.subr.bf16.mxu0 %v5347
        %5784 = vmatpush2.bf16.msra.mxu0 %v5346
        %5785 = vmatprep.subr.bf16.mxu0 %v5342
        %5786 = vmatpush2.bf16.msra.mxu0 %v5341
        %5787 = vmatprep.subr.bf16.mxu0 %v5337
        %5788 = vmatpush2.bf16.msra.mxu0 %v5336
        %5789 = vmatprep.subr.bf16.mxu0 %v5332
        %5790 = vmatpush2.bf16.msra.mxu0 %v5331
        %5791 = vmatprep.subr.bf16.mxu0 %v5327
        %5792 = vmatpush2.bf16.msra.mxu0 %v5326
        %5793 = vmatprep.subr.bf16.mxu0 %v5322
        %5794 = vmatpush2.bf16.msra.mxu0 %v5321
        %5795 = vmatprep.mubr.bf16.mxu0 %v4290
        %5796 = vmatmul.mubr.bf16.gmra.mxu0 %v4289
        %v5797 = vpop.f32.mrf.mxu0
        %v5798 = vadd.f32 %v5757, %v5797
        %v5799 = vpop.f32.mrf.mxu0
        %v5800 = vadd.f32 %v5759, %v5799
        %v5801 = vpop.f32.mrf.mxu0
        %v5802 = vpop.f32.mrf.mxu0
        %5803 = vdwg.mxu0
        %5804 = vmatprep.subr.bf16.mxu0 %v5397
        %5805 = vmatpush1.bf16.msra.mxu0 %v5396
        %5806 = vmatprep.subr.bf16.mxu0 %v5392
        %5807 = vmatpush1.bf16.msra.mxu0 %v5391
        %5808 = vmatprep.subr.bf16.mxu0 %v5387
        %5809 = vmatpush1.bf16.msra.mxu0 %v5386
        %5810 = vmatprep.subr.bf16.mxu0 %v5382
        %5811 = vmatpush1.bf16.msra.mxu0 %v5381
        %5812 = vmatprep.subr.bf16.mxu0 %v5377
        %5813 = vmatpush1.bf16.msra.mxu0 %v5376
        %5814 = vmatprep.subr.bf16.mxu0 %v5372
        %5815 = vmatpush1.bf16.msra.mxu0 %v5371
        %5816 = vmatprep.subr.bf16.mxu0 %v5367
        %5817 = vmatpush1.bf16.msra.mxu0 %v5366
        %5818 = vmatprep.subr.bf16.mxu0 %v5362
        %5819 = vmatpush1.bf16.msra.mxu0 %v5361
        %5820 = vmatprep.subr.bf16.mxu0 0
        %5821 = vmatpush2.bf16.msra.mxu0 0
        %5822 = vmatprep.subr.bf16.mxu0 0
        %5823 = vmatpush2.bf16.msra.mxu0 0
        %5824 = vmatprep.subr.bf16.mxu0 0
        %5825 = vmatpush2.bf16.msra.mxu0 0
        %5826 = vmatprep.subr.bf16.mxu0 0
        %5827 = vmatpush2.bf16.msra.mxu0 0
        %5828 = vmatprep.subr.bf16.mxu0 0
        %5829 = vmatpush2.bf16.msra.mxu0 0
        %5830 = vmatprep.subr.bf16.mxu0 0
        %5831 = vmatpush2.bf16.msra.mxu0 0
        %5832 = vmatprep.subr.bf16.mxu0 0
        %5833 = vmatpush2.bf16.msra.mxu0 0
        %5834 = vmatprep.subr.bf16.mxu0 0
        %5835 = vmatpush2.bf16.msra.mxu0 0
        %5836 = vmatprep.mubr.bf16.mxu0 0
        %5837 = vmatmul.mubr.bf16.gmra.mxu0 %v4291
        %v5838 = vpop.f32.mrf.mxu0
        %v5839 = vadd.f32 %v5798, %v5838
        %v5840 = vpop.f32.mrf.mxu0
        %v5841 = vadd.f32 %v5800, %v5840
        %v5842 = vpop.f32.mrf.mxu0
        %v5843 = vpop.f32.mrf.mxu0
        %5844 = vdwg.mxu0
        %5845 = vmatprep.subr.bf16.mxu0 0
        %5846 = vmatpush1.bf16.msra.mxu0 %v5238
        %5847 = vmatprep.subr.bf16.mxu0 0
        %5848 = vmatpush1.bf16.msra.mxu0 %v5233
        %5849 = vmatprep.subr.bf16.mxu0 0
        %5850 = vmatpush1.bf16.msra.mxu0 %v5228
        %5851 = vmatprep.subr.bf16.mxu0 0
        %5852 = vmatpush1.bf16.msra.mxu0 %v5223
        %5853 = vmatprep.subr.bf16.mxu0 0
        %5854 = vmatpush1.bf16.msra.mxu0 %v5218
        %5855 = vmatprep.subr.bf16.mxu0 0
        %5856 = vmatpush1.bf16.msra.mxu0 %v5213
        %5857 = vmatprep.subr.bf16.mxu0 0
        %5858 = vmatpush1.bf16.msra.mxu0 %v5208
        %5859 = vmatprep.subr.bf16.mxu0 0
        %5860 = vmatpush1.bf16.msra.mxu0 %v5203
        %5861 = vmatprep.subr.bf16.mxu0 0
        %5862 = vmatpush2.bf16.msra.mxu0 %v5278
        %5863 = vmatprep.subr.bf16.mxu0 0
        %5864 = vmatpush2.bf16.msra.mxu0 %v5273
        %5865 = vmatprep.subr.bf16.mxu0 0
        %5866 = vmatpush2.bf16.msra.mxu0 %v5268
        %5867 = vmatprep.subr.bf16.mxu0 0
        %5868 = vmatpush2.bf16.msra.mxu0 %v5263
        %5869 = vmatprep.subr.bf16.mxu0 0
        %5870 = vmatpush2.bf16.msra.mxu0 %v5258
        %5871 = vmatprep.subr.bf16.mxu0 0
        %5872 = vmatpush2.bf16.msra.mxu0 %v5253
        %5873 = vmatprep.subr.bf16.mxu0 0
        %5874 = vmatpush2.bf16.msra.mxu0 %v5248
        %5875 = vmatprep.subr.bf16.mxu0 0
        %5876 = vmatpush2.bf16.msra.mxu0 %v5243
        %5877 = vmatprep.mubr.bf16.mxu0 %v4288
        %5878 = vmatmul.mubr.bf16.gmra.mxu0 %v4287
        %v5879 = vpop.f32.mrf.mxu0
        %v5880 = vadd.f32 %v4553, %v5879
        %v5881 = vpop.f32.mrf.mxu0
        %v5882 = vpop.f32.mrf.mxu0
        %v5883 = vpop.f32.mrf.mxu0
        %5884 = vdwg.mxu0
        %5885 = vmatprep.subr.bf16.mxu0 0
        %5886 = vmatpush1.bf16.msra.mxu0 %v5318
        %5887 = vmatprep.subr.bf16.mxu0 0
        %5888 = vmatpush1.bf16.msra.mxu0 %v5313
        %5889 = vmatprep.subr.bf16.mxu0 0
        %5890 = vmatpush1.bf16.msra.mxu0 %v5308
        %5891 = vmatprep.subr.bf16.mxu0 0
        %5892 = vmatpush1.bf16.msra.mxu0 %v5303
        %5893 = vmatprep.subr.bf16.mxu0 0
        %5894 = vmatpush1.bf16.msra.mxu0 %v5298
        %5895 = vmatprep.subr.bf16.mxu0 0
        %5896 = vmatpush1.bf16.msra.mxu0 %v5293
        %5897 = vmatprep.subr.bf16.mxu0 0
        %5898 = vmatpush1.bf16.msra.mxu0 %v5288
        %5899 = vmatprep.subr.bf16.mxu0 0
        %5900 = vmatpush1.bf16.msra.mxu0 %v5283
        %5901 = vmatprep.subr.bf16.mxu0 0
        %5902 = vmatpush2.bf16.msra.mxu0 %v5358
        %5903 = vmatprep.subr.bf16.mxu0 0
        %5904 = vmatpush2.bf16.msra.mxu0 %v5353
        %5905 = vmatprep.subr.bf16.mxu0 0
        %5906 = vmatpush2.bf16.msra.mxu0 %v5348
        %5907 = vmatprep.subr.bf16.mxu0 0
        %5908 = vmatpush2.bf16.msra.mxu0 %v5343
        %5909 = vmatprep.subr.bf16.mxu0 0
        %5910 = vmatpush2.bf16.msra.mxu0 %v5338
        %5911 = vmatprep.subr.bf16.mxu0 0
        %5912 = vmatpush2.bf16.msra.mxu0 %v5333
        %5913 = vmatprep.subr.bf16.mxu0 0
        %5914 = vmatpush2.bf16.msra.mxu0 %v5328
        %5915 = vmatprep.subr.bf16.mxu0 0
        %5916 = vmatpush2.bf16.msra.mxu0 %v5323
        %5917 = vmatprep.mubr.bf16.mxu0 %v4290
        %5918 = vmatmul.mubr.bf16.gmra.mxu0 %v4289
        %v5919 = vpop.f32.mrf.mxu0
        %v5920 = vadd.f32 %v5880, %v5919
        %v5921 = vpop.f32.mrf.mxu0
        %v5922 = vpop.f32.mrf.mxu0
        %v5923 = vpop.f32.mrf.mxu0
        %5924 = vdwg.mxu0
        %5925 = vmatprep.subr.bf16.mxu0 0
        %5926 = vmatpush1.bf16.msra.mxu0 %v5398
        %5927 = vmatprep.subr.bf16.mxu0 0
        %5928 = vmatpush1.bf16.msra.mxu0 %v5393
        %5929 = vmatprep.subr.bf16.mxu0 0
        %5930 = vmatpush1.bf16.msra.mxu0 %v5388
        %5931 = vmatprep.subr.bf16.mxu0 0
        %5932 = vmatpush1.bf16.msra.mxu0 %v5383
        %5933 = vmatprep.subr.bf16.mxu0 0
        %5934 = vmatpush1.bf16.msra.mxu0 %v5378
        %5935 = vmatprep.subr.bf16.mxu0 0
        %5936 = vmatpush1.bf16.msra.mxu0 %v5373
        %5937 = vmatprep.subr.bf16.mxu0 0
        %5938 = vmatpush1.bf16.msra.mxu0 %v5368
        %5939 = vmatprep.subr.bf16.mxu0 0
        %5940 = vmatpush1.bf16.msra.mxu0 %v5363
        %5941 = vmatprep.subr.bf16.mxu0 0
        %5942 = vmatpush2.bf16.msra.mxu0 0
        %5943 = vmatprep.subr.bf16.mxu0 0
        %5944 = vmatpush2.bf16.msra.mxu0 0
        %5945 = vmatprep.subr.bf16.mxu0 0
        %5946 = vmatpush2.bf16.msra.mxu0 0
        %5947 = vmatprep.subr.bf16.mxu0 0
        %5948 = vmatpush2.bf16.msra.mxu0 0
        %5949 = vmatprep.subr.bf16.mxu0 0
        %5950 = vmatpush2.bf16.msra.mxu0 0
        %5951 = vmatprep.subr.bf16.mxu0 0
        %5952 = vmatpush2.bf16.msra.mxu0 0
        %5953 = vmatprep.subr.bf16.mxu0 0
        %5954 = vmatpush2.bf16.msra.mxu0 0
        %5955 = vmatprep.subr.bf16.mxu0 0
        %5956 = vmatpush2.bf16.msra.mxu0 0
        %5957 = vmatprep.mubr.bf16.mxu0 0
        %5958 = vmatmul.mubr.bf16.gmra.mxu0 %v4291
        %v5959 = vpop.f32.mrf.mxu0
        %v5960 = vadd.f32 %v5920, %v5959
        %v5961 = vpop.f32.mrf.mxu0
        %v5962 = vpop.f32.mrf.mxu0
        %v5963 = vpop.f32.mrf.mxu0
        %5964 = vdwg.mxu0
        %v5965 = vtanh.pop %v5716
        %v5966 = vtanh.pop %v5718
        %v5967 = vtanh.pop %v5839
        %v5968 = vtanh.pop %v5841
        %v5969 = vtanh.pop %v5960
        %v5970 = vpack.c.bf16 %v5965, %v5965
        %v5971 = vpack.c.bf16 %v5966, %v5966
        %v5972 = vpack.c.bf16 %v5967, %v5967
        %v5973 = vpack.c.bf16 %v5968, %v5968
        %v5974 = vpack.c.bf16 %v5969, %v5969
        %v5975 = vld [vmem:[#allocation9] sm:$0xf]
        %v5976 = vld [vmem:[#allocation9 + $0x4] sm:$0xf]
        %v5977 = vld [vmem:[#allocation9 + $0x8] sm:$0xf]
        %v5978 = vld [vmem:[#allocation9 + $0xc] sm:$0xf]
        %v5979 = vld [vmem:[#allocation9 + $0x10] sm:$0xf]
        %v5980 = vld [vmem:[#allocation9 + $0x14] sm:$0xf]
        %v5981 = vld [vmem:[#allocation9 + $0x18] sm:$0xf]
        %v5982 = vld [vmem:[#allocation9 + $0x1c] sm:$0xf]
        %v5983 = vld [vmem:[#allocation9 + $0x20] sm:$0xf]
        %v5984 = vld [vmem:[#allocation9 + $0x24] sm:$0xf]
        %v5985 = vld [vmem:[#allocation9 + $0x28] sm:$0xf]
        %v5986 = vld [vmem:[#allocation9 + $0x2c] sm:$0xf]
        %v5987 = vld [vmem:[#allocation9 + $0x30] sm:$0xf]
        %v5988 = vld [vmem:[#allocation9 + $0x34] sm:$0xf]
        %v5989 = vld [vmem:[#allocation9 + $0x38] sm:$0xf]
        %v5990 = vld [vmem:[#allocation9 + $0x3c] sm:$0xf]
        %v5991 = vld [vmem:[#allocation9 + $0x40] sm:$0xf]
        %v5992 = vld [vmem:[#allocation9 + $0x44] sm:$0xf]
        %v5993 = vld [vmem:[#allocation9 + $0x48] sm:$0xf]
        %v5994 = vld [vmem:[#allocation9 + $0x4c] sm:$0xf]
        %v5995 = vld [vmem:[#allocation9 + $0x50] sm:$0xf]
        %v5996 = vld [vmem:[#allocation9 + $0x54] sm:$0xf]
        %v5997 = vld [vmem:[#allocation9 + $0x58] sm:$0xf]
        %v5998 = vld [vmem:[#allocation9 + $0x5c] sm:$0xf]
        %v5999 = vld [vmem:[#allocation9 + $0x60] sm:$0xf]
        %v6000 = vld [vmem:[#allocation9 + $0x64] sm:$0xf]
        %v6001 = vld [vmem:[#allocation9 + $0x68] sm:$0xf]
        %v6002 = vld [vmem:[#allocation9 + $0x6c] sm:$0xf]
        %v6003 = vld [vmem:[#allocation9 + $0x70] sm:$0xf]
        %v6004 = vld [vmem:[#allocation9 + $0x74] sm:$0xf]
        %v6005 = vld [vmem:[#allocation9 + $0x78] sm:$0xf]
        %v6006 = vld [vmem:[#allocation9 + $0x7c] sm:$0xf]
        %v6007 = vld [vmem:[#allocation9 + $0x80] sm:$0xf]
        %v6008 = vld [vmem:[#allocation9 + $0x84] sm:$0xf]
        %v6009 = vld [vmem:[#allocation9 + $0x88] sm:$0xf]
        %v6010 = vld [vmem:[#allocation9 + $0x8c] sm:$0xf]
        %v6011 = vld [vmem:[#allocation9 + $0x90] sm:$0xf]
        %v6012 = vld [vmem:[#allocation9 + $0x94] sm:$0xf]
        %v6013 = vld [vmem:[#allocation9 + $0x98] sm:$0xf]
        %v6014 = vld [vmem:[#allocation9 + $0x9c] sm:$0xf]
        %v6015 = vld [vmem:[#allocation9 + $0xa0] sm:$0xf]
        %v6016 = vld [vmem:[#allocation9 + $0xa4] sm:$0xf]
        %v6017 = vld [vmem:[#allocation9 + $0xa8] sm:$0xf]
        %v6018 = vld [vmem:[#allocation9 + $0xac] sm:$0xf]
        %v6019 = vld [vmem:[#allocation9 + $0xb0] sm:$0xf]
        %v6020 = vld [vmem:[#allocation9 + $0xb4] sm:$0xf]
        %v6021 = vld [vmem:[#allocation9 + $0xb8] sm:$0xf]
        %v6022 = vld [vmem:[#allocation9 + $0xbc] sm:$0xf]
        %v6023 = vld [vmem:[#allocation9 + $0xc0] sm:$0xf]
        %v6024 = vld [vmem:[#allocation9 + $0xc4] sm:$0xf]
        %v6025 = vld [vmem:[#allocation9 + $0xc8] sm:$0xf]
        %v6026 = vld [vmem:[#allocation9 + $0xcc] sm:$0xf]
        %v6027 = vld [vmem:[#allocation9 + $0xd0] sm:$0xf]
        %v6028 = vld [vmem:[#allocation9 + $0xd4] sm:$0xf]
        %v6029 = vld [vmem:[#allocation9 + $0xd8] sm:$0xf]
        %v6030 = vld [vmem:[#allocation9 + $0xdc] sm:$0xf]
        %v6031 = vld [vmem:[#allocation9 + $0xe0] sm:$0xf]
        %v6032 = vld [vmem:[#allocation9 + $0xe4] sm:$0xf]
        %v6033 = vld [vmem:[#allocation9 + $0xe8] sm:$0xf]
        %v6034 = vld [vmem:[#allocation9 + $0xec] sm:$0xf]
        %v6035 = vld [vmem:[#allocation9 + $0xf0] sm:$0xf]
        %v6036 = vld [vmem:[#allocation9 + $0xf4] sm:$0xf]
        %v6037 = vld [vmem:[#allocation9 + $0xf8] sm:$0xf]
        %v6038 = vld [vmem:[#allocation9 + $0xfc] sm:$0xf]
        %v6039 = vld [vmem:[#allocation9 + $0x100] sm:$0xf]
        %v6040 = vld [vmem:[#allocation9 + $0x104] sm:$0xf]
        %v6041 = vld [vmem:[#allocation9 + $0x108] sm:$0xf]
        %v6042 = vld [vmem:[#allocation9 + $0x10c] sm:$0xf]
        %v6043 = vld [vmem:[#allocation9 + $0x110] sm:$0xf]
        %v6044 = vld [vmem:[#allocation9 + $0x114] sm:$0xf]
        %v6045 = vld [vmem:[#allocation9 + $0x118] sm:$0xf]
        %v6046 = vld [vmem:[#allocation9 + $0x11c] sm:$0xf]
        %v6047 = vld [vmem:[#allocation9 + $0x120] sm:$0xf]
        %v6048 = vld [vmem:[#allocation9 + $0x124] sm:$0xf]
        %v6049 = vld [vmem:[#allocation9 + $0x128] sm:$0xf]
        %v6050 = vld [vmem:[#allocation9 + $0x12c] sm:$0xf]
        %v6051 = vld [vmem:[#allocation9 + $0x130] sm:$0xf]
        %v6052 = vld [vmem:[#allocation9 + $0x134] sm:$0xf]
        %v6053 = vld [vmem:[#allocation9 + $0x138] sm:$0xf]
        %v6054 = vld [vmem:[#allocation9 + $0x13c] sm:$0xf]
        %v6055 = vld [vmem:[%s10] sm:$0x1]
        %v6057 = vlaneseq
        %v6058 = vshrl.u32 %v6057, 7
        %v6059 = vsub.s32 0, %v6058
        %v6060 = vrot.slane %v6055, %v6059
        %v6142 = vunpack.c.l.b16 %v5975
        %v6143 = vunpack.c.l.b16 %v5976
        %v6144 = vunpack.c.l.b16 %v5977
        %v6145 = vunpack.c.l.b16 %v5978
        %v6146 = vunpack.c.l.b16 %v5979
        %v6147 = vunpack.c.l.b16 %v5980
        %v6148 = vunpack.c.l.b16 %v5981
        %v6149 = vunpack.c.l.b16 %v5982
        %v6150 = vunpack.c.l.b16 %v5983
        %v6151 = vunpack.c.l.b16 %v5984
        %v6152 = vunpack.c.l.b16 %v5985
        %v6153 = vunpack.c.l.b16 %v5986
        %v6154 = vunpack.c.l.b16 %v5987
        %v6155 = vunpack.c.l.b16 %v5988
        %v6156 = vunpack.c.l.b16 %v5989
        %v6157 = vunpack.c.l.b16 %v5990
        %v6158 = vunpack.c.l.b16 %v5991
        %v6159 = vunpack.c.l.b16 %v5992
        %v6160 = vunpack.c.l.b16 %v5993
        %v6161 = vunpack.c.l.b16 %v5994
        %v6162 = vunpack.c.l.b16 %v5995
        %v6163 = vunpack.c.l.b16 %v5996
        %v6164 = vunpack.c.l.b16 %v5997
        %v6165 = vunpack.c.l.b16 %v5998
        %v6166 = vunpack.c.l.b16 %v5999
        %v6167 = vunpack.c.l.b16 %v6000
        %v6168 = vunpack.c.l.b16 %v6001
        %v6169 = vunpack.c.l.b16 %v6002
        %v6170 = vunpack.c.l.b16 %v6003
        %v6171 = vunpack.c.l.b16 %v6004
        %v6172 = vunpack.c.l.b16 %v6005
        %v6173 = vunpack.c.l.b16 %v6006
        %v6174 = vunpack.c.l.b16 %v6007
        %v6175 = vunpack.c.l.b16 %v6008
        %v6176 = vunpack.c.l.b16 %v6009
        %v6177 = vunpack.c.l.b16 %v6010
        %v6178 = vunpack.c.l.b16 %v6011
        %v6179 = vunpack.c.l.b16 %v6012
        %v6180 = vunpack.c.l.b16 %v6013
        %v6181 = vunpack.c.l.b16 %v6014
        %v6182 = vunpack.c.l.b16 %v6015
        %v6183 = vunpack.c.l.b16 %v6016
        %v6184 = vunpack.c.l.b16 %v6017
        %v6185 = vunpack.c.l.b16 %v6018
        %v6186 = vunpack.c.l.b16 %v6019
        %v6187 = vunpack.c.l.b16 %v6020
        %v6188 = vunpack.c.l.b16 %v6021
        %v6189 = vunpack.c.l.b16 %v6022
        %v6190 = vunpack.c.l.b16 %v6023
        %v6191 = vunpack.c.l.b16 %v6024
        %v6192 = vunpack.c.l.b16 %v6025
        %v6193 = vunpack.c.l.b16 %v6026
        %v6194 = vunpack.c.l.b16 %v6027
        %v6195 = vunpack.c.l.b16 %v6028
        %v6196 = vunpack.c.l.b16 %v6029
        %v6197 = vunpack.c.l.b16 %v6030
        %v6198 = vunpack.c.l.b16 %v6031
        %v6199 = vunpack.c.l.b16 %v6032
        %v6200 = vunpack.c.l.b16 %v6033
        %v6201 = vunpack.c.l.b16 %v6034
        %v6202 = vunpack.c.l.b16 %v6035
        %v6203 = vunpack.c.l.b16 %v6036
        %v6204 = vunpack.c.l.b16 %v6037
        %v6205 = vunpack.c.l.b16 %v6038
        %v6206 = vunpack.c.l.b16 %v6039
        %v6207 = vunpack.c.l.b16 %v6040
        %v6208 = vunpack.c.l.b16 %v6041
        %v6209 = vunpack.c.l.b16 %v6042
        %v6210 = vunpack.c.l.b16 %v6043
        %v6211 = vunpack.c.l.b16 %v6044
        %v6212 = vunpack.c.l.b16 %v6045
        %v6213 = vunpack.c.l.b16 %v6046
        %v6214 = vunpack.c.l.b16 %v6047
        %v6215 = vunpack.c.l.b16 %v6048
        %v6216 = vunpack.c.l.b16 %v6049
        %v6217 = vunpack.c.l.b16 %v6050
        %v6218 = vunpack.c.l.b16 %v6051
        %v6219 = vunpack.c.l.b16 %v6052
        %v6220 = vunpack.c.l.b16 %v6053
        %v6221 = vunpack.c.l.b16 %v6054
        %v6222 = vpack.c.b16 %v6143, %v6142
        %v6223 = vpack.c.b16 %v6145, %v6144
        %v6224 = vpack.c.b16 %v6147, %v6146
        %v6225 = vpack.c.b16 %v6149, %v6148
        %v6226 = vpack.c.b16 %v6151, %v6150
        %v6227 = vpack.c.b16 %v6153, %v6152
        %v6228 = vpack.c.b16 %v6155, %v6154
        %v6229 = vpack.c.b16 %v6157, %v6156
        %v6230 = vpack.c.b16 %v6159, %v6158
        %v6231 = vpack.c.b16 %v6161, %v6160
        %v6232 = vpack.c.b16 %v6163, %v6162
        %v6233 = vpack.c.b16 %v6165, %v6164
        %v6234 = vpack.c.b16 %v6167, %v6166
        %v6235 = vpack.c.b16 %v6169, %v6168
        %v6236 = vpack.c.b16 %v6171, %v6170
        %v6237 = vpack.c.b16 %v6173, %v6172
        %v6238 = vpack.c.b16 %v6175, %v6174
        %v6239 = vpack.c.b16 %v6177, %v6176
        %v6240 = vpack.c.b16 %v6179, %v6178
        %v6241 = vpack.c.b16 %v6181, %v6180
        %v6242 = vpack.c.b16 %v6183, %v6182
        %v6243 = vpack.c.b16 %v6185, %v6184
        %v6244 = vpack.c.b16 %v6187, %v6186
        %v6245 = vpack.c.b16 %v6189, %v6188
        %v6246 = vpack.c.b16 %v6191, %v6190
        %v6247 = vpack.c.b16 %v6193, %v6192
        %v6248 = vpack.c.b16 %v6195, %v6194
        %v6249 = vpack.c.b16 %v6197, %v6196
        %v6250 = vpack.c.b16 %v6199, %v6198
        %v6251 = vpack.c.b16 %v6201, %v6200
        %v6252 = vpack.c.b16 %v6203, %v6202
        %v6253 = vpack.c.b16 %v6205, %v6204
        %v6254 = vpack.c.b16 %v6207, %v6206
        %v6255 = vpack.c.b16 %v6209, %v6208
        %v6256 = vpack.c.b16 %v6211, %v6210
        %v6257 = vpack.c.b16 %v6213, %v6212
        %v6258 = vpack.c.b16 %v6215, %v6214
        %v6259 = vpack.c.b16 %v6217, %v6216
        %v6260 = vpack.c.b16 %v6219, %v6218
        %v6261 = vpack.c.b16 %v6221, %v6220
        %6302 = vmatprep.subr.bf16.mxu0 0
        %6303 = vmatpush1.bf16.msra.mxu0 %v6229
        %6304 = vmatprep.subr.bf16.mxu0 0
        %6305 = vmatpush1.bf16.msra.mxu0 %v6228
        %6306 = vmatprep.subr.bf16.mxu0 0
        %6307 = vmatpush1.bf16.msra.mxu0 %v6227
        %6308 = vmatprep.subr.bf16.mxu0 0
        %6309 = vmatpush1.bf16.msra.mxu0 %v6226
        %6310 = vmatprep.subr.bf16.mxu0 0
        %6311 = vmatpush1.bf16.msra.mxu0 %v6225
        %6312 = vmatprep.subr.bf16.mxu0 0
        %6313 = vmatpush1.bf16.msra.mxu0 %v6224
        %6314 = vmatprep.subr.bf16.mxu0 0
        %6315 = vmatpush1.bf16.msra.mxu0 %v6223
        %6316 = vmatprep.subr.bf16.mxu0 0
        %6317 = vmatpush1.bf16.msra.mxu0 %v6222
        %6318 = vmatprep.subr.bf16.mxu0 0
        %6319 = vmatpush2.bf16.msra.mxu0 %v6237
        %6320 = vmatprep.subr.bf16.mxu0 0
        %6321 = vmatpush2.bf16.msra.mxu0 %v6236
        %6322 = vmatprep.subr.bf16.mxu0 0
        %6323 = vmatpush2.bf16.msra.mxu0 %v6235
        %6324 = vmatprep.subr.bf16.mxu0 0
        %6325 = vmatpush2.bf16.msra.mxu0 %v6234
        %6326 = vmatprep.subr.bf16.mxu0 0
        %6327 = vmatpush2.bf16.msra.mxu0 %v6233
        %6328 = vmatprep.subr.bf16.mxu0 0
        %6329 = vmatpush2.bf16.msra.mxu0 %v6232
        %6330 = vmatprep.subr.bf16.mxu0 0
        %6331 = vmatpush2.bf16.msra.mxu0 %v6231
        %6332 = vmatprep.subr.bf16.mxu0 0
        %6333 = vmatpush2.bf16.msra.mxu0 %v6230
        %6334 = vmatprep.mubr.bf16.mxu0 %v5971
        %6335 = vmatmul.mubr.bf16.gmra.mxu0 %v5970
        %v6336 = vpop.f32.mrf.mxu0
        %v6337 = vadd.f32 %v6060, %v6336
        %v6338 = vpop.f32.mrf.mxu0
        %v6339 = vpop.f32.mrf.mxu0
        %v6340 = vpop.f32.mrf.mxu0
        %6341 = vdwg.mxu0
        %6342 = vmatprep.subr.bf16.mxu0 0
        %6343 = vmatpush1.bf16.msra.mxu0 %v6245
        %6344 = vmatprep.subr.bf16.mxu0 0
        %6345 = vmatpush1.bf16.msra.mxu0 %v6244
        %6346 = vmatprep.subr.bf16.mxu0 0
        %6347 = vmatpush1.bf16.msra.mxu0 %v6243
        %6348 = vmatprep.subr.bf16.mxu0 0
        %6349 = vmatpush1.bf16.msra.mxu0 %v6242
        %6350 = vmatprep.subr.bf16.mxu0 0
        %6351 = vmatpush1.bf16.msra.mxu0 %v6241
        %6352 = vmatprep.subr.bf16.mxu0 0
        %6353 = vmatpush1.bf16.msra.mxu0 %v6240
        %6354 = vmatprep.subr.bf16.mxu0 0
        %6355 = vmatpush1.bf16.msra.mxu0 %v6239
        %6356 = vmatprep.subr.bf16.mxu0 0
        %6357 = vmatpush1.bf16.msra.mxu0 %v6238
        %6358 = vmatprep.subr.bf16.mxu0 0
        %6359 = vmatpush2.bf16.msra.mxu0 %v6253
        %6360 = vmatprep.subr.bf16.mxu0 0
        %6361 = vmatpush2.bf16.msra.mxu0 %v6252
        %6362 = vmatprep.subr.bf16.mxu0 0
        %6363 = vmatpush2.bf16.msra.mxu0 %v6251
        %6364 = vmatprep.subr.bf16.mxu0 0
        %6365 = vmatpush2.bf16.msra.mxu0 %v6250
        %6366 = vmatprep.subr.bf16.mxu0 0
        %6367 = vmatpush2.bf16.msra.mxu0 %v6249
        %6368 = vmatprep.subr.bf16.mxu0 0
        %6369 = vmatpush2.bf16.msra.mxu0 %v6248
        %6370 = vmatprep.subr.bf16.mxu0 0
        %6371 = vmatpush2.bf16.msra.mxu0 %v6247
        %6372 = vmatprep.subr.bf16.mxu0 0
        %6373 = vmatpush2.bf16.msra.mxu0 %v6246
        %6374 = vmatprep.mubr.bf16.mxu0 %v5973
        %6375 = vmatmul.mubr.bf16.gmra.mxu0 %v5972
        %v6376 = vpop.f32.mrf.mxu0
        %v6377 = vadd.f32 %v6337, %v6376
        %v6378 = vpop.f32.mrf.mxu0
        %v6379 = vpop.f32.mrf.mxu0
        %v6380 = vpop.f32.mrf.mxu0
        %6381 = vdwg.mxu0
        %6382 = vmatprep.subr.bf16.mxu0 0
        %6383 = vmatpush1.bf16.msra.mxu0 %v6261
        %6384 = vmatprep.subr.bf16.mxu0 0
        %6385 = vmatpush1.bf16.msra.mxu0 %v6260
        %6386 = vmatprep.subr.bf16.mxu0 0
        %6387 = vmatpush1.bf16.msra.mxu0 %v6259
        %6388 = vmatprep.subr.bf16.mxu0 0
        %6389 = vmatpush1.bf16.msra.mxu0 %v6258
        %6390 = vmatprep.subr.bf16.mxu0 0
        %6391 = vmatpush1.bf16.msra.mxu0 %v6257
        %6392 = vmatprep.subr.bf16.mxu0 0
        %6393 = vmatpush1.bf16.msra.mxu0 %v6256
        %6394 = vmatprep.subr.bf16.mxu0 0
        %6395 = vmatpush1.bf16.msra.mxu0 %v6255
        %6396 = vmatprep.subr.bf16.mxu0 0
        %6397 = vmatpush1.bf16.msra.mxu0 %v6254
        %6398 = vmatprep.subr.bf16.mxu0 0
        %6399 = vmatpush2.bf16.msra.mxu0 0
        %6400 = vmatprep.subr.bf16.mxu0 0
        %6401 = vmatpush2.bf16.msra.mxu0 0
        %6402 = vmatprep.subr.bf16.mxu0 0
        %6403 = vmatpush2.bf16.msra.mxu0 0
        %6404 = vmatprep.subr.bf16.mxu0 0
        %6405 = vmatpush2.bf16.msra.mxu0 0
        %6406 = vmatprep.subr.bf16.mxu0 0
        %6407 = vmatpush2.bf16.msra.mxu0 0
        %6408 = vmatprep.subr.bf16.mxu0 0
        %6409 = vmatpush2.bf16.msra.mxu0 0
        %6410 = vmatprep.subr.bf16.mxu0 0
        %6411 = vmatpush2.bf16.msra.mxu0 0
        %6412 = vmatprep.subr.bf16.mxu0 0
        %6413 = vmatpush2.bf16.msra.mxu0 0
        %6414 = vmatprep.mubr.bf16.mxu0 0
        %6415 = vmatmul.mubr.bf16.gmra.mxu0 %v5974
        %v6416 = vpop.f32.mrf.mxu0
        %v6417 = vadd.f32 %v6377, %v6416
        %v6418 = vpop.f32.mrf.mxu0
        %v6419 = vpop.f32.mrf.mxu0
        %v6420 = vpop.f32.mrf.mxu0
        %6421 = vdwg.mxu0
        %v6422 = vtanh.pop %v6417
        %v6423 = vpack.c.bf16 %v6422, %v6422
        %v6424 = vld [vmem:[%s11] sm:$0xf]
        %v6425 = vld [vmem:[%s11 + $0x4] sm:$0xf]
        %v6426 = vld [vmem:[%s11 + $0x8] sm:$0xf]
        %v6427 = vld [vmem:[%s11 + $0xc] sm:$0xf]
        %v6428 = vld [vmem:[%s11 + $0x10] sm:$0xf]
        %v6429 = vld [vmem:[%s11 + $0x14] sm:$0xf]
        %v6430 = vld [vmem:[%s11 + $0x18] sm:$0xf]
        %v6431 = vld [vmem:[%s11 + $0x1c] sm:$0xf]
        %v6432 = vld [vmem:[%s11 + $0x20] sm:$0xf]
        %v6433 = vld [vmem:[%s11 + $0x24] sm:$0xf]
        %v6434 = vld [vmem:[%s11 + $0x28] sm:$0xf]
        %v6435 = vld [vmem:[%s11 + $0x2c] sm:$0xf]
        %v6436 = vld [vmem:[%s11 + $0x30] sm:$0xf]
        %v6437 = vld [vmem:[%s11 + $0x34] sm:$0xf]
        %v6438 = vld [vmem:[%s11 + $0x38] sm:$0xf]
        %v6439 = vld [vmem:[%s11 + $0x3c] sm:$0xf]
        %v6440 = vld [vmem:[%s12] sm:$0x1]
        %v6442 = vlaneseq
        %v6443 = vshrl.u32 %v6442, 7
        %v6444 = vsub.s32 0, %v6443
        %v6445 = vrot.slane %v6440, %v6444
        %v6463 = vunpack.c.l.b16 %v6424
        %v6464 = vunpack.c.l.b16 %v6425
        %v6465 = vunpack.c.l.b16 %v6426
        %v6466 = vunpack.c.l.b16 %v6427
        %v6467 = vunpack.c.l.b16 %v6428
        %v6468 = vunpack.c.l.b16 %v6429
        %v6469 = vunpack.c.l.b16 %v6430
        %v6470 = vunpack.c.l.b16 %v6431
        %v6471 = vunpack.c.l.b16 %v6432
        %v6472 = vunpack.c.l.b16 %v6433
        %v6473 = vunpack.c.l.b16 %v6434
        %v6474 = vunpack.c.l.b16 %v6435
        %v6475 = vunpack.c.l.b16 %v6436
        %v6476 = vunpack.c.l.b16 %v6437
        %v6477 = vunpack.c.l.b16 %v6438
        %v6478 = vunpack.c.l.b16 %v6439
        %v6479 = vpack.c.b16 %v6464, %v6463
        %v6480 = vpack.c.b16 %v6466, %v6465
        %v6481 = vpack.c.b16 %v6468, %v6467
        %v6482 = vpack.c.b16 %v6470, %v6469
        %v6483 = vpack.c.b16 %v6472, %v6471
        %v6484 = vpack.c.b16 %v6474, %v6473
        %v6485 = vpack.c.b16 %v6476, %v6475
        %v6486 = vpack.c.b16 %v6478, %v6477
        %6495 = vmatprep.subr.bf16.mxu0 0
        %6496 = vmatpush1.bf16.msra.mxu0 %v6486
        %6497 = vmatprep.subr.bf16.mxu0 0
        %6498 = vmatpush1.bf16.msra.mxu0 %v6485
        %6499 = vmatprep.subr.bf16.mxu0 0
        %6500 = vmatpush1.bf16.msra.mxu0 %v6484
        %6501 = vmatprep.subr.bf16.mxu0 0
        %6502 = vmatpush1.bf16.msra.mxu0 %v6483
        %6503 = vmatprep.subr.bf16.mxu0 0
        %6504 = vmatpush1.bf16.msra.mxu0 %v6482
        %6505 = vmatprep.subr.bf16.mxu0 0
        %6506 = vmatpush1.bf16.msra.mxu0 %v6481
        %6507 = vmatprep.subr.bf16.mxu0 0
        %6508 = vmatpush1.bf16.msra.mxu0 %v6480
        %6509 = vmatprep.subr.bf16.mxu0 0
        %6510 = vmatpush1.bf16.msra.mxu0 %v6479
        %6511 = vmatprep.subr.bf16.mxu0 0
        %6512 = vmatpush2.bf16.msra.mxu0 0
        %6513 = vmatprep.subr.bf16.mxu0 0
        %6514 = vmatpush2.bf16.msra.mxu0 0
        %6515 = vmatprep.subr.bf16.mxu0 0
        %6516 = vmatpush2.bf16.msra.mxu0 0
        %6517 = vmatprep.subr.bf16.mxu0 0
        %6518 = vmatpush2.bf16.msra.mxu0 0
        %6519 = vmatprep.subr.bf16.mxu0 0
        %6520 = vmatpush2.bf16.msra.mxu0 0
        %6521 = vmatprep.subr.bf16.mxu0 0
        %6522 = vmatpush2.bf16.msra.mxu0 0
        %6523 = vmatprep.subr.bf16.mxu0 0
        %6524 = vmatpush2.bf16.msra.mxu0 0
        %6525 = vmatprep.subr.bf16.mxu0 0
        %6526 = vmatpush2.bf16.msra.mxu0 0
        %6527 = vmatprep.mubr.bf16.mxu0 0
        %6528 = vmatmul.mubr.bf16.gmra.mxu0 %v6423
        %v6529 = vpop.f32.mrf.mxu0
        %v6530 = vadd.f32 %v6445, %v6529
        %v6531 = vpop.f32.mrf.mxu0
        %v6532 = vpop.f32.mrf.mxu0
        %v6533 = vpop.f32.mrf.mxu0
        %6534 = vdwg.mxu0
        %6535 = vst [vmem:[%s508] sm:$0xff] %v6530
        %p6536 = scmp.lt.s32.totalorder %s27, 1
        %s6537 = scalar_select %p6536, %s27, 1
        %s6538 = smul.addr %s6537, 8
        %s6539 = scalar_lea.vmem %s13, %s6538
        // Predicated region
        $region93: #{_forward_impl.1} parent=71 // pred_check
          %p6540 = pneg %p323
        $region94: #{_forward_impl.1} parent=71 // pred_check_branch
          %6542 = sbr.rel (%p6540) target = $region96
        $region95: #{_forward_impl.1} parent=71 // pred_region
          _
        $region96: #{_forward_impl.1} parent=71 // pred_fallthru
          _
      $region72: #{_forward_impl.1} parent=5 // pred_fallthru
        _
      %p6543 = scmp.le.s32.totalorder 2, %s22
      // Predicated region
      $region97: #{_forward_impl.1} parent=5 // pred_check
        %p6544 = pneg %p6543
      $region98: #{_forward_impl.1} parent=5 // pred_check_branch
        %6546 = sbr.rel (%p6544) target = $region100
      $region99: #{_forward_impl.1} parent=5 // pred_region
        %s6547 = ssub.s32 %s22, 2
        // Predicated region
        $region101: #{_forward_impl.1} parent=99 // pred_check
          %p6548 = pneg %p329
        $region102: #{_forward_impl.1} parent=99 // pred_check_branch
          %6550 = sbr.rel (%p6548) target = $region104
        $region103: #{_forward_impl.1} parent=99 // pred_region
          %p6551 = scmp.lt.s32.totalorder %s28, 1
          %s6552 = scalar_select %p6551, %s28, 1
          %s6553 = smul.addr %s6552, 8
          %s6554 = scalar_lea.vmem %s13, %s6553
        $region104: #{_forward_impl.1} parent=99 // pred_fallthru
          _
      $region100: #{_forward_impl.1} parent=5 // pred_fallthru
        _
    $region6: #{_forward_impl.1} parent=1 // loop_footer
      %s26 = sadd.s32 1, %s22
    $region7: #{_forward_impl.1} parent=1 // loop_footer_branch
      %21 = sbr.rel target = $region3
    $region8: #{_forward_impl.1} parent=1 // loop_exit
      _
    %6555 = vsyncpa [#allocation3], 1
    %s6556 = scalar_lea.sflag [#allocation3], 1
    %6557 = vsyncpa %s6556, 1
    %6558 = vsyncpa [#allocation5], 1
    %6559 = vsyncpa [#allocation8], 1

</llo_original>
